<compile_context>
chip_gen: v7x
topology: tpu7x:2x2x1
jax: 0.10.0
libtpu: 0.0.40
codegen_flags: <defaults>
</compile_context>

<pallas_src>
import functools

import jax
import jax.numpy as jnp
from jax.experimental import pallas as pl
from jax.experimental.pallas import tpu as pltpu


# -----------------------------------------------------------------------------
# Kernel
# -----------------------------------------------------------------------------
def fire_kernel(x_ref, wsq_ref, bsq_ref, wcomb_ref, bcomb_ref, out_ref, *,
                row_chunk):
    # x_ref:      (Bblk, H, W, Cin)   bf16
    # wsq_ref:    (Cin, Csq)          bf16
    # bsq_ref:    (1, Csq)            f32
    # wcomb_ref:  (9*Csq, E1+E3)      bf16  (expand1x1 fused into center tap)
    # bcomb_ref:  (1, E1+E3)          f32
    # out_ref:    (Bblk, H, W, E1+E3)
    Bblk, H, W, Cin = x_ref.shape
    Csq = wsq_ref.shape[1]
    Cout = wcomb_ref.shape[1]

    # ---- squeeze: 1x1 conv + bias + ReLU (bf16 operands, f32 accumulation) --
    x2 = x_ref[...].reshape(Bblk * H * W, Cin)
    sq = jnp.dot(x2, wsq_ref[...], preferred_element_type=jnp.float32)
    sq = jnp.maximum(sq + bsq_ref[...], 0.0)
    sq = sq.reshape(Bblk, H, W, Csq)                     # f32

    # ---- W-shifted copies of the squeeze output (dx = -1 / 0 / +1 taps) ----
    # pltpu.roll keeps the +/-1 column shift on the XLU (sublane rotate)
    # instead of sublane-repack copies; the wrapped border column is re-zeroed
    # with a single broadcast select.  Computed once per block, reused by all
    # three dy taps and all row chunks.
    w_idx = jax.lax.broadcasted_iota(jnp.int32, (1, 1, W, 1), 2)
    sq_c = sq.astype(jnp.bfloat16)                                   # reads w
    sq_l = jnp.where(w_idx >= 1,
                     pltpu.roll(sq, 1, axis=2), 0.0).astype(jnp.bfloat16)
    sq_r = jnp.where(w_idx < W - 1,
                     pltpu.roll(sq, W - 1, axis=2), 0.0).astype(jnp.bfloat16)
    shifted = {-1: sq_l, 0: sq_c, 1: sq_r}

    wcomb = wcomb_ref[...]
    bcomb = bcomb_ref[...]

    # ---- fused expand matmul [expand1x1 | expand3x3], row-chunked over H ----
    for r0 in range(0, H, row_chunk):
        r1 = r0 + row_chunk
        taps = []
        for sy in (-1, 0, 1):                  # dy - 1
            lo, hi = r0 + sy, r1 + sy
            pad_top, pad_bot = max(0, -lo), max(0, hi - H)
            lo_c, hi_c = max(lo, 0), min(hi, H)
            for sx in (-1, 0, 1):              # dx - 1
                parts = []
                if pad_top:
                    parts.append(jnp.zeros((Bblk, pad_top, W, Csq),
                                           jnp.bfloat16))
                if hi_c > lo_c:
                    parts.append(shifted[sx][:, lo_c:hi_c])
                if pad_bot:
                    parts.append(jnp.zeros((Bblk, pad_bot, W, Csq),
                                           jnp.bfloat16))
                taps.append(parts[0] if len(parts) == 1
                            else jnp.concatenate(parts, axis=1))
        # Column order matches wcomb rows: t = (sy+1)*3 + (sx+1) = dy*3 + dx.
        patches = jnp.concatenate(taps, axis=-1)
        patches = patches.reshape(Bblk * row_chunk * W, 9 * Csq)
        y = jnp.dot(patches, wcomb, preferred_element_type=jnp.float32)
        y = jnp.maximum(y + bcomb, 0.0)
        out_ref[:, r0:r1] = (
            y.reshape(Bblk, row_chunk, W, Cout).astype(out_ref.dtype))


# -----------------------------------------------------------------------------
# Chip-aware block selection / cost model
# -----------------------------------------------------------------------------
def _lane(c):
    return ((c + 127) // 128) * 128


def _sub(c):
    return ((c + 7) // 8) * 8


def _divisors_desc(n):
    return [d for d in range(n, 0, -1) if n % d == 0]


def _vmem_capacity_bytes():
    try:
        info = pltpu.get_tpu_info()
        cap = getattr(info, "vmem_capacity_bytes", None)
        if cap:
            return int(cap)
    except Exception:
        pass
    return 64 << 20  # conservative default (v7x per-TC VMEM)


def _chunk_temp_bytes(b, rc, W, Csq, Cout):
    """Per-row-chunk temporaries: bf16 tap slabs + concat + f32 y."""
    m = b * rc * W
    patches = m * (_lane(9 * Csq) + 9 * _lane(Csq)) * 2
    y = m * _lane(Cout) * 4
    return patches + y


def _footprint_bytes(b, rc, H, W, Cin, Csq, Cout, out_bytes):
    """Conservative per-step VMEM footprint (incl. f32/bf16 intermediates)."""
    m = b * H * W
    K9 = 9 * Csq
    # single-buffered weight / bias blocks
    fixed = ((_sub(Cin) * _lane(Csq) + _sub(K9) * _lane(Cout)) * 2
             + 8 * (_lane(Csq) + _lane(Cout)) * 4)
    # double-buffered activation in / out blocks
    io = 2 * m * _lane(Cin) * 2 + 2 * m * _lane(Cout) * out_bytes
    # f32 squeeze output + 3 bf16 W-shifted slabs (live across the chunk loop)
    sq = m * _lane(Csq) * (4 + 3 * 2)
    return fixed + io + sq + _chunk_temp_bytes(b, rc, W, Csq, Cout)


def _pick_blocks(N, H, W, Cin, Csq, Cout, out_bytes, budget):
    """Largest (block_n, row_chunk) fitting the VMEM budget, grid >= 2."""
    chunk_budget = max(budget // 4, 2 << 20)

    def pick_rc(b):
        for r in _divisors_desc(H):
            if _chunk_temp_bytes(b, r, W, Csq, Cout) <= chunk_budget:
                return r
        return 1

    # Cap block_n at N//2 so the single 'parallel' grid axis has >= 2 steps
    # (keeps both v7x TensorCores busy).
    b_cap = N if N < 2 else max(1, N // 2)
    choice = None
    for b in range(1, b_cap + 1):
        if N % b:
            continue
        rc = pick_rc(b)
        if _footprint_bytes(b, rc, H, W, Cin, Csq, Cout, out_bytes) <= budget:
            choice = (b, rc)
    if choice is None:
        # TODO(synk): spatial (H-halo) tiling when even one image exceeds the
        # budget; fall back to the smallest batch block.
        choice = (1, pick_rc(1))
    return choice


def _const_spec(shape, single_buffer):
    """BlockSpec for a grid-invariant (weight / bias) operand."""
    idx_map = (lambda n, _nd=len(shape): (0,) * _nd)
    if single_buffer:
        # Constant index_map -> only DMA'd once; a single buffer halves the
        # VMEM these operands pin.
        return pl.BlockSpec(shape, idx_map, pipeline_mode=pl.Buffered(1))
    return pl.BlockSpec(shape, idx_map)


# -----------------------------------------------------------------------------
# Wrapper
# -----------------------------------------------------------------------------
def fire_pallas(x, wsq, bsq, w1, b1, w3, b3, *, data_format="NCHW",
                out_dtype=None, block_n=None, row_chunk=None):
    """Fire forward.

    x: (N, Cin, H, W) if data_format == "NCHW", else (N, H, W, Cin).
    wsq: (Cin, Csq); w1: (Csq, E1); w3: (3, 3, Csq, E3) (HWIO).
    Returns concat([expand1x1, expand3x3]) in the same data_format.
    Keep data_format="NHWC" / out_dtype=bf16 across consecutive Fire layers to
    avoid the NCHW<->NHWC transposes and halve output HBM traffic.
    """
    if data_format == "NCHW":
        x_nhwc = jnp.transpose(x, (0, 2, 3, 1))
    else:
        x_nhwc = x
    N, H, W, Cin = x_nhwc.shape
    Csq = wsq.shape[1]
    E1 = w1.shape[1]
    E3 = w3.shape[3]
    Cout = E1 + E3
    K9 = 9 * Csq
    out_dtype = x.dtype if out_dtype is None else out_dtype

    # bf16 activations for the MXU (also halves input HBM traffic).
    x_nhwc = x_nhwc.astype(jnp.bfloat16)

    # Fused weight: expand1x1 occupies the center-tap rows; expand3x3 is
    # reshaped row-major as (dy, dx, c) to match the im2col column ordering.
    w3r = w3.reshape(K9, E3)
    w1f = jnp.zeros((K9, E1), w1.dtype).at[4 * Csq:5 * Csq, :].set(w1)
    wcomb = jnp.concatenate([w1f, w3r], axis=1).astype(jnp.bfloat16)
    wsq_b = wsq.astype(jnp.bfloat16)
    bsq2 = bsq.reshape(1, Csq).astype(jnp.float32)
    bcomb = jnp.concatenate([b1, b3]).reshape(1, Cout).astype(jnp.float32)

    # Chip-aware VMEM budget / block selection.
    cap = _vmem_capacity_bytes()
    budget = max(16 << 20, int(cap * 0.40))
    out_bytes = jnp.dtype(out_dtype).itemsize
    auto_b, auto_rc = _pick_blocks(N, H, W, Cin, Csq, Cout, out_bytes, budget)
    block_n = auto_b if block_n is None else block_n
    row_chunk = auto_rc if row_chunk is None else row_chunk
    assert N % block_n == 0, (N, block_n)
    assert H % row_chunk == 0, (H, row_chunk)

    footprint = _footprint_bytes(block_n, row_chunk, H, W, Cin, Csq, Cout,
                                 out_bytes)
    vmem_limit = int(min(cap * 3 // 4, max(32 << 20, footprint * 2)))

    kernel = functools.partial(fire_kernel, row_chunk=row_chunk)

    def run(single_buffer_weights):
        return pl.pallas_call(
            kernel,
            out_shape=jax.ShapeDtypeStruct((N, H, W, Cout), out_dtype),
            grid_spec=pltpu.PrefetchScalarGridSpec(
                num_scalar_prefetch=0,
                grid=(N // block_n,),
                in_specs=[
                    pl.BlockSpec((block_n, H, W, Cin), lambda n: (n, 0, 0, 0)),
                    _const_spec((Cin, Csq), single_buffer_weights),
                    _const_spec((1, Csq), single_buffer_weights),
                    _const_spec((K9, Cout), single_buffer_weights),
                    _const_spec((1, Cout), single_buffer_weights),
                ],
                out_specs=pl.BlockSpec((block_n, H, W, Cout),
                                       lambda n: (n, 0, 0, 0)),
            ),
            compiler_params=pltpu.CompilerParams(
                dimension_semantics=("parallel",),
                vmem_limit_bytes=vmem_limit,
            ),
        )(x_nhwc, wsq_b, bsq2, wcomb, bcomb)

    try:
        out_nhwc = run(True)
    except Exception:
        # Fallback if pipeline_mode=pl.Buffered(1) is unsupported in this
        # JAX / Mosaic version.
        out_nhwc = run(False)

    if data_format == "NCHW":
        return jnp.transpose(out_nhwc, (0, 3, 1, 2))
    return out_nhwc


# -----------------------------------------------------------------------------
# Pure-JAX reference (f32) for correctness checking
# -----------------------------------------------------------------------------
def fire_reference(x_nchw, wsq, bsq, w1, b1, w3, b3):
    x = jnp.transpose(x_nchw, (0, 2, 3, 1))  # NHWC
    dn = ("NHWC", "HWIO", "NHWC")
    sq = jax.lax.conv_general_dilated(
        x, wsq[None, None], (1, 1), "VALID", dimension_numbers=dn) + bsq
    sq = jnp.maximum(sq, 0.0)
    e1 = jax.lax.conv_general_dilated(
        sq, w1[None, None], (1, 1), "VALID", dimension_numbers=dn) + b1
    e1 = jnp.maximum(e1, 0.0)
    e3 = jax.lax.conv_general_dilated(
        sq, w3, (1, 1), ((1, 1), (1, 1)), dimension_numbers=dn) + b3
    e3 = jnp.maximum(e3, 0.0)
    y = jnp.concatenate([e1, e3], axis=-1)
    return jnp.transpose(y, (0, 3, 1, 2))


if __name__ == "__main__":
    # Fire(inplanes=4, squeeze_planes=2, expand1x1_planes=4, expand3x3_planes=4)
    N, Cin, H, W = 2, 4, 16, 16
    Csq, E1, E3 = 2, 4, 4

    key = jax.random.PRNGKey(0)
    ks = jax.random.split(key, 7)
    x = jax.random.normal(ks[0], (N, Cin, H, W), jnp.float32)
    wsq = jax.random.normal(ks[1], (Cin, Csq), jnp.float32) * 0.1
    bsq = jax.random.normal(ks[2], (Csq,), jnp.float32) * 0.1
    w1 = jax.random.normal(ks[3], (Csq, E1), jnp.float32) * 0.1
    b1 = jax.random.normal(ks[4], (E1,), jnp.float32) * 0.1
    w3 = jax.random.normal(ks[5], (3, 3, Csq, E3), jnp.float32) * 0.1
    b3 = jax.random.normal(ks[6], (E3,), jnp.float32) * 0.1

    out = fire_pallas(x, wsq, bsq, w1, b1, w3, b3)
    out = jax.block_until_ready(out)

    ref = fire_reference(x, wsq, bsq, w1, b1, w3, b3)
    assert out.shape == (N, E1 + E3, H, W), out.shape
    # bf16 matmul operands (f32 accumulation) -> looser tolerance than pure f32.
    assert jnp.allclose(out, ref, atol=2e-2, rtol=2e-2), "mismatch vs reference"

    print("KERNEL_OK")
</pallas_src>

<mosaic_0001>
module attributes {stable_mosaic.version = 11 : i64} {
  func.func @fire_kernel(%arg0: i32, %arg1: memref<1x16x16x4xbf16, #tpu.memory_space<vmem>>, %arg2: memref<4x2xbf16, #tpu.memory_space<vmem>>, %arg3: memref<1x2xf32, #tpu.memory_space<vmem>>, %arg4: memref<18x8xbf16, #tpu.memory_space<vmem>>, %arg5: memref<1x8xf32, #tpu.memory_space<vmem>>, %arg6: memref<1x16x16x8xf32, #tpu.memory_space<vmem>>) attributes {dimension_semantics = [#tpu.dimension_semantics<parallel>], iteration_bounds = array<i64: 2>, scalar_prefetch = 0 : i64, scratch_operands = 0 : i64, tpu.core_type = #tpu.core_type<tc>, window_params = [{transform_indices = @transform_0, window_bounds = array<i64: 1, 16, 16, 4>}, {pipeline_mode = #tpu.pipeline_mode<synchronous>, transform_indices = @transform_1, window_bounds = array<i64: 4, 2>}, {pipeline_mode = #tpu.pipeline_mode<synchronous>, transform_indices = @transform_2, window_bounds = array<i64: 1, 2>}, {pipeline_mode = #tpu.pipeline_mode<synchronous>, transform_indices = @transform_3, window_bounds = array<i64: 18, 8>}, {pipeline_mode = #tpu.pipeline_mode<synchronous>, transform_indices = @transform_4, window_bounds = array<i64: 1, 8>}, {transform_indices = @transform_5, window_bounds = array<i64: 1, 16, 16, 8>}]} {
    %c0 = arith.constant 0 : index
    %c0_0 = arith.constant 0 : index
    %c0_1 = arith.constant 0 : index
    %c0_2 = arith.constant 0 : index
    %0 = vector.load %arg1[%c0, %c0_0, %c0_1, %c0_2] : memref<1x16x16x4xbf16, #tpu.memory_space<vmem>>, vector<1x16x16x4xbf16>
    %1 = vector.shape_cast %0 : vector<1x16x16x4xbf16> to vector<256x4xbf16>
    %c0_3 = arith.constant 0 : index
    %c0_4 = arith.constant 0 : index
    %2 = vector.load %arg2[%c0_3, %c0_4] : memref<4x2xbf16, #tpu.memory_space<vmem>>, vector<4x2xbf16>
    %cst = arith.constant dense<0.000000e+00> : vector<256x2xf32>
    %3 = tpu.matmul %1, %2, %cst {dimension_numbers = #tpu.dot_dimension_numbers<[1], [0], [0], [1], [0, 0, 1, 1], [], []>} : vector<256x4xbf16>, vector<4x2xbf16>, vector<256x2xf32> -> vector<256x2xf32>
    %c0_5 = arith.constant 0 : index
    %c0_6 = arith.constant 0 : index
    %4 = vector.load %arg3[%c0_5, %c0_6] : memref<1x2xf32, #tpu.memory_space<vmem>>, vector<1x2xf32>
    %5 = vector.broadcast %4 : vector<1x2xf32> to vector<256x2xf32>
    %6 = arith.addf %3, %5 : vector<256x2xf32>
    %cst_7 = arith.constant 0.000000e+00 : f32
    %7 = vector.broadcast %cst_7 : f32 to vector<256x2xf32>
    %8 = arith.maximumf %6, %7 : vector<256x2xf32>
    %9 = vector.shape_cast %8 : vector<256x2xf32> to vector<1x16x16x2xf32>
    %10 = tpu.iota {dimensions = array<i32: 2>} : vector<1x1x16x1xi32>
    %11 = arith.truncf %9 : vector<1x16x16x2xf32> to vector<1x16x16x2xbf16>
    %c1_i32 = arith.constant 1 : i32
    %12 = vector.broadcast %c1_i32 : i32 to vector<1x1x16x1xi32>
    %13 = arith.cmpi sge, %10, %12 : vector<1x1x16x1xi32>
    %c1_i32_8 = arith.constant 1 : i32
    %14 = tpu.dynamic_rotate %9 by %c1_i32_8 dim 2 : vector<1x16x16x2xf32>, i32 -> vector<1x16x16x2xf32>
    %cst_9 = arith.constant 0.000000e+00 : f32
    %15 = vector.shape_cast %13 : vector<1x1x16x1xi1> to vector<1x1x16x1xi1>
    %16 = vector.broadcast %15 : vector<1x1x16x1xi1> to vector<1x16x16x2xi1>
    %17 = vector.broadcast %cst_9 : f32 to vector<1x16x16x2xf32>
    %18 = arith.select %16, %14, %17 : vector<1x16x16x2xi1>, vector<1x16x16x2xf32>
    %19 = arith.truncf %18 : vector<1x16x16x2xf32> to vector<1x16x16x2xbf16>
    %c15_i32 = arith.constant 15 : i32
    %20 = vector.broadcast %c15_i32 : i32 to vector<1x1x16x1xi32>
    %21 = arith.cmpi slt, %10, %20 : vector<1x1x16x1xi32>
    %c15_i32_10 = arith.constant 15 : i32
    %22 = tpu.dynamic_rotate %9 by %c15_i32_10 dim 2 : vector<1x16x16x2xf32>, i32 -> vector<1x16x16x2xf32>
    %cst_11 = arith.constant 0.000000e+00 : f32
    %23 = vector.shape_cast %21 : vector<1x1x16x1xi1> to vector<1x1x16x1xi1>
    %24 = vector.broadcast %23 : vector<1x1x16x1xi1> to vector<1x16x16x2xi1>
    %25 = vector.broadcast %cst_11 : f32 to vector<1x16x16x2xf32>
    %26 = arith.select %24, %22, %25 : vector<1x16x16x2xi1>, vector<1x16x16x2xf32>
    %27 = arith.truncf %26 : vector<1x16x16x2xf32> to vector<1x16x16x2xbf16>
    %c0_12 = arith.constant 0 : index
    %c0_13 = arith.constant 0 : index
    %28 = vector.load %arg4[%c0_12, %c0_13] : memref<18x8xbf16, #tpu.memory_space<vmem>>, vector<18x8xbf16>
    %c0_14 = arith.constant 0 : index
    %c0_15 = arith.constant 0 : index
    %29 = vector.load %arg5[%c0_14, %c0_15] : memref<1x8xf32, #tpu.memory_space<vmem>>, vector<1x8xf32>
    %cst_16 = arith.constant 0.000000e+00 : bf16
    %30 = vector.broadcast %cst_16 : bf16 to vector<1x1x16x2xbf16>
    %31 = vector.extract_strided_slice %19 {offsets = [0, 0, 0, 0], sizes = [1, 15, 16, 2], strides = [1, 1, 1, 1]} : vector<1x16x16x2xbf16> to vector<1x15x16x2xbf16>
    %32 = tpu.concatenate %30, %31 in 1 : vector<1x1x16x2xbf16>, vector<1x15x16x2xbf16> -> vector<1x16x16x2xbf16>
    %cst_17 = arith.constant 0.000000e+00 : bf16
    %33 = vector.broadcast %cst_17 : bf16 to vector<1x1x16x2xbf16>
    %34 = vector.extract_strided_slice %11 {offsets = [0, 0, 0, 0], sizes = [1, 15, 16, 2], strides = [1, 1, 1, 1]} : vector<1x16x16x2xbf16> to vector<1x15x16x2xbf16>
    %35 = tpu.concatenate %33, %34 in 1 : vector<1x1x16x2xbf16>, vector<1x15x16x2xbf16> -> vector<1x16x16x2xbf16>
    %cst_18 = arith.constant 0.000000e+00 : bf16
    %36 = vector.broadcast %cst_18 : bf16 to vector<1x1x16x2xbf16>
    %37 = vector.extract_strided_slice %27 {offsets = [0, 0, 0, 0], sizes = [1, 15, 16, 2], strides = [1, 1, 1, 1]} : vector<1x16x16x2xbf16> to vector<1x15x16x2xbf16>
    %38 = tpu.concatenate %36, %37 in 1 : vector<1x1x16x2xbf16>, vector<1x15x16x2xbf16> -> vector<1x16x16x2xbf16>
    %39 = vector.extract_strided_slice %19 {offsets = [0, 1, 0, 0], sizes = [1, 15, 16, 2], strides = [1, 1, 1, 1]} : vector<1x16x16x2xbf16> to vector<1x15x16x2xbf16>
    %cst_19 = arith.constant 0.000000e+00 : bf16
    %40 = vector.broadcast %cst_19 : bf16 to vector<1x1x16x2xbf16>
    %41 = tpu.concatenate %39, %40 in 1 : vector<1x15x16x2xbf16>, vector<1x1x16x2xbf16> -> vector<1x16x16x2xbf16>
    %42 = vector.extract_strided_slice %11 {offsets = [0, 1, 0, 0], sizes = [1, 15, 16, 2], strides = [1, 1, 1, 1]} : vector<1x16x16x2xbf16> to vector<1x15x16x2xbf16>
    %cst_20 = arith.constant 0.000000e+00 : bf16
    %43 = vector.broadcast %cst_20 : bf16 to vector<1x1x16x2xbf16>
    %44 = tpu.concatenate %42, %43 in 1 : vector<1x15x16x2xbf16>, vector<1x1x16x2xbf16> -> vector<1x16x16x2xbf16>
    %45 = vector.extract_strided_slice %27 {offsets = [0, 1, 0, 0], sizes = [1, 15, 16, 2], strides = [1, 1, 1, 1]} : vector<1x16x16x2xbf16> to vector<1x15x16x2xbf16>
    %cst_21 = arith.constant 0.000000e+00 : bf16
    %46 = vector.broadcast %cst_21 : bf16 to vector<1x1x16x2xbf16>
    %47 = tpu.concatenate %45, %46 in 1 : vector<1x15x16x2xbf16>, vector<1x1x16x2xbf16> -> vector<1x16x16x2xbf16>
    %48 = tpu.concatenate %32, %35, %38, %19, %11, %27, %41, %44, %47 in 3 : vector<1x16x16x2xbf16>, vector<1x16x16x2xbf16>, vector<1x16x16x2xbf16>, vector<1x16x16x2xbf16>, vector<1x16x16x2xbf16>, vector<1x16x16x2xbf16>, vector<1x16x16x2xbf16>, vector<1x16x16x2xbf16>, vector<1x16x16x2xbf16> -> vector<1x16x16x18xbf16>
    %49 = vector.shape_cast %48 : vector<1x16x16x18xbf16> to vector<256x18xbf16>
    %cst_22 = arith.constant dense<0.000000e+00> : vector<256x8xf32>
    %50 = tpu.matmul %49, %28, %cst_22 {dimension_numbers = #tpu.dot_dimension_numbers<[1], [0], [0], [1], [0, 0, 1, 1], [], []>} : vector<256x18xbf16>, vector<18x8xbf16>, vector<256x8xf32> -> vector<256x8xf32>
    %51 = vector.broadcast %29 : vector<1x8xf32> to vector<256x8xf32>
    %52 = arith.addf %50, %51 : vector<256x8xf32>
    %cst_23 = arith.constant 0.000000e+00 : f32
    %53 = vector.broadcast %cst_23 : f32 to vector<256x8xf32>
    %54 = arith.maximumf %52, %53 : vector<256x8xf32>
    %55 = vector.shape_cast %54 : vector<256x8xf32> to vector<1x16x16x8xf32>
    %c0_24 = arith.constant 0 : index
    %c0_25 = arith.constant 0 : index
    %c0_26 = arith.constant 0 : index
    %c0_27 = arith.constant 0 : index
    %56 = vector.load %arg6[%c0_24, %c0_25, %c0_26, %c0_27] : memref<1x16x16x8xf32, #tpu.memory_space<vmem>>, vector<1x16x16x8xf32>
    tpu.vector_store %arg6[%c0_24, %c0_25, %c0_26, %c0_27], %55 {strides = array<i32>} : memref<1x16x16x8xf32, #tpu.memory_space<vmem>>, vector<1x16x16x8xf32>,
    return
  }
  func.func @transform_0(%arg0: i32) -> (i32, i32, i32, i32) {
    %c0_i32 = arith.constant 0 : i32
    %c0_i32_0 = arith.constant 0 : i32
    %c0_i32_1 = arith.constant 0 : i32
    %c0_i32_2 = arith.constant 0 : i32
    return %arg0, %c0_i32, %c0_i32_0, %c0_i32_1 : i32, i32, i32, i32
  }
  func.func @transform_1(%arg0: i32) -> (i32, i32) {
    %c0_i32 = arith.constant 0 : i32
    %c0_i32_0 = arith.constant 0 : i32
    %c0_i32_1 = arith.constant 0 : i32
    return %c0_i32, %c0_i32_0 : i32, i32
  }
  func.func @transform_2(%arg0: i32) -> (i32, i32) {
    %c0_i32 = arith.constant 0 : i32
    %c0_i32_0 = arith.constant 0 : i32
    %c0_i32_1 = arith.constant 0 : i32
    return %c0_i32, %c0_i32_0 : i32, i32
  }
  func.func @transform_3(%arg0: i32) -> (i32, i32) {
    %c0_i32 = arith.constant 0 : i32
    %c0_i32_0 = arith.constant 0 : i32
    %c0_i32_1 = arith.constant 0 : i32
    return %c0_i32, %c0_i32_0 : i32, i32
  }
  func.func @transform_4(%arg0: i32) -> (i32, i32) {
    %c0_i32 = arith.constant 0 : i32
    %c0_i32_0 = arith.constant 0 : i32
    %c0_i32_1 = arith.constant 0 : i32
    return %c0_i32, %c0_i32_0 : i32, i32
  }
  func.func @transform_5(%arg0: i32) -> (i32, i32, i32, i32) {
    %c0_i32 = arith.constant 0 : i32
    %c0_i32_0 = arith.constant 0 : i32
    %c0_i32_1 = arith.constant 0 : i32
    %c0_i32_2 = arith.constant 0 : i32
    return %arg0, %c0_i32, %c0_i32_0, %c0_i32_1 : i32, i32, i32, i32
  }
}

module attributes {stable_mosaic.version = 11 : i64} {
  func.func @fire_kernel(%arg0: i32, %arg1: memref<1x16x16x4xbf16, #tpu.memory_space<vmem>>, %arg2: memref<4x2xbf16, #tpu.memory_space<vmem>>, %arg3: memref<1x2xf32, #tpu.memory_space<vmem>>, %arg4: memref<18x8xbf16, #tpu.memory_space<vmem>>, %arg5: memref<1x8xf32, #tpu.memory_space<vmem>>, %arg6: memref<1x16x16x8xf32, #tpu.memory_space<vmem>>) attributes {dimension_semantics = [#tpu.dimension_semantics<parallel>], iteration_bounds = array<i64: 2>, scalar_prefetch = 0 : i64, scratch_operands = 0 : i64, tpu.core_type = #tpu.core_type<tc>, window_params = [{transform_indices = @transform_0, window_bounds = array<i64: 1, 16, 16, 4>}, {pipeline_mode = #tpu.pipeline_mode<synchronous>, transform_indices = @transform_1, window_bounds = array<i64: 4, 2>}, {pipeline_mode = #tpu.pipeline_mode<synchronous>, transform_indices = @transform_2, window_bounds = array<i64: 1, 2>}, {pipeline_mode = #tpu.pipeline_mode<synchronous>, transform_indices = @transform_3, window_bounds = array<i64: 18, 8>}, {pipeline_mode = #tpu.pipeline_mode<synchronous>, transform_indices = @transform_4, window_bounds = array<i64: 1, 8>}, {transform_indices = @transform_5, window_bounds = array<i64: 1, 16, 16, 8>}]} {
    %c0 = arith.constant 0 : index
    %c0_0 = arith.constant 0 : index
    %c0_1 = arith.constant 0 : index
    %c0_2 = arith.constant 0 : index
    %0 = vector.load %arg1[%c0, %c0_0, %c0_1, %c0_2] : memref<1x16x16x4xbf16, #tpu.memory_space<vmem>>, vector<1x16x16x4xbf16>
    %1 = vector.shape_cast %0 : vector<1x16x16x4xbf16> to vector<256x4xbf16>
    %c0_3 = arith.constant 0 : index
    %c0_4 = arith.constant 0 : index
    %2 = vector.load %arg2[%c0_3, %c0_4] : memref<4x2xbf16, #tpu.memory_space<vmem>>, vector<4x2xbf16>
    %cst = arith.constant dense<0.000000e+00> : vector<256x2xf32>
    %3 = tpu.matmul %1, %2, %cst {dimension_numbers = #tpu.dot_dimension_numbers<[1], [0], [0], [1], [0, 0, 1, 1], [], []>} : vector<256x4xbf16>, vector<4x2xbf16>, vector<256x2xf32> -> vector<256x2xf32>
    %c0_5 = arith.constant 0 : index
    %c0_6 = arith.constant 0 : index
    %4 = vector.load %arg3[%c0_5, %c0_6] : memref<1x2xf32, #tpu.memory_space<vmem>>, vector<1x2xf32>
    %5 = vector.broadcast %4 : vector<1x2xf32> to vector<256x2xf32>
    %6 = arith.addf %3, %5 : vector<256x2xf32>
    %cst_7 = arith.constant 0.000000e+00 : f32
    %7 = vector.broadcast %cst_7 : f32 to vector<256x2xf32>
    %8 = arith.maximumf %6, %7 : vector<256x2xf32>
    %9 = vector.shape_cast %8 : vector<256x2xf32> to vector<1x16x16x2xf32>
    %10 = tpu.iota {dimensions = array<i32: 2>} : vector<1x1x16x1xi32>
    %11 = arith.truncf %9 : vector<1x16x16x2xf32> to vector<1x16x16x2xbf16>
    %c1_i32 = arith.constant 1 : i32
    %12 = vector.broadcast %c1_i32 : i32 to vector<1x1x16x1xi32>
    %13 = arith.cmpi sge, %10, %12 : vector<1x1x16x1xi32>
    %c1_i32_8 = arith.constant 1 : i32
    %14 = tpu.dynamic_rotate %9 by %c1_i32_8 dim 2 : vector<1x16x16x2xf32>, i32 -> vector<1x16x16x2xf32>
    %cst_9 = arith.constant 0.000000e+00 : f32
    %15 = vector.shape_cast %13 : vector<1x1x16x1xi1> to vector<1x1x16x1xi1>
    %16 = vector.broadcast %15 : vector<1x1x16x1xi1> to vector<1x16x16x2xi1>
    %17 = vector.broadcast %cst_9 : f32 to vector<1x16x16x2xf32>
    %18 = arith.select %16, %14, %17 : vector<1x16x16x2xi1>, vector<1x16x16x2xf32>
    %19 = arith.truncf %18 : vector<1x16x16x2xf32> to vector<1x16x16x2xbf16>
    %c15_i32 = arith.constant 15 : i32
    %20 = vector.broadcast %c15_i32 : i32 to vector<1x1x16x1xi32>
    %21 = arith.cmpi slt, %10, %20 : vector<1x1x16x1xi32>
    %c15_i32_10 = arith.constant 15 : i32
    %22 = tpu.dynamic_rotate %9 by %c15_i32_10 dim 2 : vector<1x16x16x2xf32>, i32 -> vector<1x16x16x2xf32>
    %cst_11 = arith.constant 0.000000e+00 : f32
    %23 = vector.shape_cast %21 : vector<1x1x16x1xi1> to vector<1x1x16x1xi1>
    %24 = vector.broadcast %23 : vector<1x1x16x1xi1> to vector<1x16x16x2xi1>
    %25 = vector.broadcast %cst_11 : f32 to vector<1x16x16x2xf32>
    %26 = arith.select %24, %22, %25 : vector<1x16x16x2xi1>, vector<1x16x16x2xf32>
    %27 = arith.truncf %26 : vector<1x16x16x2xf32> to vector<1x16x16x2xbf16>
    %c0_12 = arith.constant 0 : index
    %c0_13 = arith.constant 0 : index
    %28 = vector.load %arg4[%c0_12, %c0_13] : memref<18x8xbf16, #tpu.memory_space<vmem>>, vector<18x8xbf16>
    %c0_14 = arith.constant 0 : index
    %c0_15 = arith.constant 0 : index
    %29 = vector.load %arg5[%c0_14, %c0_15] : memref<1x8xf32, #tpu.memory_space<vmem>>, vector<1x8xf32>
    %cst_16 = arith.constant 0.000000e+00 : bf16
    %30 = vector.broadcast %cst_16 : bf16 to vector<1x1x16x2xbf16>
    %31 = vector.extract_strided_slice %19 {offsets = [0, 0, 0, 0], sizes = [1, 15, 16, 2], strides = [1, 1, 1, 1]} : vector<1x16x16x2xbf16> to vector<1x15x16x2xbf16>
    %32 = tpu.concatenate %30, %31 in 1 : vector<1x1x16x2xbf16>, vector<1x15x16x2xbf16> -> vector<1x16x16x2xbf16>
    %cst_17 = arith.constant 0.000000e+00 : bf16
    %33 = vector.broadcast %cst_17 : bf16 to vector<1x1x16x2xbf16>
    %34 = vector.extract_strided_slice %11 {offsets = [0, 0, 0, 0], sizes = [1, 15, 16, 2], strides = [1, 1, 1, 1]} : vector<1x16x16x2xbf16> to vector<1x15x16x2xbf16>
    %35 = tpu.concatenate %33, %34 in 1 : vector<1x1x16x2xbf16>, vector<1x15x16x2xbf16> -> vector<1x16x16x2xbf16>
    %cst_18 = arith.constant 0.000000e+00 : bf16
    %36 = vector.broadcast %cst_18 : bf16 to vector<1x1x16x2xbf16>
    %37 = vector.extract_strided_slice %27 {offsets = [0, 0, 0, 0], sizes = [1, 15, 16, 2], strides = [1, 1, 1, 1]} : vector<1x16x16x2xbf16> to vector<1x15x16x2xbf16>
    %38 = tpu.concatenate %36, %37 in 1 : vector<1x1x16x2xbf16>, vector<1x15x16x2xbf16> -> vector<1x16x16x2xbf16>
    %39 = vector.extract_strided_slice %19 {offsets = [0, 1, 0, 0], sizes = [1, 15, 16, 2], strides = [1, 1, 1, 1]} : vector<1x16x16x2xbf16> to vector<1x15x16x2xbf16>
    %cst_19 = arith.constant 0.000000e+00 : bf16
    %40 = vector.broadcast %cst_19 : bf16 to vector<1x1x16x2xbf16>
    %41 = tpu.concatenate %39, %40 in 1 : vector<1x15x16x2xbf16>, vector<1x1x16x2xbf16> -> vector<1x16x16x2xbf16>
    %42 = vector.extract_strided_slice %11 {offsets = [0, 1, 0, 0], sizes = [1, 15, 16, 2], strides = [1, 1, 1, 1]} : vector<1x16x16x2xbf16> to vector<1x15x16x2xbf16>
    %cst_20 = arith.constant 0.000000e+00 : bf16
    %43 = vector.broadcast %cst_20 : bf16 to vector<1x1x16x2xbf16>
    %44 = tpu.concatenate %42, %43 in 1 : vector<1x15x16x2xbf16>, vector<1x1x16x2xbf16> -> vector<1x16x16x2xbf16>
    %45 = vector.extract_strided_slice %27 {offsets = [0, 1, 0, 0], sizes = [1, 15, 16, 2], strides = [1, 1, 1, 1]} : vector<1x16x16x2xbf16> to vector<1x15x16x2xbf16>
    %cst_21 = arith.constant 0.000000e+00 : bf16
    %46 = vector.broadcast %cst_21 : bf16 to vector<1x1x16x2xbf16>
    %47 = tpu.concatenate %45, %46 in 1 : vector<1x15x16x2xbf16>, vector<1x1x16x2xbf16> -> vector<1x16x16x2xbf16>
    %48 = tpu.concatenate %32, %35, %38, %19, %11, %27, %41, %44, %47 in 3 : vector<1x16x16x2xbf16>, vector<1x16x16x2xbf16>, vector<1x16x16x2xbf16>, vector<1x16x16x2xbf16>, vector<1x16x16x2xbf16>, vector<1x16x16x2xbf16>, vector<1x16x16x2xbf16>, vector<1x16x16x2xbf16>, vector<1x16x16x2xbf16> -> vector<1x16x16x18xbf16>
    %49 = vector.shape_cast %48 : vector<1x16x16x18xbf16> to vector<256x18xbf16>
    %cst_22 = arith.constant dense<0.000000e+00> : vector<256x8xf32>
    %50 = tpu.matmul %49, %28, %cst_22 {dimension_numbers = #tpu.dot_dimension_numbers<[1], [0], [0], [1], [0, 0, 1, 1], [], []>} : vector<256x18xbf16>, vector<18x8xbf16>, vector<256x8xf32> -> vector<256x8xf32>
    %51 = vector.broadcast %29 : vector<1x8xf32> to vector<256x8xf32>
    %52 = arith.addf %50, %51 : vector<256x8xf32>
    %cst_23 = arith.constant 0.000000e+00 : f32
    %53 = vector.broadcast %cst_23 : f32 to vector<256x8xf32>
    %54 = arith.maximumf %52, %53 : vector<256x8xf32>
    %55 = vector.shape_cast %54 : vector<256x8xf32> to vector<1x16x16x8xf32>
    %c0_24 = arith.constant 0 : index
    %c0_25 = arith.constant 0 : index
    %c0_26 = arith.constant 0 : index
    %c0_27 = arith.constant 0 : index
    %56 = vector.load %arg6[%c0_24, %c0_25, %c0_26, %c0_27] : memref<1x16x16x8xf32, #tpu.memory_space<vmem>>, vector<1x16x16x8xf32>
    tpu.vector_store %arg6[%c0_24, %c0_25, %c0_26, %c0_27], %55 {strides = array<i32>} : memref<1x16x16x8xf32, #tpu.memory_space<vmem>>, vector<1x16x16x8xf32>,
    return
  }
  func.func @transform_0(%arg0: i32) -> (i32, i32, i32, i32) {
    %c0_i32 = arith.constant 0 : i32
    %c0_i32_0 = arith.constant 0 : i32
    %c0_i32_1 = arith.constant 0 : i32
    %c0_i32_2 = arith.constant 0 : i32
    return %arg0, %c0_i32, %c0_i32_0, %c0_i32_1 : i32, i32, i32, i32
  }
  func.func @transform_1(%arg0: i32) -> (i32, i32) {
    %c0_i32 = arith.constant 0 : i32
    %c0_i32_0 = arith.constant 0 : i32
    %c0_i32_1 = arith.constant 0 : i32
    return %c0_i32, %c0_i32_0 : i32, i32
  }
  func.func @transform_2(%arg0: i32) -> (i32, i32) {
    %c0_i32 = arith.constant 0 : i32
    %c0_i32_0 = arith.constant 0 : i32
    %c0_i32_1 = arith.constant 0 : i32
    return %c0_i32, %c0_i32_0 : i32, i32
  }
  func.func @transform_3(%arg0: i32) -> (i32, i32) {
    %c0_i32 = arith.constant 0 : i32
    %c0_i32_0 = arith.constant 0 : i32
    %c0_i32_1 = arith.constant 0 : i32
    return %c0_i32, %c0_i32_0 : i32, i32
  }
  func.func @transform_4(%arg0: i32) -> (i32, i32) {
    %c0_i32 = arith.constant 0 : i32
    %c0_i32_0 = arith.constant 0 : i32
    %c0_i32_1 = arith.constant 0 : i32
    return %c0_i32, %c0_i32_0 : i32, i32
  }
  func.func @transform_5(%arg0: i32) -> (i32, i32, i32, i32) {
    %c0_i32 = arith.constant 0 : i32
    %c0_i32_0 = arith.constant 0 : i32
    %c0_i32_1 = arith.constant 0 : i32
    %c0_i32_2 = arith.constant 0 : i32
    return %arg0, %c0_i32, %c0_i32_0, %c0_i32_1 : i32, i32, i32, i32
  }
}

</mosaic_0001>

<llo_original>
// kernel: tpu_custom_call.1
$region0: #{tpu_custom_call.1}
  #allocation0 [shape = 'u32[]', space=smem, size = 0x4, offset = 0x4, fixed_abs, tag = 'smem constant byte address 0x4 - core index']
  #allocation1 [shape = 'u32[144,128]{1,0:T(1,128)}', space=vmem, size = 0x12000, scoped, tag = 'internal scratch']
  %s0 = inlined_call_operand.vmem [shape: bf16[2,16,16,4], index: 0, kind: input, shape index: {}]
  %s1 = inlined_call_operand.vmem [shape: bf16[4,2], index: 1, kind: input, shape index: {}]
  %s2 = inlined_call_operand.vmem [shape: f32[1,2], index: 2, kind: input, shape index: {}]
  %s3 = inlined_call_operand.vmem [shape: bf16[18,8], index: 3, kind: input, shape index: {}]
  %s4 = inlined_call_operand.vmem [shape: f32[1,8], index: 4, kind: input, shape index: {}]
  %s5 = inlined_call_operand.vmem [shape: f32[2,16,16,8], index: 5, kind: output, shape index: {}]
  %s6 = sld [smem:[#allocation0]]
  $region53: #{tpu_custom_call.1} parent=0
    _
  %s8 = ssub.s32 1, %s6
  %s9 = scalar_select 0, %s8, %s6
  loop: start=0, step=1, limit=4
  $region2: #{tpu_custom_call.1} parent=0 // loop_pre_header
    _
  $region3: #{tpu_custom_call.1} parent=0 // loop_header
    %s11 = sphi 0, %s15
    %p12 = scmp.ge.s32.totalorder %s11, 4
    %s21 = sphi 0, %s23
    %s24 = sphi 0, %s21
    %s25 = sphi 0, %s24
    %s41 = sphi 0, %s25
    %s45 = sphi 0, %s45
    %s47 = sphi 0, %s45
    %s48 = sphi 0, %s47
    %s62 = sphi 0, %s48
    %s66 = sphi 0, %s66
    %s68 = sphi 0, %s66
    %s69 = sphi 0, %s68
    %s83 = sphi 0, %s69
    %s87 = sphi 0, %s87
    %s89 = sphi 0, %s87
    %s90 = sphi 0, %s89
    %s104 = sphi 0, %s90
    %s108 = sphi 0, %s108
    %s110 = sphi 0, %s108
    %s111 = sphi 0, %s110
    %s125 = sphi 0, %s111
    %s131 = sphi 0, %s133
    %s134 = sphi 0, %s131
    %s135 = sphi 0, %s134
    %s151 = sphi 0, %s135
  $region4: #{tpu_custom_call.1} parent=0 // loop_header_branch
    %14 = sbr.rel (%p12) target = $region8
  $region5: #{tpu_custom_call.1} parent=0 // loop_body
    %s16 = ssub.s32 %s11, 1
    %s17 = ssub.s32 %s11, 2
    %s18 = sadd.s32 %s11, 1
    %s19 = ssub.s32 %s11, %s18
    %p20 = scmp.eq.s32.totalorder %s19, 0
    %s22 = sadd.s32 %s21, 1
    %s23 = scalar_select %p20, %s21, %s22
    %p26 = pneg %p20
    %p27 = scmp.eq.s32.totalorder %s11, 1
    %p28 = por %p26, %p27
    %p29 = scmp.ne.s32.totalorder %s21, %s24
    %p30 = scmp.eq.s32.totalorder %s11, 0
    %p31 = por %p29, %p30
    %p32 = scmp.ne.s32.totalorder %s21, %s24
    %p33 = scmp.eq.s32.totalorder %s16, 1
    %p34 = por %p32, %p33
    %p35 = scmp.ne.s32.totalorder %s24, %s25
    %p36 = scmp.eq.s32.totalorder %s16, 0
    %p37 = por %p35, %p36
    %p38 = scmp.ne.s32.totalorder %s24, %s25
    %p39 = scmp.eq.s32.totalorder %s17, 1
    %p40 = por %p38, %p39
    %p42 = scmp.ne.s32.totalorder %s25, %s41
    %p43 = scmp.eq.s32.totalorder %s17, 0
    %p44 = por %p42, %p43
    %s46 = sadd.s32 %s45, 1
    %p49 = scmp.eq.s32.totalorder %s11, 1
    %p50 = scmp.ne.s32.totalorder %s45, %s47
    %p51 = scmp.eq.s32.totalorder %s11, 0
    %p52 = por %p50, %p51
    %p53 = scmp.ne.s32.totalorder %s45, %s47
    %p54 = scmp.eq.s32.totalorder %s16, 1
    %p55 = por %p53, %p54
    %p56 = scmp.ne.s32.totalorder %s47, %s48
    %p57 = scmp.eq.s32.totalorder %s16, 0
    %p58 = por %p56, %p57
    %p59 = scmp.ne.s32.totalorder %s47, %s48
    %p60 = scmp.eq.s32.totalorder %s17, 1
    %p61 = por %p59, %p60
    %p63 = scmp.ne.s32.totalorder %s48, %s62
    %p64 = scmp.eq.s32.totalorder %s17, 0
    %p65 = por %p63, %p64
    %s67 = sadd.s32 %s66, 1
    %p70 = scmp.eq.s32.totalorder %s11, 1
    %p71 = scmp.ne.s32.totalorder %s66, %s68
    %p72 = scmp.eq.s32.totalorder %s11, 0
    %p73 = por %p71, %p72
    %p74 = scmp.ne.s32.totalorder %s66, %s68
    %p75 = scmp.eq.s32.totalorder %s16, 1
    %p76 = por %p74, %p75
    %p77 = scmp.ne.s32.totalorder %s68, %s69
    %p78 = scmp.eq.s32.totalorder %s16, 0
    %p79 = por %p77, %p78
    %p80 = scmp.ne.s32.totalorder %s68, %s69
    %p81 = scmp.eq.s32.totalorder %s17, 1
    %p82 = por %p80, %p81
    %p84 = scmp.ne.s32.totalorder %s69, %s83
    %p85 = scmp.eq.s32.totalorder %s17, 0
    %p86 = por %p84, %p85
    %s88 = sadd.s32 %s87, 1
    %p91 = scmp.eq.s32.totalorder %s11, 1
    %p92 = scmp.ne.s32.totalorder %s87, %s89
    %p93 = scmp.eq.s32.totalorder %s11, 0
    %p94 = por %p92, %p93
    %p95 = scmp.ne.s32.totalorder %s87, %s89
    %p96 = scmp.eq.s32.totalorder %s16, 1
    %p97 = por %p95, %p96
    %p98 = scmp.ne.s32.totalorder %s89, %s90
    %p99 = scmp.eq.s32.totalorder %s16, 0
    %p100 = por %p98, %p99
    %p101 = scmp.ne.s32.totalorder %s89, %s90
    %p102 = scmp.eq.s32.totalorder %s17, 1
    %p103 = por %p101, %p102
    %p105 = scmp.ne.s32.totalorder %s90, %s104
    %p106 = scmp.eq.s32.totalorder %s17, 0
    %p107 = por %p105, %p106
    %s109 = sadd.s32 %s108, 1
    %p112 = scmp.eq.s32.totalorder %s11, 1
    %p113 = scmp.ne.s32.totalorder %s108, %s110
    %p114 = scmp.eq.s32.totalorder %s11, 0
    %p115 = por %p113, %p114
    %p116 = scmp.ne.s32.totalorder %s108, %s110
    %p117 = scmp.eq.s32.totalorder %s16, 1
    %p118 = por %p116, %p117
    %p119 = scmp.ne.s32.totalorder %s110, %s111
    %p120 = scmp.eq.s32.totalorder %s16, 0
    %p121 = por %p119, %p120
    %p122 = scmp.ne.s32.totalorder %s110, %s111
    %p123 = scmp.eq.s32.totalorder %s17, 1
    %p124 = por %p122, %p123
    %p126 = scmp.ne.s32.totalorder %s111, %s125
    %p127 = scmp.eq.s32.totalorder %s17, 0
    %p128 = por %p126, %p127
    %s129 = ssub.s32 %s11, %s18
    %p130 = scmp.eq.s32.totalorder %s129, 0
    %s132 = sadd.s32 %s131, 1
    %s133 = scalar_select %p130, %s131, %s132
    %p136 = pneg %p130
    %p137 = scmp.eq.s32.totalorder %s11, 1
    %p138 = por %p136, %p137
    %p139 = scmp.ne.s32.totalorder %s131, %s134
    %p140 = scmp.eq.s32.totalorder %s11, 0
    %p141 = por %p139, %p140
    %p142 = scmp.ne.s32.totalorder %s131, %s134
    %p143 = scmp.eq.s32.totalorder %s16, 1
    %p144 = por %p142, %p143
    %p145 = scmp.ne.s32.totalorder %s134, %s135
    %p146 = scmp.eq.s32.totalorder %s16, 0
    %p147 = por %p145, %p146
    %p148 = scmp.ne.s32.totalorder %s134, %s135
    %p149 = scmp.eq.s32.totalorder %s17, 1
    %p150 = por %p148, %p149
    %p152 = scmp.ne.s32.totalorder %s135, %s151
    %p153 = scmp.eq.s32.totalorder %s17, 0
    %p154 = por %p152, %p153
    %p155 = scmp.le.s32.totalorder 1, %s11
    %p156 = scmp.lt.s32.totalorder %s11, 3
    %p157 = pnand %p155, %p156
    %p158 = pneg %p157
    // Predicated region
    $region9: #{tpu_custom_call.1} parent=5 // pred_check
      _
    $region10: #{tpu_custom_call.1} parent=5 // pred_check_branch
      %160 = sbr.rel (%p157) target = $region12
    $region11: #{tpu_custom_call.1} parent=5 // pred_region
      %s161 = ssub.s32 %s11, 1
      // Predicated region
      $region13: #{tpu_custom_call.1} parent=11 // pred_check
        %p162 = pneg %p58
      $region14: #{tpu_custom_call.1} parent=11 // pred_check_branch
        %164 = sbr.rel (%p162) target = $region16
      $region15: #{tpu_custom_call.1} parent=11 // pred_region
        _
      $region16: #{tpu_custom_call.1} parent=11 // pred_fallthru
        _
      // Predicated region
      $region17: #{tpu_custom_call.1} parent=11 // pred_check
        %p165 = pneg %p79
      $region18: #{tpu_custom_call.1} parent=11 // pred_check_branch
        %167 = sbr.rel (%p165) target = $region20
      $region19: #{tpu_custom_call.1} parent=11 // pred_region
        _
      $region20: #{tpu_custom_call.1} parent=11 // pred_fallthru
        _
      // Predicated region
      $region21: #{tpu_custom_call.1} parent=11 // pred_check
        %p168 = pneg %p100
      $region22: #{tpu_custom_call.1} parent=11 // pred_check_branch
        %170 = sbr.rel (%p168) target = $region24
      $region23: #{tpu_custom_call.1} parent=11 // pred_region
        _
      $region24: #{tpu_custom_call.1} parent=11 // pred_fallthru
        _
      // Predicated region
      $region25: #{tpu_custom_call.1} parent=11 // pred_check
        %p171 = pneg %p121
      $region26: #{tpu_custom_call.1} parent=11 // pred_check_branch
        %173 = sbr.rel (%p171) target = $region28
      $region27: #{tpu_custom_call.1} parent=11 // pred_region
        _
      $region28: #{tpu_custom_call.1} parent=11 // pred_fallthru
        _
    $region12: #{tpu_custom_call.1} parent=5 // pred_fallthru
      _
    %p174 = scmp.lt.s32.totalorder %s11, 2
    // Predicated region
    $region29: #{tpu_custom_call.1} parent=5 // pred_check
      %p175 = pneg %p174
    $region30: #{tpu_custom_call.1} parent=5 // pred_check_branch
      %177 = sbr.rel (%p175) target = $region32
    $region31: #{tpu_custom_call.1} parent=5 // pred_region
      // Predicated region
      $region33: #{tpu_custom_call.1} parent=31 // pred_check
        %p178 = pneg %p31
      $region34: #{tpu_custom_call.1} parent=31 // pred_check_branch
        %180 = sbr.rel (%p178) target = $region36
      $region35: #{tpu_custom_call.1} parent=31 // pred_region
        %p181 = scmp.lt.s32.totalorder %s11, 1
        %s182 = scalar_select %p181, %s11, 1
        %s183 = smul.addr %s182, 32
        %s184 = smul.addr %s183, 4
        %s185 = scalar_lea.vmem %s0, %s184
      $region36: #{tpu_custom_call.1} parent=31 // pred_fallthru
        _
    $region32: #{tpu_custom_call.1} parent=5 // pred_fallthru
      _
    %p186 = scmp.le.s32.totalorder 1, %s11
    %p187 = scmp.lt.s32.totalorder %s11, 3
    %p188 = pnand %p186, %p187
    %p189 = pneg %p188
    // Predicated region
    $region37: #{tpu_custom_call.1} parent=5 // pred_check
      _
    $region38: #{tpu_custom_call.1} parent=5 // pred_check_branch
      %191 = sbr.rel (%p188) target = $region40
    $region39: #{tpu_custom_call.1} parent=5 // pred_region
      %s192 = ssub.s32 %s11, 1
      %p193 = scmp.lt.s32.totalorder %s16, 1
      %s194 = scalar_select %p193, %s16, 1
      %s195 = smul.addr %s194, 32
      %s196 = smul.addr %s195, 4
      %s197 = scalar_lea.vmem %s0, %s196
      %p198 = pneg %p37
      %p199 = pneg %p34
      %p200 = pneg %p58
      %p201 = pneg %p55
      %p202 = pneg %p79
      %p203 = pneg %p76
      %p204 = pneg %p100
      %p205 = pneg %p97
      %p206 = pneg %p121
      %p207 = pneg %p118
      %p208 = pneg %p147
      %p209 = pneg %p144
      %p210 = scmp.lt.s32.totalorder %s16, 1
      %s211 = scalar_select %p210, %s16, 1
      %s212 = smul.addr %s211, 32
      %s213 = smul.addr %s212, 8
      %s214 = scalar_lea.vmem %s5, %s213
      %p215 = scmp.lt.s32.totalorder %s16, 1
      %s216 = scalar_select %p215, %s16, 1
      %s217 = smul.addr %s216, 32
      %s218 = smul.addr %s217, 4
      %s219 = scalar_lea.vmem %s0, %s218
      %p220 = scmp.lt.s32.totalorder %s16, 1
      %s221 = scalar_select %p220, %s16, 1
      %s222 = smul.addr %s221, 32
      %s223 = smul.addr %s222, 8
      %s224 = scalar_lea.vmem %s5, %s223
      %v226 = vld [vmem:[%s219] sm:$0xf]
      %v227 = vld [vmem:[%s219 + $0x4] sm:$0xf]
      %v228 = vld [vmem:[%s219 + $0x8] sm:$0xf]
      %v229 = vld [vmem:[%s219 + $0xc] sm:$0xf]
      %v230 = vld [vmem:[%s219 + $0x10] sm:$0xf]
      %v231 = vld [vmem:[%s219 + $0x14] sm:$0xf]
      %v232 = vld [vmem:[%s219 + $0x18] sm:$0xf]
      %v233 = vld [vmem:[%s219 + $0x1c] sm:$0xf]
      %v234 = vld [vmem:[%s219 + $0x20] sm:$0xf]
      %v235 = vld [vmem:[%s219 + $0x24] sm:$0xf]
      %v236 = vld [vmem:[%s219 + $0x28] sm:$0xf]
      %v237 = vld [vmem:[%s219 + $0x2c] sm:$0xf]
      %v238 = vld [vmem:[%s219 + $0x30] sm:$0xf]
      %v239 = vld [vmem:[%s219 + $0x34] sm:$0xf]
      %v240 = vld [vmem:[%s219 + $0x38] sm:$0xf]
      %v241 = vld [vmem:[%s219 + $0x3c] sm:$0xf]
      %v242 = vld [vmem:[%s219 + $0x40] sm:$0xf]
      %v243 = vld [vmem:[%s219 + $0x44] sm:$0xf]
      %v244 = vld [vmem:[%s219 + $0x48] sm:$0xf]
      %v245 = vld [vmem:[%s219 + $0x4c] sm:$0xf]
      %v246 = vld [vmem:[%s219 + $0x50] sm:$0xf]
      %v247 = vld [vmem:[%s219 + $0x54] sm:$0xf]
      %v248 = vld [vmem:[%s219 + $0x58] sm:$0xf]
      %v249 = vld [vmem:[%s219 + $0x5c] sm:$0xf]
      %v250 = vld [vmem:[%s219 + $0x60] sm:$0xf]
      %v251 = vld [vmem:[%s219 + $0x64] sm:$0xf]
      %v252 = vld [vmem:[%s219 + $0x68] sm:$0xf]
      %v253 = vld [vmem:[%s219 + $0x6c] sm:$0xf]
      %v254 = vld [vmem:[%s219 + $0x70] sm:$0xf]
      %v255 = vld [vmem:[%s219 + $0x74] sm:$0xf]
      %v256 = vld [vmem:[%s219 + $0x78] sm:$0xf]
      %v257 = vld [vmem:[%s219 + $0x7c] sm:$0xf]
      %v258 = vld [vmem:[%s1] sm:$0x3]
      %v259 = vld [vmem:[%s2] sm:$0x1]
      %v261 = vlaneseq
      %v262 = vshrl.u32 %v261, 7
      %v263 = vsub.s32 0, %v262
      %v264 = vrot.slane %v259, %v263
      %v298 = vunpack.c.l.b16 %v226
      %v299 = vunpack.c.l.b16 %v227
      %v300 = vunpack.c.l.b16 %v228
      %v301 = vunpack.c.l.b16 %v229
      %v302 = vunpack.c.l.b16 %v230
      %v303 = vunpack.c.l.b16 %v231
      %v304 = vunpack.c.l.b16 %v232
      %v305 = vunpack.c.l.b16 %v233
      %v306 = vunpack.c.l.b16 %v234
      %v307 = vunpack.c.l.b16 %v235
      %v308 = vunpack.c.l.b16 %v236
      %v309 = vunpack.c.l.b16 %v237
      %v310 = vunpack.c.l.b16 %v238
      %v311 = vunpack.c.l.b16 %v239
      %v312 = vunpack.c.l.b16 %v240
      %v313 = vunpack.c.l.b16 %v241
      %v314 = vunpack.c.l.b16 %v242
      %v315 = vunpack.c.l.b16 %v243
      %v316 = vunpack.c.l.b16 %v244
      %v317 = vunpack.c.l.b16 %v245
      %v318 = vunpack.c.l.b16 %v246
      %v319 = vunpack.c.l.b16 %v247
      %v320 = vunpack.c.l.b16 %v248
      %v321 = vunpack.c.l.b16 %v249
      %v322 = vunpack.c.l.b16 %v250
      %v323 = vunpack.c.l.b16 %v251
      %v324 = vunpack.c.l.b16 %v252
      %v325 = vunpack.c.l.b16 %v253
      %v326 = vunpack.c.l.b16 %v254
      %v327 = vunpack.c.l.b16 %v255
      %v328 = vunpack.c.l.b16 %v256
      %v329 = vunpack.c.l.b16 %v257
      %v330 = vpack.c.b16 %v299, %v298
      %v331 = vpack.c.b16 %v301, %v300
      %v332 = vpack.c.b16 %v303, %v302
      %v333 = vpack.c.b16 %v305, %v304
      %v334 = vpack.c.b16 %v307, %v306
      %v335 = vpack.c.b16 %v309, %v308
      %v336 = vpack.c.b16 %v311, %v310
      %v337 = vpack.c.b16 %v313, %v312
      %v338 = vpack.c.b16 %v315, %v314
      %v339 = vpack.c.b16 %v317, %v316
      %v340 = vpack.c.b16 %v319, %v318
      %v341 = vpack.c.b16 %v321, %v320
      %v342 = vpack.c.b16 %v323, %v322
      %v343 = vpack.c.b16 %v325, %v324
      %v344 = vpack.c.b16 %v327, %v326
      %v345 = vpack.c.b16 %v329, %v328
      %vm346 = vcmask 31744
      %v348 = vsel %vm346, %v330, 0
      %v351 = vsel %vm346, %v331, 0
      %v354 = vsel %vm346, %v332, 0
      %v357 = vsel %vm346, %v333, 0
      %v360 = vsel %vm346, %v334, 0
      %v363 = vsel %vm346, %v335, 0
      %v366 = vsel %vm346, %v336, 0
      %v369 = vsel %vm346, %v337, 0
      %v372 = vsel %vm346, %v338, 0
      %v375 = vsel %vm346, %v339, 0
      %v378 = vsel %vm346, %v340, 0
      %v381 = vsel %vm346, %v341, 0
      %v384 = vsel %vm346, %v342, 0
      %v387 = vsel %vm346, %v343, 0
      %v390 = vsel %vm346, %v344, 0
      %v393 = vsel %vm346, %v345, 0
      %vm395 = vcmask 1041408
      %v397 = vsel %vm395, %v258, 0
      %399 = vmatprep.subr.bf16.mxu0 0
      %400 = vmatpush1.bf16.msra.mxu0 %v397
      %401 = vmatprep.subr.bf16.mxu0 0
      %402 = vmatpush1.bf16.msra.mxu0 0
      %403 = vmatprep.subr.bf16.mxu0 0
      %404 = vmatpush1.bf16.msra.mxu0 0
      %405 = vmatprep.subr.bf16.mxu0 0
      %406 = vmatpush1.bf16.msra.mxu0 0
      %407 = vmatprep.subr.bf16.mxu0 0
      %408 = vmatpush1.bf16.msra.mxu0 0
      %409 = vmatprep.subr.bf16.mxu0 0
      %410 = vmatpush1.bf16.msra.mxu0 0
      %411 = vmatprep.subr.bf16.mxu0 0
      %412 = vmatpush1.bf16.msra.mxu0 0
      %413 = vmatprep.subr.bf16.mxu0 0
      %414 = vmatpush1.bf16.msra.mxu0 0
      %415 = vmatprep.subr.bf16.mxu0 0
      %416 = vmatpush1.bf16.msra.mxu0 0
      %417 = vmatprep.subr.bf16.mxu0 0
      %418 = vmatpush1.bf16.msra.mxu0 0
      %419 = vmatprep.subr.bf16.mxu0 0
      %420 = vmatpush1.bf16.msra.mxu0 0
      %421 = vmatprep.subr.bf16.mxu0 0
      %422 = vmatpush1.bf16.msra.mxu0 0
      %423 = vmatprep.subr.bf16.mxu0 0
      %424 = vmatpush1.bf16.msra.mxu0 0
      %425 = vmatprep.subr.bf16.mxu0 0
      %426 = vmatpush1.bf16.msra.mxu0 0
      %427 = vmatprep.subr.bf16.mxu0 0
      %428 = vmatpush1.bf16.msra.mxu0 0
      %429 = vmatprep.subr.bf16.mxu0 0
      %430 = vmatpush1.bf16.msra.mxu0 0
      %431 = vmatprep.mubr.bf16.mxu0 0
      %432 = vmatmul.mubr.bf16.gmra.mrb[0].mxu0 %v348
      %v433 = vpop.f32.mrb[0].mxu0
      %v434 = vadd.f32 %v264, %v433
      %v435 = vpop.f32.mrb[0].mxu0
      %v436 = vpop.f32.mrb[0].mxu0
      %v437 = vadd.f32 %v264, %v436
      %v438 = vpop.f32.mrb[0].mxu0
      %439 = vmatprep.mubr.bf16.mxu0 0
      %440 = vmatmul.mubr.bf16.gmra.mrb[0].mxu0 %v351
      %v441 = vpop.f32.mrb[0].mxu0
      %v442 = vadd.f32 %v264, %v441
      %v443 = vpop.f32.mrb[0].mxu0
      %v444 = vpop.f32.mrb[0].mxu0
      %v445 = vadd.f32 %v264, %v444
      %v446 = vpop.f32.mrb[0].mxu0
      %447 = vmatprep.mubr.bf16.mxu0 0
      %448 = vmatmul.mubr.bf16.gmra.mrb[0].mxu0 %v354
      %v449 = vpop.f32.mrb[0].mxu0
      %v450 = vadd.f32 %v264, %v449
      %v451 = vpop.f32.mrb[0].mxu0
      %v452 = vpop.f32.mrb[0].mxu0
      %v453 = vadd.f32 %v264, %v452
      %v454 = vpop.f32.mrb[0].mxu0
      %455 = vmatprep.mubr.bf16.mxu0 0
      %456 = vmatmul.mubr.bf16.gmra.mrb[0].mxu0 %v357
      %v457 = vpop.f32.mrb[0].mxu0
      %v458 = vadd.f32 %v264, %v457
      %v459 = vpop.f32.mrb[0].mxu0
      %v460 = vpop.f32.mrb[0].mxu0
      %v461 = vadd.f32 %v264, %v460
      %v462 = vpop.f32.mrb[0].mxu0
      %463 = vmatprep.mubr.bf16.mxu0 0
      %464 = vmatmul.mubr.bf16.gmra.mrb[0].mxu0 %v360
      %v465 = vpop.f32.mrb[0].mxu0
      %v466 = vadd.f32 %v264, %v465
      %v467 = vpop.f32.mrb[0].mxu0
      %v468 = vpop.f32.mrb[0].mxu0
      %v469 = vadd.f32 %v264, %v468
      %v470 = vpop.f32.mrb[0].mxu0
      %471 = vmatprep.mubr.bf16.mxu0 0
      %472 = vmatmul.mubr.bf16.gmra.mrb[0].mxu0 %v363
      %v473 = vpop.f32.mrb[0].mxu0
      %v474 = vadd.f32 %v264, %v473
      %v475 = vpop.f32.mrb[0].mxu0
      %v476 = vpop.f32.mrb[0].mxu0
      %v477 = vadd.f32 %v264, %v476
      %v478 = vpop.f32.mrb[0].mxu0
      %479 = vmatprep.mubr.bf16.mxu0 0
      %480 = vmatmul.mubr.bf16.gmra.mrb[0].mxu0 %v366
      %v481 = vpop.f32.mrb[0].mxu0
      %v482 = vadd.f32 %v264, %v481
      %v483 = vpop.f32.mrb[0].mxu0
      %v484 = vpop.f32.mrb[0].mxu0
      %v485 = vadd.f32 %v264, %v484
      %v486 = vpop.f32.mrb[0].mxu0
      %487 = vmatprep.mubr.bf16.mxu0 0
      %488 = vmatmul.mubr.bf16.gmra.mrb[0].mxu0 %v369
      %v489 = vpop.f32.mrb[0].mxu0
      %v490 = vadd.f32 %v264, %v489
      %v491 = vpop.f32.mrb[0].mxu0
      %v492 = vpop.f32.mrb[0].mxu0
      %v493 = vadd.f32 %v264, %v492
      %v494 = vpop.f32.mrb[0].mxu0
      %495 = vmatprep.mubr.bf16.mxu0 0
      %496 = vmatmul.mubr.bf16.gmra.mrb[0].mxu0 %v372
      %v497 = vpop.f32.mrb[0].mxu0
      %v498 = vadd.f32 %v264, %v497
      %v499 = vpop.f32.mrb[0].mxu0
      %v500 = vpop.f32.mrb[0].mxu0
      %v501 = vadd.f32 %v264, %v500
      %v502 = vpop.f32.mrb[0].mxu0
      %503 = vmatprep.mubr.bf16.mxu0 0
      %504 = vmatmul.mubr.bf16.gmra.mrb[0].mxu0 %v375
      %v505 = vpop.f32.mrb[0].mxu0
      %v506 = vadd.f32 %v264, %v505
      %v507 = vpop.f32.mrb[0].mxu0
      %v508 = vpop.f32.mrb[0].mxu0
      %v509 = vadd.f32 %v264, %v508
      %v510 = vpop.f32.mrb[0].mxu0
      %511 = vmatprep.mubr.bf16.mxu0 0
      %512 = vmatmul.mubr.bf16.gmra.mrb[0].mxu0 %v378
      %v513 = vpop.f32.mrb[0].mxu0
      %v514 = vadd.f32 %v264, %v513
      %v515 = vpop.f32.mrb[0].mxu0
      %v516 = vpop.f32.mrb[0].mxu0
      %v517 = vadd.f32 %v264, %v516
      %v518 = vpop.f32.mrb[0].mxu0
      %519 = vmatprep.mubr.bf16.mxu0 0
      %520 = vmatmul.mubr.bf16.gmra.mrb[0].mxu0 %v381
      %v521 = vpop.f32.mrb[0].mxu0
      %v522 = vadd.f32 %v264, %v521
      %v523 = vpop.f32.mrb[0].mxu0
      %v524 = vpop.f32.mrb[0].mxu0
      %v525 = vadd.f32 %v264, %v524
      %v526 = vpop.f32.mrb[0].mxu0
      %527 = vmatprep.mubr.bf16.mxu0 0
      %528 = vmatmul.mubr.bf16.gmra.mrb[0].mxu0 %v384
      %v529 = vpop.f32.mrb[0].mxu0
      %v530 = vadd.f32 %v264, %v529
      %v531 = vpop.f32.mrb[0].mxu0
      %v532 = vpop.f32.mrb[0].mxu0
      %v533 = vadd.f32 %v264, %v532
      %v534 = vpop.f32.mrb[0].mxu0
      %535 = vmatprep.mubr.bf16.mxu0 0
      %536 = vmatmul.mubr.bf16.gmra.mrb[0].mxu0 %v387
      %v537 = vpop.f32.mrb[0].mxu0
      %v538 = vadd.f32 %v264, %v537
      %v539 = vpop.f32.mrb[0].mxu0
      %v540 = vpop.f32.mrb[0].mxu0
      %v541 = vadd.f32 %v264, %v540
      %v542 = vpop.f32.mrb[0].mxu0
      %543 = vmatprep.mubr.bf16.mxu0 0
      %544 = vmatmul.mubr.bf16.gmra.mrb[0].mxu0 %v390
      %v545 = vpop.f32.mrb[0].mxu0
      %v546 = vadd.f32 %v264, %v545
      %v547 = vpop.f32.mrb[0].mxu0
      %v548 = vpop.f32.mrb[0].mxu0
      %v549 = vadd.f32 %v264, %v548
      %v550 = vpop.f32.mrb[0].mxu0
      %551 = vmatprep.mubr.bf16.mxu0 0
      %552 = vmatmul.mubr.bf16.gmra.mrb[0].mxu0 %v393
      %v553 = vpop.f32.mrb[0].mxu0
      %v554 = vadd.f32 %v264, %v553
      %v555 = vpop.f32.mrb[0].mxu0
      %v556 = vpop.f32.mrb[0].mxu0
      %v557 = vadd.f32 %v264, %v556
      %v558 = vpop.f32.mrb[0].mxu0
      %559 = vdwg.mxu0
      %v560 = vmax.f32 %v434, 0.0
      %v561 = vmax.f32 %v437, 0.0
      %v562 = vmax.f32 %v442, 0.0
      %v563 = vmax.f32 %v445, 0.0
      %v564 = vmax.f32 %v450, 0.0
      %v565 = vmax.f32 %v453, 0.0
      %v566 = vmax.f32 %v458, 0.0
      %v567 = vmax.f32 %v461, 0.0
      %v568 = vmax.f32 %v466, 0.0
      %v569 = vmax.f32 %v469, 0.0
      %v570 = vmax.f32 %v474, 0.0
      %v571 = vmax.f32 %v477, 0.0
      %v572 = vmax.f32 %v482, 0.0
      %v573 = vmax.f32 %v485, 0.0
      %v574 = vmax.f32 %v490, 0.0
      %v575 = vmax.f32 %v493, 0.0
      %v576 = vmax.f32 %v498, 0.0
      %v577 = vmax.f32 %v501, 0.0
      %v578 = vmax.f32 %v506, 0.0
      %v579 = vmax.f32 %v509, 0.0
      %v580 = vmax.f32 %v514, 0.0
      %v581 = vmax.f32 %v517, 0.0
      %v582 = vmax.f32 %v522, 0.0
      %v583 = vmax.f32 %v525, 0.0
      %v584 = vmax.f32 %v530, 0.0
      %v585 = vmax.f32 %v533, 0.0
      %v586 = vmax.f32 %v538, 0.0
      %v587 = vmax.f32 %v541, 0.0
      %v588 = vmax.f32 %v546, 0.0
      %v589 = vmax.f32 %v549, 0.0
      %v590 = vmax.f32 %v554, 0.0
      %v591 = vmax.f32 %v557, 0.0
      %v592 = vlaneseq
      %v593 = vshrl.u32 %v592, 7
      %v594 = vadd.s32 %v593, 8
      %v595 = vpack.c.bf16 %v561, %v560
      %v596 = vpack.c.bf16 %v563, %v562
      %v597 = vpack.c.bf16 %v565, %v564
      %v598 = vpack.c.bf16 %v567, %v566
      %v599 = vpack.c.bf16 %v569, %v568
      %v600 = vpack.c.bf16 %v571, %v570
      %v601 = vpack.c.bf16 %v573, %v572
      %v602 = vpack.c.bf16 %v575, %v574
      %v603 = vpack.c.bf16 %v577, %v576
      %v604 = vpack.c.bf16 %v579, %v578
      %v605 = vpack.c.bf16 %v581, %v580
      %v606 = vpack.c.bf16 %v583, %v582
      %v607 = vpack.c.bf16 %v585, %v584
      %v608 = vpack.c.bf16 %v587, %v586
      %v609 = vpack.c.bf16 %v589, %v588
      %v610 = vpack.c.bf16 %v591, %v590
      %vm611 = vcmp.ge.s32.totalorder %v593, 1
      %vm612 = vcmp.ge.s32.totalorder %v594, 1
      %v613 = vrot.slane %v560, 7
      %v614 = vrot.slane %v562, 7
      %v615 = vrot.slane %v564, 7
      %v616 = vrot.slane %v566, 7
      %v617 = vrot.slane %v568, 7
      %v618 = vrot.slane %v570, 7
      %v619 = vrot.slane %v572, 7
      %v620 = vrot.slane %v574, 7
      %v621 = vrot.slane %v576, 7
      %v622 = vrot.slane %v578, 7
      %v623 = vrot.slane %v580, 7
      %v624 = vrot.slane %v582, 7
      %v625 = vrot.slane %v584, 7
      %v626 = vrot.slane %v586, 7
      %v627 = vrot.slane %v588, 7
      %v628 = vrot.slane %v590, 7
      %v629 = vrot.slane %v561, 7
      %v630 = vrot.slane %v563, 7
      %v631 = vrot.slane %v565, 7
      %v632 = vrot.slane %v567, 7
      %v633 = vrot.slane %v569, 7
      %v634 = vrot.slane %v571, 7
      %v635 = vrot.slane %v573, 7
      %v636 = vrot.slane %v575, 7
      %v637 = vrot.slane %v577, 7
      %v638 = vrot.slane %v579, 7
      %v639 = vrot.slane %v581, 7
      %v640 = vrot.slane %v583, 7
      %v641 = vrot.slane %v585, 7
      %v642 = vrot.slane %v587, 7
      %v643 = vrot.slane %v589, 7
      %v644 = vrot.slane %v591, 7
      %vm645 = vcmp.lt.s32.totalorder %v593, 1
      %v646 = vsel %vm645, %v613, %v629
      %v647 = vsel %vm645, %v614, %v630
      %v648 = vsel %vm645, %v615, %v631
      %v649 = vsel %vm645, %v616, %v632
      %v650 = vsel %vm645, %v617, %v633
      %v651 = vsel %vm645, %v618, %v634
      %v652 = vsel %vm645, %v619, %v635
      %v653 = vsel %vm645, %v620, %v636
      %v654 = vsel %vm645, %v621, %v637
      %v655 = vsel %vm645, %v622, %v638
      %v656 = vsel %vm645, %v623, %v639
      %v657 = vsel %vm645, %v624, %v640
      %v658 = vsel %vm645, %v625, %v641
      %v659 = vsel %vm645, %v626, %v642
      %v660 = vsel %vm645, %v627, %v643
      %v661 = vsel %vm645, %v628, %v644
      %v662 = vsel %vm645, %v629, %v613
      %v663 = vsel %vm645, %v630, %v614
      %v664 = vsel %vm645, %v631, %v615
      %v665 = vsel %vm645, %v632, %v616
      %v666 = vsel %vm645, %v633, %v617
      %v667 = vsel %vm645, %v634, %v618
      %v668 = vsel %vm645, %v635, %v619
      %v669 = vsel %vm645, %v636, %v620
      %v670 = vsel %vm645, %v637, %v621
      %v671 = vsel %vm645, %v638, %v622
      %v672 = vsel %vm645, %v639, %v623
      %v673 = vsel %vm645, %v640, %v624
      %v674 = vsel %vm645, %v641, %v625
      %v675 = vsel %vm645, %v642, %v626
      %v676 = vsel %vm645, %v643, %v627
      %v677 = vsel %vm645, %v644, %v628
      %v678 = vsel %vm611, 1, 0
      %v679 = vsel %vm612, 1, 0
      %vm680 = vcmp.eq.s32.totalorder %v678, 1
      %vm681 = vcmp.eq.s32.totalorder %v679, 1
      %v682 = vsel %vm680, %v662, 0.0
      %v683 = vsel %vm681, %v646, 0.0
      %v684 = vsel %vm680, %v663, 0.0
      %v685 = vsel %vm681, %v647, 0.0
      %v686 = vsel %vm680, %v664, 0.0
      %v687 = vsel %vm681, %v648, 0.0
      %v688 = vsel %vm680, %v665, 0.0
      %v689 = vsel %vm681, %v649, 0.0
      %v690 = vsel %vm680, %v666, 0.0
      %v691 = vsel %vm681, %v650, 0.0
      %v692 = vsel %vm680, %v667, 0.0
      %v693 = vsel %vm681, %v651, 0.0
      %v694 = vsel %vm680, %v668, 0.0
      %v695 = vsel %vm681, %v652, 0.0
      %v696 = vsel %vm680, %v669, 0.0
      %v697 = vsel %vm681, %v653, 0.0
      %v698 = vsel %vm680, %v670, 0.0
      %v699 = vsel %vm681, %v654, 0.0
      %v700 = vsel %vm680, %v671, 0.0
      %v701 = vsel %vm681, %v655, 0.0
      %v702 = vsel %vm680, %v672, 0.0
      %v703 = vsel %vm681, %v656, 0.0
      %v704 = vsel %vm680, %v673, 0.0
      %v705 = vsel %vm681, %v657, 0.0
      %v706 = vsel %vm680, %v674, 0.0
      %v707 = vsel %vm681, %v658, 0.0
      %v708 = vsel %vm680, %v675, 0.0
      %v709 = vsel %vm681, %v659, 0.0
      %v710 = vsel %vm680, %v676, 0.0
      %v711 = vsel %vm681, %v660, 0.0
      %v712 = vsel %vm680, %v677, 0.0
      %v713 = vsel %vm681, %v661, 0.0
      %v714 = vpack.c.bf16 %v683, %v682
      %v715 = vpack.c.bf16 %v685, %v684
      %v716 = vpack.c.bf16 %v687, %v686
      %v717 = vpack.c.bf16 %v689, %v688
      %v718 = vpack.c.bf16 %v691, %v690
      %v719 = vpack.c.bf16 %v693, %v692
      %v720 = vpack.c.bf16 %v695, %v694
      %v721 = vpack.c.bf16 %v697, %v696
      %v722 = vpack.c.bf16 %v699, %v698
      %v723 = vpack.c.bf16 %v701, %v700
      %v724 = vpack.c.bf16 %v703, %v702
      %v725 = vpack.c.bf16 %v705, %v704
      %v726 = vpack.c.bf16 %v707, %v706
      %v727 = vpack.c.bf16 %v709, %v708
      %v728 = vpack.c.bf16 %v711, %v710
      %v729 = vpack.c.bf16 %v713, %v712
      %vm730 = vcmp.lt.s32.totalorder %v593, 15
      %vm731 = vcmp.lt.s32.totalorder %v594, 15
      %v732 = vrot.slane %v560, 1
      %v733 = vrot.slane %v562, 1
      %v734 = vrot.slane %v564, 1
      %v735 = vrot.slane %v566, 1
      %v736 = vrot.slane %v568, 1
      %v737 = vrot.slane %v570, 1
      %v738 = vrot.slane %v572, 1
      %v739 = vrot.slane %v574, 1
      %v740 = vrot.slane %v576, 1
      %v741 = vrot.slane %v578, 1
      %v742 = vrot.slane %v580, 1
      %v743 = vrot.slane %v582, 1
      %v744 = vrot.slane %v584, 1
      %v745 = vrot.slane %v586, 1
      %v746 = vrot.slane %v588, 1
      %v747 = vrot.slane %v590, 1
      %v748 = vrot.slane %v561, 1
      %v749 = vrot.slane %v563, 1
      %v750 = vrot.slane %v565, 1
      %v751 = vrot.slane %v567, 1
      %v752 = vrot.slane %v569, 1
      %v753 = vrot.slane %v571, 1
      %v754 = vrot.slane %v573, 1
      %v755 = vrot.slane %v575, 1
      %v756 = vrot.slane %v577, 1
      %v757 = vrot.slane %v579, 1
      %v758 = vrot.slane %v581, 1
      %v759 = vrot.slane %v583, 1
      %v760 = vrot.slane %v585, 1
      %v761 = vrot.slane %v587, 1
      %v762 = vrot.slane %v589, 1
      %v763 = vrot.slane %v591, 1
      %vm764 = vcmp.lt.s32.totalorder %v593, 7
      %v765 = vsel %vm764, %v732, %v748
      %v766 = vsel %vm764, %v733, %v749
      %v767 = vsel %vm764, %v734, %v750
      %v768 = vsel %vm764, %v735, %v751
      %v769 = vsel %vm764, %v736, %v752
      %v770 = vsel %vm764, %v737, %v753
      %v771 = vsel %vm764, %v738, %v754
      %v772 = vsel %vm764, %v739, %v755
      %v773 = vsel %vm764, %v740, %v756
      %v774 = vsel %vm764, %v741, %v757
      %v775 = vsel %vm764, %v742, %v758
      %v776 = vsel %vm764, %v743, %v759
      %v777 = vsel %vm764, %v744, %v760
      %v778 = vsel %vm764, %v745, %v761
      %v779 = vsel %vm764, %v746, %v762
      %v780 = vsel %vm764, %v747, %v763
      %v781 = vsel %vm764, %v748, %v732
      %v782 = vsel %vm764, %v749, %v733
      %v783 = vsel %vm764, %v750, %v734
      %v784 = vsel %vm764, %v751, %v735
      %v785 = vsel %vm764, %v752, %v736
      %v786 = vsel %vm764, %v753, %v737
      %v787 = vsel %vm764, %v754, %v738
      %v788 = vsel %vm764, %v755, %v739
      %v789 = vsel %vm764, %v756, %v740
      %v790 = vsel %vm764, %v757, %v741
      %v791 = vsel %vm764, %v758, %v742
      %v792 = vsel %vm764, %v759, %v743
      %v793 = vsel %vm764, %v760, %v744
      %v794 = vsel %vm764, %v761, %v745
      %v795 = vsel %vm764, %v762, %v746
      %v796 = vsel %vm764, %v763, %v747
      %v797 = vsel %vm730, 1, 0
      %v798 = vsel %vm731, 1, 0
      %vm799 = vcmp.eq.s32.totalorder %v797, 1
      %vm800 = vcmp.eq.s32.totalorder %v798, 1
      %v801 = vsel %vm799, %v765, 0.0
      %v802 = vsel %vm800, %v781, 0.0
      %v803 = vsel %vm799, %v766, 0.0
      %v804 = vsel %vm800, %v782, 0.0
      %v805 = vsel %vm799, %v767, 0.0
      %v806 = vsel %vm800, %v783, 0.0
      %v807 = vsel %vm799, %v768, 0.0
      %v808 = vsel %vm800, %v784, 0.0
      %v809 = vsel %vm799, %v769, 0.0
      %v810 = vsel %vm800, %v785, 0.0
      %v811 = vsel %vm799, %v770, 0.0
      %v812 = vsel %vm800, %v786, 0.0
      %v813 = vsel %vm799, %v771, 0.0
      %v814 = vsel %vm800, %v787, 0.0
      %v815 = vsel %vm799, %v772, 0.0
      %v816 = vsel %vm800, %v788, 0.0
      %v817 = vsel %vm799, %v773, 0.0
      %v818 = vsel %vm800, %v789, 0.0
      %v819 = vsel %vm799, %v774, 0.0
      %v820 = vsel %vm800, %v790, 0.0
      %v821 = vsel %vm799, %v775, 0.0
      %v822 = vsel %vm800, %v791, 0.0
      %v823 = vsel %vm799, %v776, 0.0
      %v824 = vsel %vm800, %v792, 0.0
      %v825 = vsel %vm799, %v777, 0.0
      %v826 = vsel %vm800, %v793, 0.0
      %v827 = vsel %vm799, %v778, 0.0
      %v828 = vsel %vm800, %v794, 0.0
      %v829 = vsel %vm799, %v779, 0.0
      %v830 = vsel %vm800, %v795, 0.0
      %v831 = vsel %vm799, %v780, 0.0
      %v832 = vsel %vm800, %v796, 0.0
      %v833 = vpack.c.bf16 %v802, %v801
      %v834 = vpack.c.bf16 %v804, %v803
      %v835 = vpack.c.bf16 %v806, %v805
      %v836 = vpack.c.bf16 %v808, %v807
      %v837 = vpack.c.bf16 %v810, %v809
      %v838 = vpack.c.bf16 %v812, %v811
      %v839 = vpack.c.bf16 %v814, %v813
      %v840 = vpack.c.bf16 %v816, %v815
      %v841 = vpack.c.bf16 %v818, %v817
      %v842 = vpack.c.bf16 %v820, %v819
      %v843 = vpack.c.bf16 %v822, %v821
      %v844 = vpack.c.bf16 %v824, %v823
      %v845 = vpack.c.bf16 %v826, %v825
      %v846 = vpack.c.bf16 %v828, %v827
      %v847 = vpack.c.bf16 %v830, %v829
      %v848 = vpack.c.bf16 %v832, %v831
      %v849 = vld [vmem:[%s3] sm:$0xf]
      %v850 = vld [vmem:[%s3 + $0x4] sm:$0xf]
      %v851 = vld [vmem:[%s3 + $0x8] sm:$0x1]
      %v852 = vld [vmem:[%s4] sm:$0x1]
      %869 = vrot.lane.b32.xlu0 0, 2
      %v870 = vpop.permute.xlu0 %869
      %871 = vrot.lane.b32.xlu0 %v595, 2
      %v872 = vpop.permute.xlu0 %871
      %873 = vrot.lane.b32.xlu0 %v596, 2
      %v874 = vpop.permute.xlu0 %873
      %875 = vrot.lane.b32.xlu0 %v597, 2
      %v876 = vpop.permute.xlu0 %875
      %877 = vrot.lane.b32.xlu0 %v598, 2
      %v878 = vpop.permute.xlu0 %877
      %879 = vrot.lane.b32.xlu0 %v599, 2
      %v880 = vpop.permute.xlu0 %879
      %881 = vrot.lane.b32.xlu0 %v600, 2
      %v882 = vpop.permute.xlu0 %881
      %883 = vrot.lane.b32.xlu0 %v601, 2
      %v884 = vpop.permute.xlu0 %883
      %885 = vrot.lane.b32.xlu0 %v602, 2
      %v886 = vpop.permute.xlu0 %885
      %887 = vrot.lane.b32.xlu0 %v603, 2
      %v888 = vpop.permute.xlu0 %887
      %889 = vrot.lane.b32.xlu0 %v604, 2
      %v890 = vpop.permute.xlu0 %889
      %891 = vrot.lane.b32.xlu0 %v605, 2
      %v892 = vpop.permute.xlu0 %891
      %893 = vrot.lane.b32.xlu0 %v606, 2
      %v894 = vpop.permute.xlu0 %893
      %895 = vrot.lane.b32.xlu0 %v607, 2
      %v896 = vpop.permute.xlu0 %895
      %897 = vrot.lane.b32.xlu0 %v608, 2
      %v898 = vpop.permute.xlu0 %897
      %899 = vrot.lane.b32.xlu0 %v609, 2
      %v900 = vpop.permute.xlu0 %899
      %916 = vrot.lane.b32.xlu0 0, 4
      %v917 = vpop.permute.xlu0 %916
      %918 = vrot.lane.b32.xlu0 %v833, 4
      %v919 = vpop.permute.xlu0 %918
      %920 = vrot.lane.b32.xlu0 %v834, 4
      %v921 = vpop.permute.xlu0 %920
      %922 = vrot.lane.b32.xlu0 %v835, 4
      %v923 = vpop.permute.xlu0 %922
      %924 = vrot.lane.b32.xlu0 %v836, 4
      %v925 = vpop.permute.xlu0 %924
      %926 = vrot.lane.b32.xlu0 %v837, 4
      %v927 = vpop.permute.xlu0 %926
      %928 = vrot.lane.b32.xlu0 %v838, 4
      %v929 = vpop.permute.xlu0 %928
      %930 = vrot.lane.b32.xlu0 %v839, 4
      %v931 = vpop.permute.xlu0 %930
      %932 = vrot.lane.b32.xlu0 %v840, 4
      %v933 = vpop.permute.xlu0 %932
      %934 = vrot.lane.b32.xlu0 %v841, 4
      %v935 = vpop.permute.xlu0 %934
      %936 = vrot.lane.b32.xlu0 %v842, 4
      %v937 = vpop.permute.xlu0 %936
      %938 = vrot.lane.b32.xlu0 %v843, 4
      %v939 = vpop.permute.xlu0 %938
      %940 = vrot.lane.b32.xlu0 %v844, 4
      %v941 = vpop.permute.xlu0 %940
      %942 = vrot.lane.b32.xlu0 %v845, 4
      %v943 = vpop.permute.xlu0 %942
      %944 = vrot.lane.b32.xlu0 %v846, 4
      %v945 = vpop.permute.xlu0 %944
      %946 = vrot.lane.b32.xlu0 %v847, 4
      %v947 = vpop.permute.xlu0 %946
      %964 = vrot.lane.b32.xlu0 %v714, 6
      %v965 = vpop.permute.xlu0 %964
      %966 = vrot.lane.b32.xlu0 %v715, 6
      %v967 = vpop.permute.xlu0 %966
      %968 = vrot.lane.b32.xlu0 %v716, 6
      %v969 = vpop.permute.xlu0 %968
      %970 = vrot.lane.b32.xlu0 %v717, 6
      %v971 = vpop.permute.xlu0 %970
      %972 = vrot.lane.b32.xlu0 %v718, 6
      %v973 = vpop.permute.xlu0 %972
      %974 = vrot.lane.b32.xlu0 %v719, 6
      %v975 = vpop.permute.xlu0 %974
      %976 = vrot.lane.b32.xlu0 %v720, 6
      %v977 = vpop.permute.xlu0 %976
      %978 = vrot.lane.b32.xlu0 %v721, 6
      %v979 = vpop.permute.xlu0 %978
      %980 = vrot.lane.b32.xlu0 %v722, 6
      %v981 = vpop.permute.xlu0 %980
      %982 = vrot.lane.b32.xlu0 %v723, 6
      %v983 = vpop.permute.xlu0 %982
      %984 = vrot.lane.b32.xlu0 %v724, 6
      %v985 = vpop.permute.xlu0 %984
      %986 = vrot.lane.b32.xlu0 %v725, 6
      %v987 = vpop.permute.xlu0 %986
      %988 = vrot.lane.b32.xlu0 %v726, 6
      %v989 = vpop.permute.xlu0 %988
      %990 = vrot.lane.b32.xlu0 %v727, 6
      %v991 = vpop.permute.xlu0 %990
      %992 = vrot.lane.b32.xlu0 %v728, 6
      %v993 = vpop.permute.xlu0 %992
      %994 = vrot.lane.b32.xlu0 %v729, 6
      %v995 = vpop.permute.xlu0 %994
      %997 = vrot.lane.b32.xlu0 %v595, 8
      %v998 = vpop.permute.xlu0 %997
      %999 = vrot.lane.b32.xlu0 %v596, 8
      %v1000 = vpop.permute.xlu0 %999
      %1001 = vrot.lane.b32.xlu0 %v597, 8
      %v1002 = vpop.permute.xlu0 %1001
      %1003 = vrot.lane.b32.xlu0 %v598, 8
      %v1004 = vpop.permute.xlu0 %1003
      %1005 = vrot.lane.b32.xlu0 %v599, 8
      %v1006 = vpop.permute.xlu0 %1005
      %1007 = vrot.lane.b32.xlu0 %v600, 8
      %v1008 = vpop.permute.xlu0 %1007
      %1009 = vrot.lane.b32.xlu0 %v601, 8
      %v1010 = vpop.permute.xlu0 %1009
      %1011 = vrot.lane.b32.xlu0 %v602, 8
      %v1012 = vpop.permute.xlu0 %1011
      %1013 = vrot.lane.b32.xlu0 %v603, 8
      %v1014 = vpop.permute.xlu0 %1013
      %1015 = vrot.lane.b32.xlu0 %v604, 8
      %v1016 = vpop.permute.xlu0 %1015
      %1017 = vrot.lane.b32.xlu0 %v605, 8
      %v1018 = vpop.permute.xlu0 %1017
      %1019 = vrot.lane.b32.xlu0 %v606, 8
      %v1020 = vpop.permute.xlu0 %1019
      %1021 = vrot.lane.b32.xlu0 %v607, 8
      %v1022 = vpop.permute.xlu0 %1021
      %1023 = vrot.lane.b32.xlu0 %v608, 8
      %v1024 = vpop.permute.xlu0 %1023
      %1025 = vrot.lane.b32.xlu0 %v609, 8
      %v1026 = vpop.permute.xlu0 %1025
      %1027 = vrot.lane.b32.xlu0 %v610, 8
      %v1028 = vpop.permute.xlu0 %1027
      %1030 = vrot.lane.b32.xlu0 %v833, 10
      %v1031 = vpop.permute.xlu0 %1030
      %1032 = vrot.lane.b32.xlu0 %v834, 10
      %v1033 = vpop.permute.xlu0 %1032
      %1034 = vrot.lane.b32.xlu0 %v835, 10
      %v1035 = vpop.permute.xlu0 %1034
      %1036 = vrot.lane.b32.xlu0 %v836, 10
      %v1037 = vpop.permute.xlu0 %1036
      %1038 = vrot.lane.b32.xlu0 %v837, 10
      %v1039 = vpop.permute.xlu0 %1038
      %1040 = vrot.lane.b32.xlu0 %v838, 10
      %v1041 = vpop.permute.xlu0 %1040
      %1042 = vrot.lane.b32.xlu0 %v839, 10
      %v1043 = vpop.permute.xlu0 %1042
      %1044 = vrot.lane.b32.xlu0 %v840, 10
      %v1045 = vpop.permute.xlu0 %1044
      %1046 = vrot.lane.b32.xlu0 %v841, 10
      %v1047 = vpop.permute.xlu0 %1046
      %1048 = vrot.lane.b32.xlu0 %v842, 10
      %v1049 = vpop.permute.xlu0 %1048
      %1050 = vrot.lane.b32.xlu0 %v843, 10
      %v1051 = vpop.permute.xlu0 %1050
      %1052 = vrot.lane.b32.xlu0 %v844, 10
      %v1053 = vpop.permute.xlu0 %1052
      %1054 = vrot.lane.b32.xlu0 %v845, 10
      %v1055 = vpop.permute.xlu0 %1054
      %1056 = vrot.lane.b32.xlu0 %v846, 10
      %v1057 = vpop.permute.xlu0 %1056
      %1058 = vrot.lane.b32.xlu0 %v847, 10
      %v1059 = vpop.permute.xlu0 %1058
      %1060 = vrot.lane.b32.xlu0 %v848, 10
      %v1061 = vpop.permute.xlu0 %1060
      %1062 = vrot.lane.b32.xlu0 %v715, 12
      %v1063 = vpop.permute.xlu0 %1062
      %1064 = vrot.lane.b32.xlu0 %v716, 12
      %v1065 = vpop.permute.xlu0 %1064
      %1066 = vrot.lane.b32.xlu0 %v717, 12
      %v1067 = vpop.permute.xlu0 %1066
      %1068 = vrot.lane.b32.xlu0 %v718, 12
      %v1069 = vpop.permute.xlu0 %1068
      %1070 = vrot.lane.b32.xlu0 %v719, 12
      %v1071 = vpop.permute.xlu0 %1070
      %1072 = vrot.lane.b32.xlu0 %v720, 12
      %v1073 = vpop.permute.xlu0 %1072
      %1074 = vrot.lane.b32.xlu0 %v721, 12
      %v1075 = vpop.permute.xlu0 %1074
      %1076 = vrot.lane.b32.xlu0 %v722, 12
      %v1077 = vpop.permute.xlu0 %1076
      %1078 = vrot.lane.b32.xlu0 %v723, 12
      %v1079 = vpop.permute.xlu0 %1078
      %1080 = vrot.lane.b32.xlu0 %v724, 12
      %v1081 = vpop.permute.xlu0 %1080
      %1082 = vrot.lane.b32.xlu0 %v725, 12
      %v1083 = vpop.permute.xlu0 %1082
      %1084 = vrot.lane.b32.xlu0 %v726, 12
      %v1085 = vpop.permute.xlu0 %1084
      %1086 = vrot.lane.b32.xlu0 %v727, 12
      %v1087 = vpop.permute.xlu0 %1086
      %1088 = vrot.lane.b32.xlu0 %v728, 12
      %v1089 = vpop.permute.xlu0 %1088
      %1090 = vrot.lane.b32.xlu0 %v729, 12
      %v1091 = vpop.permute.xlu0 %1090
      %1092 = vrot.lane.b32.xlu0 0, 12
      %v1093 = vpop.permute.xlu0 %1092
      %1094 = vrot.lane.b32.xlu0 %v596, 14
      %v1095 = vpop.permute.xlu0 %1094
      %1096 = vrot.lane.b32.xlu0 %v597, 14
      %v1097 = vpop.permute.xlu0 %1096
      %1098 = vrot.lane.b32.xlu0 %v598, 14
      %v1099 = vpop.permute.xlu0 %1098
      %1100 = vrot.lane.b32.xlu0 %v599, 14
      %v1101 = vpop.permute.xlu0 %1100
      %1102 = vrot.lane.b32.xlu0 %v600, 14
      %v1103 = vpop.permute.xlu0 %1102
      %1104 = vrot.lane.b32.xlu0 %v601, 14
      %v1105 = vpop.permute.xlu0 %1104
      %1106 = vrot.lane.b32.xlu0 %v602, 14
      %v1107 = vpop.permute.xlu0 %1106
      %1108 = vrot.lane.b32.xlu0 %v603, 14
      %v1109 = vpop.permute.xlu0 %1108
      %1110 = vrot.lane.b32.xlu0 %v604, 14
      %v1111 = vpop.permute.xlu0 %1110
      %1112 = vrot.lane.b32.xlu0 %v605, 14
      %v1113 = vpop.permute.xlu0 %1112
      %1114 = vrot.lane.b32.xlu0 %v606, 14
      %v1115 = vpop.permute.xlu0 %1114
      %1116 = vrot.lane.b32.xlu0 %v607, 14
      %v1117 = vpop.permute.xlu0 %1116
      %1118 = vrot.lane.b32.xlu0 %v608, 14
      %v1119 = vpop.permute.xlu0 %1118
      %1120 = vrot.lane.b32.xlu0 %v609, 14
      %v1121 = vpop.permute.xlu0 %1120
      %1122 = vrot.lane.b32.xlu0 %v610, 14
      %v1123 = vpop.permute.xlu0 %1122
      %1124 = vrot.lane.b32.xlu0 0, 14
      %v1125 = vpop.permute.xlu0 %1124
      %1126 = vrot.lane.b32.xlu0 %v834, 16
      %v1127 = vpop.permute.xlu0 %1126
      %1128 = vrot.lane.b32.xlu0 %v835, 16
      %v1129 = vpop.permute.xlu0 %1128
      %1130 = vrot.lane.b32.xlu0 %v836, 16
      %v1131 = vpop.permute.xlu0 %1130
      %1132 = vrot.lane.b32.xlu0 %v837, 16
      %v1133 = vpop.permute.xlu0 %1132
      %1134 = vrot.lane.b32.xlu0 %v838, 16
      %v1135 = vpop.permute.xlu0 %1134
      %1136 = vrot.lane.b32.xlu0 %v839, 16
      %v1137 = vpop.permute.xlu0 %1136
      %1138 = vrot.lane.b32.xlu0 %v840, 16
      %v1139 = vpop.permute.xlu0 %1138
      %1140 = vrot.lane.b32.xlu0 %v841, 16
      %v1141 = vpop.permute.xlu0 %1140
      %1142 = vrot.lane.b32.xlu0 %v842, 16
      %v1143 = vpop.permute.xlu0 %1142
      %1144 = vrot.lane.b32.xlu0 %v843, 16
      %v1145 = vpop.permute.xlu0 %1144
      %1146 = vrot.lane.b32.xlu0 %v844, 16
      %v1147 = vpop.permute.xlu0 %1146
      %1148 = vrot.lane.b32.xlu0 %v845, 16
      %v1149 = vpop.permute.xlu0 %1148
      %1150 = vrot.lane.b32.xlu0 %v846, 16
      %v1151 = vpop.permute.xlu0 %1150
      %1152 = vrot.lane.b32.xlu0 %v847, 16
      %v1153 = vpop.permute.xlu0 %1152
      %1154 = vrot.lane.b32.xlu0 %v848, 16
      %v1155 = vpop.permute.xlu0 %1154
      %1156 = vrot.lane.b32.xlu0 0, 16
      %v1157 = vpop.permute.xlu0 %1156
      %vm1158 = vcmask 15360
      %v1161 = vsel %vm1158, 0, %v870
      %v1164 = vsel %vm1158, %v714, %v872
      %v1167 = vsel %vm1158, %v715, %v874
      %v1170 = vsel %vm1158, %v716, %v876
      %v1173 = vsel %vm1158, %v717, %v878
      %v1176 = vsel %vm1158, %v718, %v880
      %v1179 = vsel %vm1158, %v719, %v882
      %v1182 = vsel %vm1158, %v720, %v884
      %v1185 = vsel %vm1158, %v721, %v886
      %v1188 = vsel %vm1158, %v722, %v888
      %v1191 = vsel %vm1158, %v723, %v890
      %v1194 = vsel %vm1158, %v724, %v892
      %v1197 = vsel %vm1158, %v725, %v894
      %v1200 = vsel %vm1158, %v726, %v896
      %v1203 = vsel %vm1158, %v727, %v898
      %v1206 = vsel %vm1158, %v728, %v900
      %v1208 = vsel %vm346, %v1161, %v917
      %v1210 = vsel %vm346, %v1164, %v919
      %v1212 = vsel %vm346, %v1167, %v921
      %v1214 = vsel %vm346, %v1170, %v923
      %v1216 = vsel %vm346, %v1173, %v925
      %v1218 = vsel %vm346, %v1176, %v927
      %v1220 = vsel %vm346, %v1179, %v929
      %v1222 = vsel %vm346, %v1182, %v931
      %v1224 = vsel %vm346, %v1185, %v933
      %v1226 = vsel %vm346, %v1188, %v935
      %v1228 = vsel %vm346, %v1191, %v937
      %v1230 = vsel %vm346, %v1194, %v939
      %v1232 = vsel %vm346, %v1197, %v941
      %v1234 = vsel %vm346, %v1200, %v943
      %v1236 = vsel %vm346, %v1203, %v945
      %v1238 = vsel %vm346, %v1206, %v947
      %vm1239 = vcmask 48128
      %v1241 = vsel %vm1239, %v1208, %v965
      %v1243 = vsel %vm1239, %v1210, %v967
      %v1245 = vsel %vm1239, %v1212, %v969
      %v1247 = vsel %vm1239, %v1214, %v971
      %v1249 = vsel %vm1239, %v1216, %v973
      %v1251 = vsel %vm1239, %v1218, %v975
      %v1253 = vsel %vm1239, %v1220, %v977
      %v1255 = vsel %vm1239, %v1222, %v979
      %v1257 = vsel %vm1239, %v1224, %v981
      %v1259 = vsel %vm1239, %v1226, %v983
      %v1261 = vsel %vm1239, %v1228, %v985
      %v1263 = vsel %vm1239, %v1230, %v987
      %v1265 = vsel %vm1239, %v1232, %v989
      %v1267 = vsel %vm1239, %v1234, %v991
      %v1269 = vsel %vm1239, %v1236, %v993
      %v1271 = vsel %vm1239, %v1238, %v995
      %vm1272 = vcmask 64512
      %v1274 = vsel %vm1272, %v1241, %v998
      %v1276 = vsel %vm1272, %v1243, %v1000
      %v1278 = vsel %vm1272, %v1245, %v1002
      %v1280 = vsel %vm1272, %v1247, %v1004
      %v1282 = vsel %vm1272, %v1249, %v1006
      %v1284 = vsel %vm1272, %v1251, %v1008
      %v1286 = vsel %vm1272, %v1253, %v1010
      %v1288 = vsel %vm1272, %v1255, %v1012
      %v1290 = vsel %vm1272, %v1257, %v1014
      %v1292 = vsel %vm1272, %v1259, %v1016
      %v1294 = vsel %vm1272, %v1261, %v1018
      %v1296 = vsel %vm1272, %v1263, %v1020
      %v1298 = vsel %vm1272, %v1265, %v1022
      %v1300 = vsel %vm1272, %v1267, %v1024
      %v1302 = vsel %vm1272, %v1269, %v1026
      %v1304 = vsel %vm1272, %v1271, %v1028
      %vm1305 = vcmask 80896
      %v1307 = vsel %vm1305, %v1274, %v1031
      %v1309 = vsel %vm1305, %v1276, %v1033
      %v1311 = vsel %vm1305, %v1278, %v1035
      %v1313 = vsel %vm1305, %v1280, %v1037
      %v1315 = vsel %vm1305, %v1282, %v1039
      %v1317 = vsel %vm1305, %v1284, %v1041
      %v1319 = vsel %vm1305, %v1286, %v1043
      %v1321 = vsel %vm1305, %v1288, %v1045
      %v1323 = vsel %vm1305, %v1290, %v1047
      %v1325 = vsel %vm1305, %v1292, %v1049
      %v1327 = vsel %vm1305, %v1294, %v1051
      %v1329 = vsel %vm1305, %v1296, %v1053
      %v1331 = vsel %vm1305, %v1298, %v1055
      %v1333 = vsel %vm1305, %v1300, %v1057
      %v1335 = vsel %vm1305, %v1302, %v1059
      %v1337 = vsel %vm1305, %v1304, %v1061
      %vm1338 = vcmask 97280
      %v1340 = vsel %vm1338, %v1307, %v1063
      %v1342 = vsel %vm1338, %v1309, %v1065
      %v1344 = vsel %vm1338, %v1311, %v1067
      %v1346 = vsel %vm1338, %v1313, %v1069
      %v1348 = vsel %vm1338, %v1315, %v1071
      %v1350 = vsel %vm1338, %v1317, %v1073
      %v1352 = vsel %vm1338, %v1319, %v1075
      %v1354 = vsel %vm1338, %v1321, %v1077
      %v1356 = vsel %vm1338, %v1323, %v1079
      %v1358 = vsel %vm1338, %v1325, %v1081
      %v1360 = vsel %vm1338, %v1327, %v1083
      %v1362 = vsel %vm1338, %v1329, %v1085
      %v1364 = vsel %vm1338, %v1331, %v1087
      %v1366 = vsel %vm1338, %v1333, %v1089
      %v1368 = vsel %vm1338, %v1335, %v1091
      %v1370 = vsel %vm1338, %v1337, %v1093
      %vm1371 = vcmask 113664
      %v1373 = vsel %vm1371, %v1340, %v1095
      %v1375 = vsel %vm1371, %v1342, %v1097
      %v1377 = vsel %vm1371, %v1344, %v1099
      %v1379 = vsel %vm1371, %v1346, %v1101
      %v1381 = vsel %vm1371, %v1348, %v1103
      %v1383 = vsel %vm1371, %v1350, %v1105
      %v1385 = vsel %vm1371, %v1352, %v1107
      %v1387 = vsel %vm1371, %v1354, %v1109
      %v1389 = vsel %vm1371, %v1356, %v1111
      %v1391 = vsel %vm1371, %v1358, %v1113
      %v1393 = vsel %vm1371, %v1360, %v1115
      %v1395 = vsel %vm1371, %v1362, %v1117
      %v1397 = vsel %vm1371, %v1364, %v1119
      %v1399 = vsel %vm1371, %v1366, %v1121
      %v1401 = vsel %vm1371, %v1368, %v1123
      %v1403 = vsel %vm1371, %v1370, %v1125
      %vm1404 = vcmask 130048
      %v1406 = vsel %vm1404, %v1373, %v1127
      %v1408 = vsel %vm1404, %v1375, %v1129
      %v1410 = vsel %vm1404, %v1377, %v1131
      %v1412 = vsel %vm1404, %v1379, %v1133
      %v1414 = vsel %vm1404, %v1381, %v1135
      %v1416 = vsel %vm1404, %v1383, %v1137
      %v1418 = vsel %vm1404, %v1385, %v1139
      %v1420 = vsel %vm1404, %v1387, %v1141
      %v1422 = vsel %vm1404, %v1389, %v1143
      %v1424 = vsel %vm1404, %v1391, %v1145
      %v1426 = vsel %vm1404, %v1393, %v1147
      %v1428 = vsel %vm1404, %v1395, %v1149
      %v1430 = vsel %vm1404, %v1397, %v1151
      %v1432 = vsel %vm1404, %v1399, %v1153
      %v1434 = vsel %vm1404, %v1401, %v1155
      %v1436 = vsel %vm1404, %v1403, %v1157
      %v1438 = vlaneseq
      %v1439 = vshrl.u32 %v1438, 7
      %v1440 = vsub.s32 0, %v1439
      %v1441 = vrot.slane %v852, %v1440
      %v1446 = vunpack.c.l.b16 %v849
      %v1447 = vunpack.c.l.b16 %v850
      %v1448 = vunpack.c.l.b16 %v851
      %v1449 = vpack.c.b16 %v1447, %v1446
      %v1450 = vpack.c.b16 %v1448, %v1448
      %vm1452 = vcmask 146432
      %v1453 = vsel %vm1452, %v1406, 0
      %v1455 = vsel %vm1452, %v1408, 0
      %v1457 = vsel %vm1452, %v1410, 0
      %v1459 = vsel %vm1452, %v1412, 0
      %v1461 = vsel %vm1452, %v1414, 0
      %v1463 = vsel %vm1452, %v1416, 0
      %v1465 = vsel %vm1452, %v1418, 0
      %v1467 = vsel %vm1452, %v1420, 0
      %v1469 = vsel %vm1452, %v1422, 0
      %v1471 = vsel %vm1452, %v1424, 0
      %v1473 = vsel %vm1452, %v1426, 0
      %v1475 = vsel %vm1452, %v1428, 0
      %v1477 = vsel %vm1452, %v1430, 0
      %v1479 = vsel %vm1452, %v1432, 0
      %v1481 = vsel %vm1452, %v1434, 0
      %v1483 = vsel %vm1452, %v1436, 0
      %vm1485 = vcmask 1040384
      %v1487 = vsel %vm1485, %v1450, 0
      %1489 = vmatprep.subr.bf16.mxu0 0
      %1490 = vmatpush1.bf16.msra.mxu0 %v1449
      %1491 = vmatprep.subr.bf16.mxu0 0
      %1492 = vmatpush1.bf16.msra.mxu0 %v1487
      %1493 = vmatprep.subr.bf16.mxu0 0
      %1494 = vmatpush1.bf16.msra.mxu0 0
      %1495 = vmatprep.subr.bf16.mxu0 0
      %1496 = vmatpush1.bf16.msra.mxu0 0
      %1497 = vmatprep.subr.bf16.mxu0 0
      %1498 = vmatpush1.bf16.msra.mxu0 0
      %1499 = vmatprep.subr.bf16.mxu0 0
      %1500 = vmatpush1.bf16.msra.mxu0 0
      %1501 = vmatprep.subr.bf16.mxu0 0
      %1502 = vmatpush1.bf16.msra.mxu0 0
      %1503 = vmatprep.subr.bf16.mxu0 0
      %1504 = vmatpush1.bf16.msra.mxu0 0
      %1505 = vmatprep.subr.bf16.mxu0 0
      %1506 = vmatpush1.bf16.msra.mxu0 0
      %1507 = vmatprep.subr.bf16.mxu0 0
      %1508 = vmatpush1.bf16.msra.mxu0 0
      %1509 = vmatprep.subr.bf16.mxu0 0
      %1510 = vmatpush1.bf16.msra.mxu0 0
      %1511 = vmatprep.subr.bf16.mxu0 0
      %1512 = vmatpush1.bf16.msra.mxu0 0
      %1513 = vmatprep.subr.bf16.mxu0 0
      %1514 = vmatpush1.bf16.msra.mxu0 0
      %1515 = vmatprep.subr.bf16.mxu0 0
      %1516 = vmatpush1.bf16.msra.mxu0 0
      %1517 = vmatprep.subr.bf16.mxu0 0
      %1518 = vmatpush1.bf16.msra.mxu0 0
      %1519 = vmatprep.subr.bf16.mxu0 0
      %1520 = vmatpush1.bf16.msra.mxu0 0
      %1521 = vmatprep.mubr.bf16.mxu0 0
      %1522 = vmatmul.mubr.bf16.gmra.mrb[0].mxu0 %v1453
      %v1523 = vpop.f32.mrb[0].mxu0
      %v1524 = vadd.f32 %v1441, %v1523
      %v1525 = vpop.f32.mrb[0].mxu0
      %v1526 = vpop.f32.mrb[0].mxu0
      %v1527 = vadd.f32 %v1441, %v1526
      %v1528 = vpop.f32.mrb[0].mxu0
      %1529 = vmatprep.mubr.bf16.mxu0 0
      %1530 = vmatmul.mubr.bf16.gmra.mrb[0].mxu0 %v1455
      %v1531 = vpop.f32.mrb[0].mxu0
      %v1532 = vadd.f32 %v1441, %v1531
      %v1533 = vpop.f32.mrb[0].mxu0
      %v1534 = vpop.f32.mrb[0].mxu0
      %v1535 = vadd.f32 %v1441, %v1534
      %v1536 = vpop.f32.mrb[0].mxu0
      %1537 = vmatprep.mubr.bf16.mxu0 0
      %1538 = vmatmul.mubr.bf16.gmra.mrb[0].mxu0 %v1457
      %v1539 = vpop.f32.mrb[0].mxu0
      %v1540 = vadd.f32 %v1441, %v1539
      %v1541 = vpop.f32.mrb[0].mxu0
      %v1542 = vpop.f32.mrb[0].mxu0
      %v1543 = vadd.f32 %v1441, %v1542
      %v1544 = vpop.f32.mrb[0].mxu0
      %1545 = vmatprep.mubr.bf16.mxu0 0
      %1546 = vmatmul.mubr.bf16.gmra.mrb[0].mxu0 %v1459
      %v1547 = vpop.f32.mrb[0].mxu0
      %v1548 = vadd.f32 %v1441, %v1547
      %v1549 = vpop.f32.mrb[0].mxu0
      %v1550 = vpop.f32.mrb[0].mxu0
      %v1551 = vadd.f32 %v1441, %v1550
      %v1552 = vpop.f32.mrb[0].mxu0
      %1553 = vmatprep.mubr.bf16.mxu0 0
      %1554 = vmatmul.mubr.bf16.gmra.mrb[0].mxu0 %v1461
      %v1555 = vpop.f32.mrb[0].mxu0
      %v1556 = vadd.f32 %v1441, %v1555
      %v1557 = vpop.f32.mrb[0].mxu0
      %v1558 = vpop.f32.mrb[0].mxu0
      %v1559 = vadd.f32 %v1441, %v1558
      %v1560 = vpop.f32.mrb[0].mxu0
      %1561 = vmatprep.mubr.bf16.mxu0 0
      %1562 = vmatmul.mubr.bf16.gmra.mrb[0].mxu0 %v1463
      %v1563 = vpop.f32.mrb[0].mxu0
      %v1564 = vadd.f32 %v1441, %v1563
      %v1565 = vpop.f32.mrb[0].mxu0
      %v1566 = vpop.f32.mrb[0].mxu0
      %v1567 = vadd.f32 %v1441, %v1566
      %v1568 = vpop.f32.mrb[0].mxu0
      %1569 = vmatprep.mubr.bf16.mxu0 0
      %1570 = vmatmul.mubr.bf16.gmra.mrb[0].mxu0 %v1465
      %v1571 = vpop.f32.mrb[0].mxu0
      %v1572 = vadd.f32 %v1441, %v1571
      %v1573 = vpop.f32.mrb[0].mxu0
      %v1574 = vpop.f32.mrb[0].mxu0
      %v1575 = vadd.f32 %v1441, %v1574
      %v1576 = vpop.f32.mrb[0].mxu0
      %1577 = vmatprep.mubr.bf16.mxu0 0
      %1578 = vmatmul.mubr.bf16.gmra.mrb[0].mxu0 %v1467
      %v1579 = vpop.f32.mrb[0].mxu0
      %v1580 = vadd.f32 %v1441, %v1579
      %v1581 = vpop.f32.mrb[0].mxu0
      %v1582 = vpop.f32.mrb[0].mxu0
      %v1583 = vadd.f32 %v1441, %v1582
      %v1584 = vpop.f32.mrb[0].mxu0
      %1585 = vmatprep.mubr.bf16.mxu0 0
      %1586 = vmatmul.mubr.bf16.gmra.mrb[0].mxu0 %v1469
      %v1587 = vpop.f32.mrb[0].mxu0
      %v1588 = vadd.f32 %v1441, %v1587
      %v1589 = vpop.f32.mrb[0].mxu0
      %v1590 = vpop.f32.mrb[0].mxu0
      %v1591 = vadd.f32 %v1441, %v1590
      %v1592 = vpop.f32.mrb[0].mxu0
      %1593 = vmatprep.mubr.bf16.mxu0 0
      %1594 = vmatmul.mubr.bf16.gmra.mrb[0].mxu0 %v1471
      %v1595 = vpop.f32.mrb[0].mxu0
      %v1596 = vadd.f32 %v1441, %v1595
      %v1597 = vpop.f32.mrb[0].mxu0
      %v1598 = vpop.f32.mrb[0].mxu0
      %v1599 = vadd.f32 %v1441, %v1598
      %v1600 = vpop.f32.mrb[0].mxu0
      %1601 = vmatprep.mubr.bf16.mxu0 0
      %1602 = vmatmul.mubr.bf16.gmra.mrb[0].mxu0 %v1473
      %v1603 = vpop.f32.mrb[0].mxu0
      %v1604 = vadd.f32 %v1441, %v1603
      %v1605 = vpop.f32.mrb[0].mxu0
      %v1606 = vpop.f32.mrb[0].mxu0
      %v1607 = vadd.f32 %v1441, %v1606
      %v1608 = vpop.f32.mrb[0].mxu0
      %1609 = vmatprep.mubr.bf16.mxu0 0
      %1610 = vmatmul.mubr.bf16.gmra.mrb[0].mxu0 %v1475
      %v1611 = vpop.f32.mrb[0].mxu0
      %v1612 = vadd.f32 %v1441, %v1611
      %v1613 = vpop.f32.mrb[0].mxu0
      %v1614 = vpop.f32.mrb[0].mxu0
      %v1615 = vadd.f32 %v1441, %v1614
      %v1616 = vpop.f32.mrb[0].mxu0
      %1617 = vmatprep.mubr.bf16.mxu0 0
      %1618 = vmatmul.mubr.bf16.gmra.mrb[0].mxu0 %v1477
      %v1619 = vpop.f32.mrb[0].mxu0
      %v1620 = vadd.f32 %v1441, %v1619
      %v1621 = vpop.f32.mrb[0].mxu0
      %v1622 = vpop.f32.mrb[0].mxu0
      %v1623 = vadd.f32 %v1441, %v1622
      %v1624 = vpop.f32.mrb[0].mxu0
      %1625 = vmatprep.mubr.bf16.mxu0 0
      %1626 = vmatmul.mubr.bf16.gmra.mrb[0].mxu0 %v1479
      %v1627 = vpop.f32.mrb[0].mxu0
      %v1628 = vadd.f32 %v1441, %v1627
      %v1629 = vpop.f32.mrb[0].mxu0
      %v1630 = vpop.f32.mrb[0].mxu0
      %v1631 = vadd.f32 %v1441, %v1630
      %v1632 = vpop.f32.mrb[0].mxu0
      %1633 = vmatprep.mubr.bf16.mxu0 0
      %1634 = vmatmul.mubr.bf16.gmra.mrb[0].mxu0 %v1481
      %v1635 = vpop.f32.mrb[0].mxu0
      %v1636 = vadd.f32 %v1441, %v1635
      %v1637 = vpop.f32.mrb[0].mxu0
      %v1638 = vpop.f32.mrb[0].mxu0
      %v1639 = vadd.f32 %v1441, %v1638
      %v1640 = vpop.f32.mrb[0].mxu0
      %1641 = vmatprep.mubr.bf16.mxu0 0
      %1642 = vmatmul.mubr.bf16.gmra.mrb[0].mxu0 %v1483
      %v1643 = vpop.f32.mrb[0].mxu0
      %v1644 = vadd.f32 %v1441, %v1643
      %v1645 = vpop.f32.mrb[0].mxu0
      %v1646 = vpop.f32.mrb[0].mxu0
      %v1647 = vadd.f32 %v1441, %v1646
      %v1648 = vpop.f32.mrb[0].mxu0
      %1649 = vdwg.mxu0
      %v1650 = vmax.f32 %v1524, 0.0
      %v1651 = vmax.f32 %v1527, 0.0
      %v1652 = vmax.f32 %v1532, 0.0
      %v1653 = vmax.f32 %v1535, 0.0
      %v1654 = vmax.f32 %v1540, 0.0
      %v1655 = vmax.f32 %v1543, 0.0
      %v1656 = vmax.f32 %v1548, 0.0
      %v1657 = vmax.f32 %v1551, 0.0
      %v1658 = vmax.f32 %v1556, 0.0
      %v1659 = vmax.f32 %v1559, 0.0
      %v1660 = vmax.f32 %v1564, 0.0
      %v1661 = vmax.f32 %v1567, 0.0
      %v1662 = vmax.f32 %v1572, 0.0
      %v1663 = vmax.f32 %v1575, 0.0
      %v1664 = vmax.f32 %v1580, 0.0
      %v1665 = vmax.f32 %v1583, 0.0
      %v1666 = vmax.f32 %v1588, 0.0
      %v1667 = vmax.f32 %v1591, 0.0
      %v1668 = vmax.f32 %v1596, 0.0
      %v1669 = vmax.f32 %v1599, 0.0
      %v1670 = vmax.f32 %v1604, 0.0
      %v1671 = vmax.f32 %v1607, 0.0
      %v1672 = vmax.f32 %v1612, 0.0
      %v1673 = vmax.f32 %v1615, 0.0
      %v1674 = vmax.f32 %v1620, 0.0
      %v1675 = vmax.f32 %v1623, 0.0
      %v1676 = vmax.f32 %v1628, 0.0
      %v1677 = vmax.f32 %v1631, 0.0
      %v1678 = vmax.f32 %v1636, 0.0
      %v1679 = vmax.f32 %v1639, 0.0
      %v1680 = vmax.f32 %v1644, 0.0
      %v1681 = vmax.f32 %v1647, 0.0
      %1682 = vst.msk [vmem:[%s224] sm:$0xff] %vm1272, %v1650
      %1683 = vst.msk [vmem:[%s224 + $0x8] sm:$0xff] %vm1272, %v1651
      %1684 = vst.msk [vmem:[%s224 + $0x10] sm:$0xff] %vm1272, %v1652
      %1685 = vst.msk [vmem:[%s224 + $0x18] sm:$0xff] %vm1272, %v1653
      %1686 = vst.msk [vmem:[%s224 + $0x20] sm:$0xff] %vm1272, %v1654
      %1687 = vst.msk [vmem:[%s224 + $0x28] sm:$0xff] %vm1272, %v1655
      %1688 = vst.msk [vmem:[%s224 + $0x30] sm:$0xff] %vm1272, %v1656
      %1689 = vst.msk [vmem:[%s224 + $0x38] sm:$0xff] %vm1272, %v1657
      %1690 = vst.msk [vmem:[%s224 + $0x40] sm:$0xff] %vm1272, %v1658
      %1691 = vst.msk [vmem:[%s224 + $0x48] sm:$0xff] %vm1272, %v1659
      %1692 = vst.msk [vmem:[%s224 + $0x50] sm:$0xff] %vm1272, %v1660
      %1693 = vst.msk [vmem:[%s224 + $0x58] sm:$0xff] %vm1272, %v1661
      %1694 = vst.msk [vmem:[%s224 + $0x60] sm:$0xff] %vm1272, %v1662
      %1695 = vst.msk [vmem:[%s224 + $0x68] sm:$0xff] %vm1272, %v1663
      %1696 = vst.msk [vmem:[%s224 + $0x70] sm:$0xff] %vm1272, %v1664
      %1697 = vst.msk [vmem:[%s224 + $0x78] sm:$0xff] %vm1272, %v1665
      %1698 = vst.msk [vmem:[%s224 + $0x80] sm:$0xff] %vm1272, %v1666
      %1699 = vst.msk [vmem:[%s224 + $0x88] sm:$0xff] %vm1272, %v1667
      %1700 = vst.msk [vmem:[%s224 + $0x90] sm:$0xff] %vm1272, %v1668
      %1701 = vst.msk [vmem:[%s224 + $0x98] sm:$0xff] %vm1272, %v1669
      %1702 = vst.msk [vmem:[%s224 + $0xa0] sm:$0xff] %vm1272, %v1670
      %1703 = vst.msk [vmem:[%s224 + $0xa8] sm:$0xff] %vm1272, %v1671
      %1704 = vst.msk [vmem:[%s224 + $0xb0] sm:$0xff] %vm1272, %v1672
      %1705 = vst.msk [vmem:[%s224 + $0xb8] sm:$0xff] %vm1272, %v1673
      %1706 = vst.msk [vmem:[%s224 + $0xc0] sm:$0xff] %vm1272, %v1674
      %1707 = vst.msk [vmem:[%s224 + $0xc8] sm:$0xff] %vm1272, %v1675
      %1708 = vst.msk [vmem:[%s224 + $0xd0] sm:$0xff] %vm1272, %v1676
      %1709 = vst.msk [vmem:[%s224 + $0xd8] sm:$0xff] %vm1272, %v1677
      %1710 = vst.msk [vmem:[%s224 + $0xe0] sm:$0xff] %vm1272, %v1678
      %1711 = vst.msk [vmem:[%s224 + $0xe8] sm:$0xff] %vm1272, %v1679
      %1712 = vst.msk [vmem:[%s224 + $0xf0] sm:$0xff] %vm1272, %v1680
      %1713 = vst.msk [vmem:[%s224 + $0xf8] sm:$0xff] %vm1272, %v1681
      %p1714 = scmp.lt.s32.totalorder %s16, 1
      %s1715 = scalar_select %p1714, %s16, 1
      %s1716 = smul.addr %s1715, 32
      %s1717 = smul.addr %s1716, 8
      %s1718 = scalar_lea.vmem %s5, %s1717
      // Predicated region
      $region41: #{tpu_custom_call.1} parent=39 // pred_check
        %p1719 = pneg %p144
      $region42: #{tpu_custom_call.1} parent=39 // pred_check_branch
        %1721 = sbr.rel (%p1719) target = $region44
      $region43: #{tpu_custom_call.1} parent=39 // pred_region
        _
      $region44: #{tpu_custom_call.1} parent=39 // pred_fallthru
        _
    $region40: #{tpu_custom_call.1} parent=5 // pred_fallthru
      _
    %p1722 = scmp.le.s32.totalorder 2, %s11
    // Predicated region
    $region45: #{tpu_custom_call.1} parent=5 // pred_check
      %p1723 = pneg %p1722
    $region46: #{tpu_custom_call.1} parent=5 // pred_check_branch
      %1725 = sbr.rel (%p1723) target = $region48
    $region47: #{tpu_custom_call.1} parent=5 // pred_region
      %s1726 = ssub.s32 %s11, 2
      // Predicated region
      $region49: #{tpu_custom_call.1} parent=47 // pred_check
        %p1727 = pneg %p150
      $region50: #{tpu_custom_call.1} parent=47 // pred_check_branch
        %1729 = sbr.rel (%p1727) target = $region52
      $region51: #{tpu_custom_call.1} parent=47 // pred_region
        %p1730 = scmp.lt.s32.totalorder %s17, 1
        %s1731 = scalar_select %p1730, %s17, 1
        %s1732 = smul.addr %s1731, 32
        %s1733 = smul.addr %s1732, 8
        %s1734 = scalar_lea.vmem %s5, %s1733
      $region52: #{tpu_custom_call.1} parent=47 // pred_fallthru
        _
    $region48: #{tpu_custom_call.1} parent=5 // pred_fallthru
      _
  $region6: #{tpu_custom_call.1} parent=0 // loop_footer
    %s15 = sadd.s32 1, %s11
  $region7: #{tpu_custom_call.1} parent=0 // loop_footer_branch
    %10 = sbr.rel target = $region3
  $region8: #{tpu_custom_call.1} parent=0 // loop_exit
    _

// kernel: tpu_custom_call.1
$region0: #{tpu_custom_call.1}
  #allocation0 [shape = 'u32[]', space=smem, size = 0x4, offset = 0x4, fixed_abs, tag = 'smem constant byte address 0x4 - core index']
  #allocation1 [shape = 'u32[144,128]{1,0:T(1,128)}', space=vmem, size = 0x12000, scoped, tag = 'internal scratch']
  %s0 = inlined_call_operand.vmem [shape: bf16[2,16,16,4], index: 0, kind: input, shape index: {}]
  %s1 = inlined_call_operand.vmem [shape: bf16[4,2], index: 1, kind: input, shape index: {}]
  %s2 = inlined_call_operand.vmem [shape: f32[1,2], index: 2, kind: input, shape index: {}]
  %s3 = inlined_call_operand.vmem [shape: bf16[18,8], index: 3, kind: input, shape index: {}]
  %s4 = inlined_call_operand.vmem [shape: f32[1,8], index: 4, kind: input, shape index: {}]
  %s5 = inlined_call_operand.vmem [shape: f32[2,16,16,8], index: 5, kind: output, shape index: {}]
  %s6 = sld [smem:[#allocation0]]
  $region53: #{tpu_custom_call.1} parent=0
    _
  %s8 = ssub.s32 1, %s6
  %s9 = scalar_select 0, %s8, %s6
  loop: start=0, step=1, limit=4
  $region2: #{tpu_custom_call.1} parent=0 // loop_pre_header
    _
  $region3: #{tpu_custom_call.1} parent=0 // loop_header
    %s11 = sphi 0, %s15
    %p12 = scmp.ge.s32.totalorder %s11, 4
    %s21 = sphi 0, %s23
    %s24 = sphi 0, %s21
    %s25 = sphi 0, %s24
    %s41 = sphi 0, %s25
    %s45 = sphi 0, %s45
    %s47 = sphi 0, %s45
    %s48 = sphi 0, %s47
    %s62 = sphi 0, %s48
    %s66 = sphi 0, %s66
    %s68 = sphi 0, %s66
    %s69 = sphi 0, %s68
    %s83 = sphi 0, %s69
    %s87 = sphi 0, %s87
    %s89 = sphi 0, %s87
    %s90 = sphi 0, %s89
    %s104 = sphi 0, %s90
    %s108 = sphi 0, %s108
    %s110 = sphi 0, %s108
    %s111 = sphi 0, %s110
    %s125 = sphi 0, %s111
    %s131 = sphi 0, %s133
    %s134 = sphi 0, %s131
    %s135 = sphi 0, %s134
    %s151 = sphi 0, %s135
  $region4: #{tpu_custom_call.1} parent=0 // loop_header_branch
    %14 = sbr.rel (%p12) target = $region8
  $region5: #{tpu_custom_call.1} parent=0 // loop_body
    %s16 = ssub.s32 %s11, 1
    %s17 = ssub.s32 %s11, 2
    %s18 = sadd.s32 %s11, 1
    %s19 = ssub.s32 %s11, %s18
    %p20 = scmp.eq.s32.totalorder %s19, 0
    %s22 = sadd.s32 %s21, 1
    %s23 = scalar_select %p20, %s21, %s22
    %p26 = pneg %p20
    %p27 = scmp.eq.s32.totalorder %s11, 1
    %p28 = por %p26, %p27
    %p29 = scmp.ne.s32.totalorder %s21, %s24
    %p30 = scmp.eq.s32.totalorder %s11, 0
    %p31 = por %p29, %p30
    %p32 = scmp.ne.s32.totalorder %s21, %s24
    %p33 = scmp.eq.s32.totalorder %s16, 1
    %p34 = por %p32, %p33
    %p35 = scmp.ne.s32.totalorder %s24, %s25
    %p36 = scmp.eq.s32.totalorder %s16, 0
    %p37 = por %p35, %p36
    %p38 = scmp.ne.s32.totalorder %s24, %s25
    %p39 = scmp.eq.s32.totalorder %s17, 1
    %p40 = por %p38, %p39
    %p42 = scmp.ne.s32.totalorder %s25, %s41
    %p43 = scmp.eq.s32.totalorder %s17, 0
    %p44 = por %p42, %p43
    %s46 = sadd.s32 %s45, 1
    %p49 = scmp.eq.s32.totalorder %s11, 1
    %p50 = scmp.ne.s32.totalorder %s45, %s47
    %p51 = scmp.eq.s32.totalorder %s11, 0
    %p52 = por %p50, %p51
    %p53 = scmp.ne.s32.totalorder %s45, %s47
    %p54 = scmp.eq.s32.totalorder %s16, 1
    %p55 = por %p53, %p54
    %p56 = scmp.ne.s32.totalorder %s47, %s48
    %p57 = scmp.eq.s32.totalorder %s16, 0
    %p58 = por %p56, %p57
    %p59 = scmp.ne.s32.totalorder %s47, %s48
    %p60 = scmp.eq.s32.totalorder %s17, 1
    %p61 = por %p59, %p60
    %p63 = scmp.ne.s32.totalorder %s48, %s62
    %p64 = scmp.eq.s32.totalorder %s17, 0
    %p65 = por %p63, %p64
    %s67 = sadd.s32 %s66, 1
    %p70 = scmp.eq.s32.totalorder %s11, 1
    %p71 = scmp.ne.s32.totalorder %s66, %s68
    %p72 = scmp.eq.s32.totalorder %s11, 0
    %p73 = por %p71, %p72
    %p74 = scmp.ne.s32.totalorder %s66, %s68
    %p75 = scmp.eq.s32.totalorder %s16, 1
    %p76 = por %p74, %p75
    %p77 = scmp.ne.s32.totalorder %s68, %s69
    %p78 = scmp.eq.s32.totalorder %s16, 0
    %p79 = por %p77, %p78
    %p80 = scmp.ne.s32.totalorder %s68, %s69
    %p81 = scmp.eq.s32.totalorder %s17, 1
    %p82 = por %p80, %p81
    %p84 = scmp.ne.s32.totalorder %s69, %s83
    %p85 = scmp.eq.s32.totalorder %s17, 0
    %p86 = por %p84, %p85
    %s88 = sadd.s32 %s87, 1
    %p91 = scmp.eq.s32.totalorder %s11, 1
    %p92 = scmp.ne.s32.totalorder %s87, %s89
    %p93 = scmp.eq.s32.totalorder %s11, 0
    %p94 = por %p92, %p93
    %p95 = scmp.ne.s32.totalorder %s87, %s89
    %p96 = scmp.eq.s32.totalorder %s16, 1
    %p97 = por %p95, %p96
    %p98 = scmp.ne.s32.totalorder %s89, %s90
    %p99 = scmp.eq.s32.totalorder %s16, 0
    %p100 = por %p98, %p99
    %p101 = scmp.ne.s32.totalorder %s89, %s90
    %p102 = scmp.eq.s32.totalorder %s17, 1
    %p103 = por %p101, %p102
    %p105 = scmp.ne.s32.totalorder %s90, %s104
    %p106 = scmp.eq.s32.totalorder %s17, 0
    %p107 = por %p105, %p106
    %s109 = sadd.s32 %s108, 1
    %p112 = scmp.eq.s32.totalorder %s11, 1
    %p113 = scmp.ne.s32.totalorder %s108, %s110
    %p114 = scmp.eq.s32.totalorder %s11, 0
    %p115 = por %p113, %p114
    %p116 = scmp.ne.s32.totalorder %s108, %s110
    %p117 = scmp.eq.s32.totalorder %s16, 1
    %p118 = por %p116, %p117
    %p119 = scmp.ne.s32.totalorder %s110, %s111
    %p120 = scmp.eq.s32.totalorder %s16, 0
    %p121 = por %p119, %p120
    %p122 = scmp.ne.s32.totalorder %s110, %s111
    %p123 = scmp.eq.s32.totalorder %s17, 1
    %p124 = por %p122, %p123
    %p126 = scmp.ne.s32.totalorder %s111, %s125
    %p127 = scmp.eq.s32.totalorder %s17, 0
    %p128 = por %p126, %p127
    %s129 = ssub.s32 %s11, %s18
    %p130 = scmp.eq.s32.totalorder %s129, 0
    %s132 = sadd.s32 %s131, 1
    %s133 = scalar_select %p130, %s131, %s132
    %p136 = pneg %p130
    %p137 = scmp.eq.s32.totalorder %s11, 1
    %p138 = por %p136, %p137
    %p139 = scmp.ne.s32.totalorder %s131, %s134
    %p140 = scmp.eq.s32.totalorder %s11, 0
    %p141 = por %p139, %p140
    %p142 = scmp.ne.s32.totalorder %s131, %s134
    %p143 = scmp.eq.s32.totalorder %s16, 1
    %p144 = por %p142, %p143
    %p145 = scmp.ne.s32.totalorder %s134, %s135
    %p146 = scmp.eq.s32.totalorder %s16, 0
    %p147 = por %p145, %p146
    %p148 = scmp.ne.s32.totalorder %s134, %s135
    %p149 = scmp.eq.s32.totalorder %s17, 1
    %p150 = por %p148, %p149
    %p152 = scmp.ne.s32.totalorder %s135, %s151
    %p153 = scmp.eq.s32.totalorder %s17, 0
    %p154 = por %p152, %p153
    %p155 = scmp.le.s32.totalorder 1, %s11
    %p156 = scmp.lt.s32.totalorder %s11, 3
    %p157 = pnand %p155, %p156
    %p158 = pneg %p157
    // Predicated region
    $region9: #{tpu_custom_call.1} parent=5 // pred_check
      _
    $region10: #{tpu_custom_call.1} parent=5 // pred_check_branch
      %160 = sbr.rel (%p157) target = $region12
    $region11: #{tpu_custom_call.1} parent=5 // pred_region
      %s161 = ssub.s32 %s11, 1
      // Predicated region
      $region13: #{tpu_custom_call.1} parent=11 // pred_check
        %p162 = pneg %p58
      $region14: #{tpu_custom_call.1} parent=11 // pred_check_branch
        %164 = sbr.rel (%p162) target = $region16
      $region15: #{tpu_custom_call.1} parent=11 // pred_region
        _
      $region16: #{tpu_custom_call.1} parent=11 // pred_fallthru
        _
      // Predicated region
      $region17: #{tpu_custom_call.1} parent=11 // pred_check
        %p165 = pneg %p79
      $region18: #{tpu_custom_call.1} parent=11 // pred_check_branch
        %167 = sbr.rel (%p165) target = $region20
      $region19: #{tpu_custom_call.1} parent=11 // pred_region
        _
      $region20: #{tpu_custom_call.1} parent=11 // pred_fallthru
        _
      // Predicated region
      $region21: #{tpu_custom_call.1} parent=11 // pred_check
        %p168 = pneg %p100
      $region22: #{tpu_custom_call.1} parent=11 // pred_check_branch
        %170 = sbr.rel (%p168) target = $region24
      $region23: #{tpu_custom_call.1} parent=11 // pred_region
        _
      $region24: #{tpu_custom_call.1} parent=11 // pred_fallthru
        _
      // Predicated region
      $region25: #{tpu_custom_call.1} parent=11 // pred_check
        %p171 = pneg %p121
      $region26: #{tpu_custom_call.1} parent=11 // pred_check_branch
        %173 = sbr.rel (%p171) target = $region28
      $region27: #{tpu_custom_call.1} parent=11 // pred_region
        _
      $region28: #{tpu_custom_call.1} parent=11 // pred_fallthru
        _
    $region12: #{tpu_custom_call.1} parent=5 // pred_fallthru
      _
    %p174 = scmp.lt.s32.totalorder %s11, 2
    // Predicated region
    $region29: #{tpu_custom_call.1} parent=5 // pred_check
      %p175 = pneg %p174
    $region30: #{tpu_custom_call.1} parent=5 // pred_check_branch
      %177 = sbr.rel (%p175) target = $region32
    $region31: #{tpu_custom_call.1} parent=5 // pred_region
      // Predicated region
      $region33: #{tpu_custom_call.1} parent=31 // pred_check
        %p178 = pneg %p31
      $region34: #{tpu_custom_call.1} parent=31 // pred_check_branch
        %180 = sbr.rel (%p178) target = $region36
      $region35: #{tpu_custom_call.1} parent=31 // pred_region
        %p181 = scmp.lt.s32.totalorder %s11, 1
        %s182 = scalar_select %p181, %s11, 1
        %s183 = smul.addr %s182, 32
        %s184 = smul.addr %s183, 4
        %s185 = scalar_lea.vmem %s0, %s184
      $region36: #{tpu_custom_call.1} parent=31 // pred_fallthru
        _
    $region32: #{tpu_custom_call.1} parent=5 // pred_fallthru
      _
    %p186 = scmp.le.s32.totalorder 1, %s11
    %p187 = scmp.lt.s32.totalorder %s11, 3
    %p188 = pnand %p186, %p187
    %p189 = pneg %p188
    // Predicated region
    $region37: #{tpu_custom_call.1} parent=5 // pred_check
      _
    $region38: #{tpu_custom_call.1} parent=5 // pred_check_branch
      %191 = sbr.rel (%p188) target = $region40
    $region39: #{tpu_custom_call.1} parent=5 // pred_region
      %s192 = ssub.s32 %s11, 1
      %p193 = scmp.lt.s32.totalorder %s16, 1
      %s194 = scalar_select %p193, %s16, 1
      %s195 = smul.addr %s194, 32
      %s196 = smul.addr %s195, 4
      %s197 = scalar_lea.vmem %s0, %s196
      %p198 = pneg %p37
      %p199 = pneg %p34
      %p200 = pneg %p58
      %p201 = pneg %p55
      %p202 = pneg %p79
      %p203 = pneg %p76
      %p204 = pneg %p100
      %p205 = pneg %p97
      %p206 = pneg %p121
      %p207 = pneg %p118
      %p208 = pneg %p147
      %p209 = pneg %p144
      %p210 = scmp.lt.s32.totalorder %s16, 1
      %s211 = scalar_select %p210, %s16, 1
      %s212 = smul.addr %s211, 32
      %s213 = smul.addr %s212, 8
      %s214 = scalar_lea.vmem %s5, %s213
      %p215 = scmp.lt.s32.totalorder %s16, 1
      %s216 = scalar_select %p215, %s16, 1
      %s217 = smul.addr %s216, 32
      %s218 = smul.addr %s217, 4
      %s219 = scalar_lea.vmem %s0, %s218
      %p220 = scmp.lt.s32.totalorder %s16, 1
      %s221 = scalar_select %p220, %s16, 1
      %s222 = smul.addr %s221, 32
      %s223 = smul.addr %s222, 8
      %s224 = scalar_lea.vmem %s5, %s223
      %v226 = vld [vmem:[%s219] sm:$0xf]
      %v227 = vld [vmem:[%s219 + $0x4] sm:$0xf]
      %v228 = vld [vmem:[%s219 + $0x8] sm:$0xf]
      %v229 = vld [vmem:[%s219 + $0xc] sm:$0xf]
      %v230 = vld [vmem:[%s219 + $0x10] sm:$0xf]
      %v231 = vld [vmem:[%s219 + $0x14] sm:$0xf]
      %v232 = vld [vmem:[%s219 + $0x18] sm:$0xf]
      %v233 = vld [vmem:[%s219 + $0x1c] sm:$0xf]
      %v234 = vld [vmem:[%s219 + $0x20] sm:$0xf]
      %v235 = vld [vmem:[%s219 + $0x24] sm:$0xf]
      %v236 = vld [vmem:[%s219 + $0x28] sm:$0xf]
      %v237 = vld [vmem:[%s219 + $0x2c] sm:$0xf]
      %v238 = vld [vmem:[%s219 + $0x30] sm:$0xf]
      %v239 = vld [vmem:[%s219 + $0x34] sm:$0xf]
      %v240 = vld [vmem:[%s219 + $0x38] sm:$0xf]
      %v241 = vld [vmem:[%s219 + $0x3c] sm:$0xf]
      %v242 = vld [vmem:[%s219 + $0x40] sm:$0xf]
      %v243 = vld [vmem:[%s219 + $0x44] sm:$0xf]
      %v244 = vld [vmem:[%s219 + $0x48] sm:$0xf]
      %v245 = vld [vmem:[%s219 + $0x4c] sm:$0xf]
      %v246 = vld [vmem:[%s219 + $0x50] sm:$0xf]
      %v247 = vld [vmem:[%s219 + $0x54] sm:$0xf]
      %v248 = vld [vmem:[%s219 + $0x58] sm:$0xf]
      %v249 = vld [vmem:[%s219 + $0x5c] sm:$0xf]
      %v250 = vld [vmem:[%s219 + $0x60] sm:$0xf]
      %v251 = vld [vmem:[%s219 + $0x64] sm:$0xf]
      %v252 = vld [vmem:[%s219 + $0x68] sm:$0xf]
      %v253 = vld [vmem:[%s219 + $0x6c] sm:$0xf]
      %v254 = vld [vmem:[%s219 + $0x70] sm:$0xf]
      %v255 = vld [vmem:[%s219 + $0x74] sm:$0xf]
      %v256 = vld [vmem:[%s219 + $0x78] sm:$0xf]
      %v257 = vld [vmem:[%s219 + $0x7c] sm:$0xf]
      %v258 = vld [vmem:[%s1] sm:$0x3]
      %v259 = vld [vmem:[%s2] sm:$0x1]
      %v261 = vlaneseq
      %v262 = vshrl.u32 %v261, 7
      %v263 = vsub.s32 0, %v262
      %v264 = vrot.slane %v259, %v263
      %v298 = vunpack.c.l.b16 %v226
      %v299 = vunpack.c.l.b16 %v227
      %v300 = vunpack.c.l.b16 %v228
      %v301 = vunpack.c.l.b16 %v229
      %v302 = vunpack.c.l.b16 %v230
      %v303 = vunpack.c.l.b16 %v231
      %v304 = vunpack.c.l.b16 %v232
      %v305 = vunpack.c.l.b16 %v233
      %v306 = vunpack.c.l.b16 %v234
      %v307 = vunpack.c.l.b16 %v235
      %v308 = vunpack.c.l.b16 %v236
      %v309 = vunpack.c.l.b16 %v237
      %v310 = vunpack.c.l.b16 %v238
      %v311 = vunpack.c.l.b16 %v239
      %v312 = vunpack.c.l.b16 %v240
      %v313 = vunpack.c.l.b16 %v241
      %v314 = vunpack.c.l.b16 %v242
      %v315 = vunpack.c.l.b16 %v243
      %v316 = vunpack.c.l.b16 %v244
      %v317 = vunpack.c.l.b16 %v245
      %v318 = vunpack.c.l.b16 %v246
      %v319 = vunpack.c.l.b16 %v247
      %v320 = vunpack.c.l.b16 %v248
      %v321 = vunpack.c.l.b16 %v249
      %v322 = vunpack.c.l.b16 %v250
      %v323 = vunpack.c.l.b16 %v251
      %v324 = vunpack.c.l.b16 %v252
      %v325 = vunpack.c.l.b16 %v253
      %v326 = vunpack.c.l.b16 %v254
      %v327 = vunpack.c.l.b16 %v255
      %v328 = vunpack.c.l.b16 %v256
      %v329 = vunpack.c.l.b16 %v257
      %v330 = vpack.c.b16 %v299, %v298
      %v331 = vpack.c.b16 %v301, %v300
      %v332 = vpack.c.b16 %v303, %v302
      %v333 = vpack.c.b16 %v305, %v304
      %v334 = vpack.c.b16 %v307, %v306
      %v335 = vpack.c.b16 %v309, %v308
      %v336 = vpack.c.b16 %v311, %v310
      %v337 = vpack.c.b16 %v313, %v312
      %v338 = vpack.c.b16 %v315, %v314
      %v339 = vpack.c.b16 %v317, %v316
      %v340 = vpack.c.b16 %v319, %v318
      %v341 = vpack.c.b16 %v321, %v320
      %v342 = vpack.c.b16 %v323, %v322
      %v343 = vpack.c.b16 %v325, %v324
      %v344 = vpack.c.b16 %v327, %v326
      %v345 = vpack.c.b16 %v329, %v328
      %vm346 = vcmask 31744
      %v348 = vsel %vm346, %v330, 0
      %v351 = vsel %vm346, %v331, 0
      %v354 = vsel %vm346, %v332, 0
      %v357 = vsel %vm346, %v333, 0
      %v360 = vsel %vm346, %v334, 0
      %v363 = vsel %vm346, %v335, 0
      %v366 = vsel %vm346, %v336, 0
      %v369 = vsel %vm346, %v337, 0
      %v372 = vsel %vm346, %v338, 0
      %v375 = vsel %vm346, %v339, 0
      %v378 = vsel %vm346, %v340, 0
      %v381 = vsel %vm346, %v341, 0
      %v384 = vsel %vm346, %v342, 0
      %v387 = vsel %vm346, %v343, 0
      %v390 = vsel %vm346, %v344, 0
      %v393 = vsel %vm346, %v345, 0
      %vm395 = vcmask 1041408
      %v397 = vsel %vm395, %v258, 0
      %399 = vmatprep.subr.bf16.mxu0 0
      %400 = vmatpush1.bf16.msra.mxu0 %v397
      %401 = vmatprep.subr.bf16.mxu0 0
      %402 = vmatpush1.bf16.msra.mxu0 0
      %403 = vmatprep.subr.bf16.mxu0 0
      %404 = vmatpush1.bf16.msra.mxu0 0
      %405 = vmatprep.subr.bf16.mxu0 0
      %406 = vmatpush1.bf16.msra.mxu0 0
      %407 = vmatprep.subr.bf16.mxu0 0
      %408 = vmatpush1.bf16.msra.mxu0 0
      %409 = vmatprep.subr.bf16.mxu0 0
      %410 = vmatpush1.bf16.msra.mxu0 0
      %411 = vmatprep.subr.bf16.mxu0 0
      %412 = vmatpush1.bf16.msra.mxu0 0
      %413 = vmatprep.subr.bf16.mxu0 0
      %414 = vmatpush1.bf16.msra.mxu0 0
      %415 = vmatprep.subr.bf16.mxu0 0
      %416 = vmatpush1.bf16.msra.mxu0 0
      %417 = vmatprep.subr.bf16.mxu0 0
      %418 = vmatpush1.bf16.msra.mxu0 0
      %419 = vmatprep.subr.bf16.mxu0 0
      %420 = vmatpush1.bf16.msra.mxu0 0
      %421 = vmatprep.subr.bf16.mxu0 0
      %422 = vmatpush1.bf16.msra.mxu0 0
      %423 = vmatprep.subr.bf16.mxu0 0
      %424 = vmatpush1.bf16.msra.mxu0 0
      %425 = vmatprep.subr.bf16.mxu0 0
      %426 = vmatpush1.bf16.msra.mxu0 0
      %427 = vmatprep.subr.bf16.mxu0 0
      %428 = vmatpush1.bf16.msra.mxu0 0
      %429 = vmatprep.subr.bf16.mxu0 0
      %430 = vmatpush1.bf16.msra.mxu0 0
      %431 = vmatprep.mubr.bf16.mxu0 0
      %432 = vmatmul.mubr.bf16.gmra.mrb[0].mxu0 %v348
      %v433 = vpop.f32.mrb[0].mxu0
      %v434 = vadd.f32 %v264, %v433
      %v435 = vpop.f32.mrb[0].mxu0
      %v436 = vpop.f32.mrb[0].mxu0
      %v437 = vadd.f32 %v264, %v436
      %v438 = vpop.f32.mrb[0].mxu0
      %439 = vmatprep.mubr.bf16.mxu0 0
      %440 = vmatmul.mubr.bf16.gmra.mrb[0].mxu0 %v351
      %v441 = vpop.f32.mrb[0].mxu0
      %v442 = vadd.f32 %v264, %v441
      %v443 = vpop.f32.mrb[0].mxu0
      %v444 = vpop.f32.mrb[0].mxu0
      %v445 = vadd.f32 %v264, %v444
      %v446 = vpop.f32.mrb[0].mxu0
      %447 = vmatprep.mubr.bf16.mxu0 0
      %448 = vmatmul.mubr.bf16.gmra.mrb[0].mxu0 %v354
      %v449 = vpop.f32.mrb[0].mxu0
      %v450 = vadd.f32 %v264, %v449
      %v451 = vpop.f32.mrb[0].mxu0
      %v452 = vpop.f32.mrb[0].mxu0
      %v453 = vadd.f32 %v264, %v452
      %v454 = vpop.f32.mrb[0].mxu0
      %455 = vmatprep.mubr.bf16.mxu0 0
      %456 = vmatmul.mubr.bf16.gmra.mrb[0].mxu0 %v357
      %v457 = vpop.f32.mrb[0].mxu0
      %v458 = vadd.f32 %v264, %v457
      %v459 = vpop.f32.mrb[0].mxu0
      %v460 = vpop.f32.mrb[0].mxu0
      %v461 = vadd.f32 %v264, %v460
      %v462 = vpop.f32.mrb[0].mxu0
      %463 = vmatprep.mubr.bf16.mxu0 0
      %464 = vmatmul.mubr.bf16.gmra.mrb[0].mxu0 %v360
      %v465 = vpop.f32.mrb[0].mxu0
      %v466 = vadd.f32 %v264, %v465
      %v467 = vpop.f32.mrb[0].mxu0
      %v468 = vpop.f32.mrb[0].mxu0
      %v469 = vadd.f32 %v264, %v468
      %v470 = vpop.f32.mrb[0].mxu0
      %471 = vmatprep.mubr.bf16.mxu0 0
      %472 = vmatmul.mubr.bf16.gmra.mrb[0].mxu0 %v363
      %v473 = vpop.f32.mrb[0].mxu0
      %v474 = vadd.f32 %v264, %v473
      %v475 = vpop.f32.mrb[0].mxu0
      %v476 = vpop.f32.mrb[0].mxu0
      %v477 = vadd.f32 %v264, %v476
      %v478 = vpop.f32.mrb[0].mxu0
      %479 = vmatprep.mubr.bf16.mxu0 0
      %480 = vmatmul.mubr.bf16.gmra.mrb[0].mxu0 %v366
      %v481 = vpop.f32.mrb[0].mxu0
      %v482 = vadd.f32 %v264, %v481
      %v483 = vpop.f32.mrb[0].mxu0
      %v484 = vpop.f32.mrb[0].mxu0
      %v485 = vadd.f32 %v264, %v484
      %v486 = vpop.f32.mrb[0].mxu0
      %487 = vmatprep.mubr.bf16.mxu0 0
      %488 = vmatmul.mubr.bf16.gmra.mrb[0].mxu0 %v369
      %v489 = vpop.f32.mrb[0].mxu0
      %v490 = vadd.f32 %v264, %v489
      %v491 = vpop.f32.mrb[0].mxu0
      %v492 = vpop.f32.mrb[0].mxu0
      %v493 = vadd.f32 %v264, %v492
      %v494 = vpop.f32.mrb[0].mxu0
      %495 = vmatprep.mubr.bf16.mxu0 0
      %496 = vmatmul.mubr.bf16.gmra.mrb[0].mxu0 %v372
      %v497 = vpop.f32.mrb[0].mxu0
      %v498 = vadd.f32 %v264, %v497
      %v499 = vpop.f32.mrb[0].mxu0
      %v500 = vpop.f32.mrb[0].mxu0
      %v501 = vadd.f32 %v264, %v500
      %v502 = vpop.f32.mrb[0].mxu0
      %503 = vmatprep.mubr.bf16.mxu0 0
      %504 = vmatmul.mubr.bf16.gmra.mrb[0].mxu0 %v375
      %v505 = vpop.f32.mrb[0].mxu0
      %v506 = vadd.f32 %v264, %v505
      %v507 = vpop.f32.mrb[0].mxu0
      %v508 = vpop.f32.mrb[0].mxu0
      %v509 = vadd.f32 %v264, %v508
      %v510 = vpop.f32.mrb[0].mxu0
      %511 = vmatprep.mubr.bf16.mxu0 0
      %512 = vmatmul.mubr.bf16.gmra.mrb[0].mxu0 %v378
      %v513 = vpop.f32.mrb[0].mxu0
      %v514 = vadd.f32 %v264, %v513
      %v515 = vpop.f32.mrb[0].mxu0
      %v516 = vpop.f32.mrb[0].mxu0
      %v517 = vadd.f32 %v264, %v516
      %v518 = vpop.f32.mrb[0].mxu0
      %519 = vmatprep.mubr.bf16.mxu0 0
      %520 = vmatmul.mubr.bf16.gmra.mrb[0].mxu0 %v381
      %v521 = vpop.f32.mrb[0].mxu0
      %v522 = vadd.f32 %v264, %v521
      %v523 = vpop.f32.mrb[0].mxu0
      %v524 = vpop.f32.mrb[0].mxu0
      %v525 = vadd.f32 %v264, %v524
      %v526 = vpop.f32.mrb[0].mxu0
      %527 = vmatprep.mubr.bf16.mxu0 0
      %528 = vmatmul.mubr.bf16.gmra.mrb[0].mxu0 %v384
      %v529 = vpop.f32.mrb[0].mxu0
      %v530 = vadd.f32 %v264, %v529
      %v531 = vpop.f32.mrb[0].mxu0
      %v532 = vpop.f32.mrb[0].mxu0
      %v533 = vadd.f32 %v264, %v532
      %v534 = vpop.f32.mrb[0].mxu0
      %535 = vmatprep.mubr.bf16.mxu0 0
      %536 = vmatmul.mubr.bf16.gmra.mrb[0].mxu0 %v387
      %v537 = vpop.f32.mrb[0].mxu0
      %v538 = vadd.f32 %v264, %v537
      %v539 = vpop.f32.mrb[0].mxu0
      %v540 = vpop.f32.mrb[0].mxu0
      %v541 = vadd.f32 %v264, %v540
      %v542 = vpop.f32.mrb[0].mxu0
      %543 = vmatprep.mubr.bf16.mxu0 0
      %544 = vmatmul.mubr.bf16.gmra.mrb[0].mxu0 %v390
      %v545 = vpop.f32.mrb[0].mxu0
      %v546 = vadd.f32 %v264, %v545
      %v547 = vpop.f32.mrb[0].mxu0
      %v548 = vpop.f32.mrb[0].mxu0
      %v549 = vadd.f32 %v264, %v548
      %v550 = vpop.f32.mrb[0].mxu0
      %551 = vmatprep.mubr.bf16.mxu0 0
      %552 = vmatmul.mubr.bf16.gmra.mrb[0].mxu0 %v393
      %v553 = vpop.f32.mrb[0].mxu0
      %v554 = vadd.f32 %v264, %v553
      %v555 = vpop.f32.mrb[0].mxu0
      %v556 = vpop.f32.mrb[0].mxu0
      %v557 = vadd.f32 %v264, %v556
      %v558 = vpop.f32.mrb[0].mxu0
      %559 = vdwg.mxu0
      %v560 = vmax.f32 %v434, 0.0
      %v561 = vmax.f32 %v437, 0.0
      %v562 = vmax.f32 %v442, 0.0
      %v563 = vmax.f32 %v445, 0.0
      %v564 = vmax.f32 %v450, 0.0
      %v565 = vmax.f32 %v453, 0.0
      %v566 = vmax.f32 %v458, 0.0
      %v567 = vmax.f32 %v461, 0.0
      %v568 = vmax.f32 %v466, 0.0
      %v569 = vmax.f32 %v469, 0.0
      %v570 = vmax.f32 %v474, 0.0
      %v571 = vmax.f32 %v477, 0.0
      %v572 = vmax.f32 %v482, 0.0
      %v573 = vmax.f32 %v485, 0.0
      %v574 = vmax.f32 %v490, 0.0
      %v575 = vmax.f32 %v493, 0.0
      %v576 = vmax.f32 %v498, 0.0
      %v577 = vmax.f32 %v501, 0.0
      %v578 = vmax.f32 %v506, 0.0
      %v579 = vmax.f32 %v509, 0.0
      %v580 = vmax.f32 %v514, 0.0
      %v581 = vmax.f32 %v517, 0.0
      %v582 = vmax.f32 %v522, 0.0
      %v583 = vmax.f32 %v525, 0.0
      %v584 = vmax.f32 %v530, 0.0
      %v585 = vmax.f32 %v533, 0.0
      %v586 = vmax.f32 %v538, 0.0
      %v587 = vmax.f32 %v541, 0.0
      %v588 = vmax.f32 %v546, 0.0
      %v589 = vmax.f32 %v549, 0.0
      %v590 = vmax.f32 %v554, 0.0
      %v591 = vmax.f32 %v557, 0.0
      %v592 = vlaneseq
      %v593 = vshrl.u32 %v592, 7
      %v594 = vadd.s32 %v593, 8
      %v595 = vpack.c.bf16 %v561, %v560
      %v596 = vpack.c.bf16 %v563, %v562
      %v597 = vpack.c.bf16 %v565, %v564
      %v598 = vpack.c.bf16 %v567, %v566
      %v599 = vpack.c.bf16 %v569, %v568
      %v600 = vpack.c.bf16 %v571, %v570
      %v601 = vpack.c.bf16 %v573, %v572
      %v602 = vpack.c.bf16 %v575, %v574
      %v603 = vpack.c.bf16 %v577, %v576
      %v604 = vpack.c.bf16 %v579, %v578
      %v605 = vpack.c.bf16 %v581, %v580
      %v606 = vpack.c.bf16 %v583, %v582
      %v607 = vpack.c.bf16 %v585, %v584
      %v608 = vpack.c.bf16 %v587, %v586
      %v609 = vpack.c.bf16 %v589, %v588
      %v610 = vpack.c.bf16 %v591, %v590
      %vm611 = vcmp.ge.s32.totalorder %v593, 1
      %vm612 = vcmp.ge.s32.totalorder %v594, 1
      %v613 = vrot.slane %v560, 7
      %v614 = vrot.slane %v562, 7
      %v615 = vrot.slane %v564, 7
      %v616 = vrot.slane %v566, 7
      %v617 = vrot.slane %v568, 7
      %v618 = vrot.slane %v570, 7
      %v619 = vrot.slane %v572, 7
      %v620 = vrot.slane %v574, 7
      %v621 = vrot.slane %v576, 7
      %v622 = vrot.slane %v578, 7
      %v623 = vrot.slane %v580, 7
      %v624 = vrot.slane %v582, 7
      %v625 = vrot.slane %v584, 7
      %v626 = vrot.slane %v586, 7
      %v627 = vrot.slane %v588, 7
      %v628 = vrot.slane %v590, 7
      %v629 = vrot.slane %v561, 7
      %v630 = vrot.slane %v563, 7
      %v631 = vrot.slane %v565, 7
      %v632 = vrot.slane %v567, 7
      %v633 = vrot.slane %v569, 7
      %v634 = vrot.slane %v571, 7
      %v635 = vrot.slane %v573, 7
      %v636 = vrot.slane %v575, 7
      %v637 = vrot.slane %v577, 7
      %v638 = vrot.slane %v579, 7
      %v639 = vrot.slane %v581, 7
      %v640 = vrot.slane %v583, 7
      %v641 = vrot.slane %v585, 7
      %v642 = vrot.slane %v587, 7
      %v643 = vrot.slane %v589, 7
      %v644 = vrot.slane %v591, 7
      %vm645 = vcmp.lt.s32.totalorder %v593, 1
      %v646 = vsel %vm645, %v613, %v629
      %v647 = vsel %vm645, %v614, %v630
      %v648 = vsel %vm645, %v615, %v631
      %v649 = vsel %vm645, %v616, %v632
      %v650 = vsel %vm645, %v617, %v633
      %v651 = vsel %vm645, %v618, %v634
      %v652 = vsel %vm645, %v619, %v635
      %v653 = vsel %vm645, %v620, %v636
      %v654 = vsel %vm645, %v621, %v637
      %v655 = vsel %vm645, %v622, %v638
      %v656 = vsel %vm645, %v623, %v639
      %v657 = vsel %vm645, %v624, %v640
      %v658 = vsel %vm645, %v625, %v641
      %v659 = vsel %vm645, %v626, %v642
      %v660 = vsel %vm645, %v627, %v643
      %v661 = vsel %vm645, %v628, %v644
      %v662 = vsel %vm645, %v629, %v613
      %v663 = vsel %vm645, %v630, %v614
      %v664 = vsel %vm645, %v631, %v615
      %v665 = vsel %vm645, %v632, %v616
      %v666 = vsel %vm645, %v633, %v617
      %v667 = vsel %vm645, %v634, %v618
      %v668 = vsel %vm645, %v635, %v619
      %v669 = vsel %vm645, %v636, %v620
      %v670 = vsel %vm645, %v637, %v621
      %v671 = vsel %vm645, %v638, %v622
      %v672 = vsel %vm645, %v639, %v623
      %v673 = vsel %vm645, %v640, %v624
      %v674 = vsel %vm645, %v641, %v625
      %v675 = vsel %vm645, %v642, %v626
      %v676 = vsel %vm645, %v643, %v627
      %v677 = vsel %vm645, %v644, %v628
      %v678 = vsel %vm611, 1, 0
      %v679 = vsel %vm612, 1, 0
      %vm680 = vcmp.eq.s32.totalorder %v678, 1
      %vm681 = vcmp.eq.s32.totalorder %v679, 1
      %v682 = vsel %vm680, %v662, 0.0
      %v683 = vsel %vm681, %v646, 0.0
      %v684 = vsel %vm680, %v663, 0.0
      %v685 = vsel %vm681, %v647, 0.0
      %v686 = vsel %vm680, %v664, 0.0
      %v687 = vsel %vm681, %v648, 0.0
      %v688 = vsel %vm680, %v665, 0.0
      %v689 = vsel %vm681, %v649, 0.0
      %v690 = vsel %vm680, %v666, 0.0
      %v691 = vsel %vm681, %v650, 0.0
      %v692 = vsel %vm680, %v667, 0.0
      %v693 = vsel %vm681, %v651, 0.0
      %v694 = vsel %vm680, %v668, 0.0
      %v695 = vsel %vm681, %v652, 0.0
      %v696 = vsel %vm680, %v669, 0.0
      %v697 = vsel %vm681, %v653, 0.0
      %v698 = vsel %vm680, %v670, 0.0
      %v699 = vsel %vm681, %v654, 0.0
      %v700 = vsel %vm680, %v671, 0.0
      %v701 = vsel %vm681, %v655, 0.0
      %v702 = vsel %vm680, %v672, 0.0
      %v703 = vsel %vm681, %v656, 0.0
      %v704 = vsel %vm680, %v673, 0.0
      %v705 = vsel %vm681, %v657, 0.0
      %v706 = vsel %vm680, %v674, 0.0
      %v707 = vsel %vm681, %v658, 0.0
      %v708 = vsel %vm680, %v675, 0.0
      %v709 = vsel %vm681, %v659, 0.0
      %v710 = vsel %vm680, %v676, 0.0
      %v711 = vsel %vm681, %v660, 0.0
      %v712 = vsel %vm680, %v677, 0.0
      %v713 = vsel %vm681, %v661, 0.0
      %v714 = vpack.c.bf16 %v683, %v682
      %v715 = vpack.c.bf16 %v685, %v684
      %v716 = vpack.c.bf16 %v687, %v686
      %v717 = vpack.c.bf16 %v689, %v688
      %v718 = vpack.c.bf16 %v691, %v690
      %v719 = vpack.c.bf16 %v693, %v692
      %v720 = vpack.c.bf16 %v695, %v694
      %v721 = vpack.c.bf16 %v697, %v696
      %v722 = vpack.c.bf16 %v699, %v698
      %v723 = vpack.c.bf16 %v701, %v700
      %v724 = vpack.c.bf16 %v703, %v702
      %v725 = vpack.c.bf16 %v705, %v704
      %v726 = vpack.c.bf16 %v707, %v706
      %v727 = vpack.c.bf16 %v709, %v708
      %v728 = vpack.c.bf16 %v711, %v710
      %v729 = vpack.c.bf16 %v713, %v712
      %vm730 = vcmp.lt.s32.totalorder %v593, 15
      %vm731 = vcmp.lt.s32.totalorder %v594, 15
      %v732 = vrot.slane %v560, 1
      %v733 = vrot.slane %v562, 1
      %v734 = vrot.slane %v564, 1
      %v735 = vrot.slane %v566, 1
      %v736 = vrot.slane %v568, 1
      %v737 = vrot.slane %v570, 1
      %v738 = vrot.slane %v572, 1
      %v739 = vrot.slane %v574, 1
      %v740 = vrot.slane %v576, 1
      %v741 = vrot.slane %v578, 1
      %v742 = vrot.slane %v580, 1
      %v743 = vrot.slane %v582, 1
      %v744 = vrot.slane %v584, 1
      %v745 = vrot.slane %v586, 1
      %v746 = vrot.slane %v588, 1
      %v747 = vrot.slane %v590, 1
      %v748 = vrot.slane %v561, 1
      %v749 = vrot.slane %v563, 1
      %v750 = vrot.slane %v565, 1
      %v751 = vrot.slane %v567, 1
      %v752 = vrot.slane %v569, 1
      %v753 = vrot.slane %v571, 1
      %v754 = vrot.slane %v573, 1
      %v755 = vrot.slane %v575, 1
      %v756 = vrot.slane %v577, 1
      %v757 = vrot.slane %v579, 1
      %v758 = vrot.slane %v581, 1
      %v759 = vrot.slane %v583, 1
      %v760 = vrot.slane %v585, 1
      %v761 = vrot.slane %v587, 1
      %v762 = vrot.slane %v589, 1
      %v763 = vrot.slane %v591, 1
      %vm764 = vcmp.lt.s32.totalorder %v593, 7
      %v765 = vsel %vm764, %v732, %v748
      %v766 = vsel %vm764, %v733, %v749
      %v767 = vsel %vm764, %v734, %v750
      %v768 = vsel %vm764, %v735, %v751
      %v769 = vsel %vm764, %v736, %v752
      %v770 = vsel %vm764, %v737, %v753
      %v771 = vsel %vm764, %v738, %v754
      %v772 = vsel %vm764, %v739, %v755
      %v773 = vsel %vm764, %v740, %v756
      %v774 = vsel %vm764, %v741, %v757
      %v775 = vsel %vm764, %v742, %v758
      %v776 = vsel %vm764, %v743, %v759
      %v777 = vsel %vm764, %v744, %v760
      %v778 = vsel %vm764, %v745, %v761
      %v779 = vsel %vm764, %v746, %v762
      %v780 = vsel %vm764, %v747, %v763
      %v781 = vsel %vm764, %v748, %v732
      %v782 = vsel %vm764, %v749, %v733
      %v783 = vsel %vm764, %v750, %v734
      %v784 = vsel %vm764, %v751, %v735
      %v785 = vsel %vm764, %v752, %v736
      %v786 = vsel %vm764, %v753, %v737
      %v787 = vsel %vm764, %v754, %v738
      %v788 = vsel %vm764, %v755, %v739
      %v789 = vsel %vm764, %v756, %v740
      %v790 = vsel %vm764, %v757, %v741
      %v791 = vsel %vm764, %v758, %v742
      %v792 = vsel %vm764, %v759, %v743
      %v793 = vsel %vm764, %v760, %v744
      %v794 = vsel %vm764, %v761, %v745
      %v795 = vsel %vm764, %v762, %v746
      %v796 = vsel %vm764, %v763, %v747
      %v797 = vsel %vm730, 1, 0
      %v798 = vsel %vm731, 1, 0
      %vm799 = vcmp.eq.s32.totalorder %v797, 1
      %vm800 = vcmp.eq.s32.totalorder %v798, 1
      %v801 = vsel %vm799, %v765, 0.0
      %v802 = vsel %vm800, %v781, 0.0
      %v803 = vsel %vm799, %v766, 0.0
      %v804 = vsel %vm800, %v782, 0.0
      %v805 = vsel %vm799, %v767, 0.0
      %v806 = vsel %vm800, %v783, 0.0
      %v807 = vsel %vm799, %v768, 0.0
      %v808 = vsel %vm800, %v784, 0.0
      %v809 = vsel %vm799, %v769, 0.0
      %v810 = vsel %vm800, %v785, 0.0
      %v811 = vsel %vm799, %v770, 0.0
      %v812 = vsel %vm800, %v786, 0.0
      %v813 = vsel %vm799, %v771, 0.0
      %v814 = vsel %vm800, %v787, 0.0
      %v815 = vsel %vm799, %v772, 0.0
      %v816 = vsel %vm800, %v788, 0.0
      %v817 = vsel %vm799, %v773, 0.0
      %v818 = vsel %vm800, %v789, 0.0
      %v819 = vsel %vm799, %v774, 0.0
      %v820 = vsel %vm800, %v790, 0.0
      %v821 = vsel %vm799, %v775, 0.0
      %v822 = vsel %vm800, %v791, 0.0
      %v823 = vsel %vm799, %v776, 0.0
      %v824 = vsel %vm800, %v792, 0.0
      %v825 = vsel %vm799, %v777, 0.0
      %v826 = vsel %vm800, %v793, 0.0
      %v827 = vsel %vm799, %v778, 0.0
      %v828 = vsel %vm800, %v794, 0.0
      %v829 = vsel %vm799, %v779, 0.0
      %v830 = vsel %vm800, %v795, 0.0
      %v831 = vsel %vm799, %v780, 0.0
      %v832 = vsel %vm800, %v796, 0.0
      %v833 = vpack.c.bf16 %v802, %v801
      %v834 = vpack.c.bf16 %v804, %v803
      %v835 = vpack.c.bf16 %v806, %v805
      %v836 = vpack.c.bf16 %v808, %v807
      %v837 = vpack.c.bf16 %v810, %v809
      %v838 = vpack.c.bf16 %v812, %v811
      %v839 = vpack.c.bf16 %v814, %v813
      %v840 = vpack.c.bf16 %v816, %v815
      %v841 = vpack.c.bf16 %v818, %v817
      %v842 = vpack.c.bf16 %v820, %v819
      %v843 = vpack.c.bf16 %v822, %v821
      %v844 = vpack.c.bf16 %v824, %v823
      %v845 = vpack.c.bf16 %v826, %v825
      %v846 = vpack.c.bf16 %v828, %v827
      %v847 = vpack.c.bf16 %v830, %v829
      %v848 = vpack.c.bf16 %v832, %v831
      %v849 = vld [vmem:[%s3] sm:$0xf]
      %v850 = vld [vmem:[%s3 + $0x4] sm:$0xf]
      %v851 = vld [vmem:[%s3 + $0x8] sm:$0x1]
      %v852 = vld [vmem:[%s4] sm:$0x1]
      %869 = vrot.lane.b32.xlu0 0, 2
      %v870 = vpop.permute.xlu0 %869
      %871 = vrot.lane.b32.xlu0 %v595, 2
      %v872 = vpop.permute.xlu0 %871
      %873 = vrot.lane.b32.xlu0 %v596, 2
      %v874 = vpop.permute.xlu0 %873
      %875 = vrot.lane.b32.xlu0 %v597, 2
      %v876 = vpop.permute.xlu0 %875
      %877 = vrot.lane.b32.xlu0 %v598, 2
      %v878 = vpop.permute.xlu0 %877
      %879 = vrot.lane.b32.xlu0 %v599, 2
      %v880 = vpop.permute.xlu0 %879
      %881 = vrot.lane.b32.xlu0 %v600, 2
      %v882 = vpop.permute.xlu0 %881
      %883 = vrot.lane.b32.xlu0 %v601, 2
      %v884 = vpop.permute.xlu0 %883
      %885 = vrot.lane.b32.xlu0 %v602, 2
      %v886 = vpop.permute.xlu0 %885
      %887 = vrot.lane.b32.xlu0 %v603, 2
      %v888 = vpop.permute.xlu0 %887
      %889 = vrot.lane.b32.xlu0 %v604, 2
      %v890 = vpop.permute.xlu0 %889
      %891 = vrot.lane.b32.xlu0 %v605, 2
      %v892 = vpop.permute.xlu0 %891
      %893 = vrot.lane.b32.xlu0 %v606, 2
      %v894 = vpop.permute.xlu0 %893
      %895 = vrot.lane.b32.xlu0 %v607, 2
      %v896 = vpop.permute.xlu0 %895
      %897 = vrot.lane.b32.xlu0 %v608, 2
      %v898 = vpop.permute.xlu0 %897
      %899 = vrot.lane.b32.xlu0 %v609, 2
      %v900 = vpop.permute.xlu0 %899
      %916 = vrot.lane.b32.xlu0 0, 4
      %v917 = vpop.permute.xlu0 %916
      %918 = vrot.lane.b32.xlu0 %v833, 4
      %v919 = vpop.permute.xlu0 %918
      %920 = vrot.lane.b32.xlu0 %v834, 4
      %v921 = vpop.permute.xlu0 %920
      %922 = vrot.lane.b32.xlu0 %v835, 4
      %v923 = vpop.permute.xlu0 %922
      %924 = vrot.lane.b32.xlu0 %v836, 4
      %v925 = vpop.permute.xlu0 %924
      %926 = vrot.lane.b32.xlu0 %v837, 4
      %v927 = vpop.permute.xlu0 %926
      %928 = vrot.lane.b32.xlu0 %v838, 4
      %v929 = vpop.permute.xlu0 %928
      %930 = vrot.lane.b32.xlu0 %v839, 4
      %v931 = vpop.permute.xlu0 %930
      %932 = vrot.lane.b32.xlu0 %v840, 4
      %v933 = vpop.permute.xlu0 %932
      %934 = vrot.lane.b32.xlu0 %v841, 4
      %v935 = vpop.permute.xlu0 %934
      %936 = vrot.lane.b32.xlu0 %v842, 4
      %v937 = vpop.permute.xlu0 %936
      %938 = vrot.lane.b32.xlu0 %v843, 4
      %v939 = vpop.permute.xlu0 %938
      %940 = vrot.lane.b32.xlu0 %v844, 4
      %v941 = vpop.permute.xlu0 %940
      %942 = vrot.lane.b32.xlu0 %v845, 4
      %v943 = vpop.permute.xlu0 %942
      %944 = vrot.lane.b32.xlu0 %v846, 4
      %v945 = vpop.permute.xlu0 %944
      %946 = vrot.lane.b32.xlu0 %v847, 4
      %v947 = vpop.permute.xlu0 %946
      %964 = vrot.lane.b32.xlu0 %v714, 6
      %v965 = vpop.permute.xlu0 %964
      %966 = vrot.lane.b32.xlu0 %v715, 6
      %v967 = vpop.permute.xlu0 %966
      %968 = vrot.lane.b32.xlu0 %v716, 6
      %v969 = vpop.permute.xlu0 %968
      %970 = vrot.lane.b32.xlu0 %v717, 6
      %v971 = vpop.permute.xlu0 %970
      %972 = vrot.lane.b32.xlu0 %v718, 6
      %v973 = vpop.permute.xlu0 %972
      %974 = vrot.lane.b32.xlu0 %v719, 6
      %v975 = vpop.permute.xlu0 %974
      %976 = vrot.lane.b32.xlu0 %v720, 6
      %v977 = vpop.permute.xlu0 %976
      %978 = vrot.lane.b32.xlu0 %v721, 6
      %v979 = vpop.permute.xlu0 %978
      %980 = vrot.lane.b32.xlu0 %v722, 6
      %v981 = vpop.permute.xlu0 %980
      %982 = vrot.lane.b32.xlu0 %v723, 6
      %v983 = vpop.permute.xlu0 %982
      %984 = vrot.lane.b32.xlu0 %v724, 6
      %v985 = vpop.permute.xlu0 %984
      %986 = vrot.lane.b32.xlu0 %v725, 6
      %v987 = vpop.permute.xlu0 %986
      %988 = vrot.lane.b32.xlu0 %v726, 6
      %v989 = vpop.permute.xlu0 %988
      %990 = vrot.lane.b32.xlu0 %v727, 6
      %v991 = vpop.permute.xlu0 %990
      %992 = vrot.lane.b32.xlu0 %v728, 6
      %v993 = vpop.permute.xlu0 %992
      %994 = vrot.lane.b32.xlu0 %v729, 6
      %v995 = vpop.permute.xlu0 %994
      %997 = vrot.lane.b32.xlu0 %v595, 8
      %v998 = vpop.permute.xlu0 %997
      %999 = vrot.lane.b32.xlu0 %v596, 8
      %v1000 = vpop.permute.xlu0 %999
      %1001 = vrot.lane.b32.xlu0 %v597, 8
      %v1002 = vpop.permute.xlu0 %1001
      %1003 = vrot.lane.b32.xlu0 %v598, 8
      %v1004 = vpop.permute.xlu0 %1003
      %1005 = vrot.lane.b32.xlu0 %v599, 8
      %v1006 = vpop.permute.xlu0 %1005
      %1007 = vrot.lane.b32.xlu0 %v600, 8
      %v1008 = vpop.permute.xlu0 %1007
      %1009 = vrot.lane.b32.xlu0 %v601, 8
      %v1010 = vpop.permute.xlu0 %1009
      %1011 = vrot.lane.b32.xlu0 %v602, 8
      %v1012 = vpop.permute.xlu0 %1011
      %1013 = vrot.lane.b32.xlu0 %v603, 8
      %v1014 = vpop.permute.xlu0 %1013
      %1015 = vrot.lane.b32.xlu0 %v604, 8
      %v1016 = vpop.permute.xlu0 %1015
      %1017 = vrot.lane.b32.xlu0 %v605, 8
      %v1018 = vpop.permute.xlu0 %1017
      %1019 = vrot.lane.b32.xlu0 %v606, 8
      %v1020 = vpop.permute.xlu0 %1019
      %1021 = vrot.lane.b32.xlu0 %v607, 8
      %v1022 = vpop.permute.xlu0 %1021
      %1023 = vrot.lane.b32.xlu0 %v608, 8
      %v1024 = vpop.permute.xlu0 %1023
      %1025 = vrot.lane.b32.xlu0 %v609, 8
      %v1026 = vpop.permute.xlu0 %1025
      %1027 = vrot.lane.b32.xlu0 %v610, 8
      %v1028 = vpop.permute.xlu0 %1027
      %1030 = vrot.lane.b32.xlu0 %v833, 10
      %v1031 = vpop.permute.xlu0 %1030
      %1032 = vrot.lane.b32.xlu0 %v834, 10
      %v1033 = vpop.permute.xlu0 %1032
      %1034 = vrot.lane.b32.xlu0 %v835, 10
      %v1035 = vpop.permute.xlu0 %1034
      %1036 = vrot.lane.b32.xlu0 %v836, 10
      %v1037 = vpop.permute.xlu0 %1036
      %1038 = vrot.lane.b32.xlu0 %v837, 10
      %v1039 = vpop.permute.xlu0 %1038
      %1040 = vrot.lane.b32.xlu0 %v838, 10
      %v1041 = vpop.permute.xlu0 %1040
      %1042 = vrot.lane.b32.xlu0 %v839, 10
      %v1043 = vpop.permute.xlu0 %1042
      %1044 = vrot.lane.b32.xlu0 %v840, 10
      %v1045 = vpop.permute.xlu0 %1044
      %1046 = vrot.lane.b32.xlu0 %v841, 10
      %v1047 = vpop.permute.xlu0 %1046
      %1048 = vrot.lane.b32.xlu0 %v842, 10
      %v1049 = vpop.permute.xlu0 %1048
      %1050 = vrot.lane.b32.xlu0 %v843, 10
      %v1051 = vpop.permute.xlu0 %1050
      %1052 = vrot.lane.b32.xlu0 %v844, 10
      %v1053 = vpop.permute.xlu0 %1052
      %1054 = vrot.lane.b32.xlu0 %v845, 10
      %v1055 = vpop.permute.xlu0 %1054
      %1056 = vrot.lane.b32.xlu0 %v846, 10
      %v1057 = vpop.permute.xlu0 %1056
      %1058 = vrot.lane.b32.xlu0 %v847, 10
      %v1059 = vpop.permute.xlu0 %1058
      %1060 = vrot.lane.b32.xlu0 %v848, 10
      %v1061 = vpop.permute.xlu0 %1060
      %1062 = vrot.lane.b32.xlu0 %v715, 12
      %v1063 = vpop.permute.xlu0 %1062
      %1064 = vrot.lane.b32.xlu0 %v716, 12
      %v1065 = vpop.permute.xlu0 %1064
      %1066 = vrot.lane.b32.xlu0 %v717, 12
      %v1067 = vpop.permute.xlu0 %1066
      %1068 = vrot.lane.b32.xlu0 %v718, 12
      %v1069 = vpop.permute.xlu0 %1068
      %1070 = vrot.lane.b32.xlu0 %v719, 12
      %v1071 = vpop.permute.xlu0 %1070
      %1072 = vrot.lane.b32.xlu0 %v720, 12
      %v1073 = vpop.permute.xlu0 %1072
      %1074 = vrot.lane.b32.xlu0 %v721, 12
      %v1075 = vpop.permute.xlu0 %1074
      %1076 = vrot.lane.b32.xlu0 %v722, 12
      %v1077 = vpop.permute.xlu0 %1076
      %1078 = vrot.lane.b32.xlu0 %v723, 12
      %v1079 = vpop.permute.xlu0 %1078
      %1080 = vrot.lane.b32.xlu0 %v724, 12
      %v1081 = vpop.permute.xlu0 %1080
      %1082 = vrot.lane.b32.xlu0 %v725, 12
      %v1083 = vpop.permute.xlu0 %1082
      %1084 = vrot.lane.b32.xlu0 %v726, 12
      %v1085 = vpop.permute.xlu0 %1084
      %1086 = vrot.lane.b32.xlu0 %v727, 12
      %v1087 = vpop.permute.xlu0 %1086
      %1088 = vrot.lane.b32.xlu0 %v728, 12
      %v1089 = vpop.permute.xlu0 %1088
      %1090 = vrot.lane.b32.xlu0 %v729, 12
      %v1091 = vpop.permute.xlu0 %1090
      %1092 = vrot.lane.b32.xlu0 0, 12
      %v1093 = vpop.permute.xlu0 %1092
      %1094 = vrot.lane.b32.xlu0 %v596, 14
      %v1095 = vpop.permute.xlu0 %1094
      %1096 = vrot.lane.b32.xlu0 %v597, 14
      %v1097 = vpop.permute.xlu0 %1096
      %1098 = vrot.lane.b32.xlu0 %v598, 14
      %v1099 = vpop.permute.xlu0 %1098
      %1100 = vrot.lane.b32.xlu0 %v599, 14
      %v1101 = vpop.permute.xlu0 %1100
      %1102 = vrot.lane.b32.xlu0 %v600, 14
      %v1103 = vpop.permute.xlu0 %1102
      %1104 = vrot.lane.b32.xlu0 %v601, 14
      %v1105 = vpop.permute.xlu0 %1104
      %1106 = vrot.lane.b32.xlu0 %v602, 14
      %v1107 = vpop.permute.xlu0 %1106
      %1108 = vrot.lane.b32.xlu0 %v603, 14
      %v1109 = vpop.permute.xlu0 %1108
      %1110 = vrot.lane.b32.xlu0 %v604, 14
      %v1111 = vpop.permute.xlu0 %1110
      %1112 = vrot.lane.b32.xlu0 %v605, 14
      %v1113 = vpop.permute.xlu0 %1112
      %1114 = vrot.lane.b32.xlu0 %v606, 14
      %v1115 = vpop.permute.xlu0 %1114
      %1116 = vrot.lane.b32.xlu0 %v607, 14
      %v1117 = vpop.permute.xlu0 %1116
      %1118 = vrot.lane.b32.xlu0 %v608, 14
      %v1119 = vpop.permute.xlu0 %1118
      %1120 = vrot.lane.b32.xlu0 %v609, 14
      %v1121 = vpop.permute.xlu0 %1120
      %1122 = vrot.lane.b32.xlu0 %v610, 14
      %v1123 = vpop.permute.xlu0 %1122
      %1124 = vrot.lane.b32.xlu0 0, 14
      %v1125 = vpop.permute.xlu0 %1124
      %1126 = vrot.lane.b32.xlu0 %v834, 16
      %v1127 = vpop.permute.xlu0 %1126
      %1128 = vrot.lane.b32.xlu0 %v835, 16
      %v1129 = vpop.permute.xlu0 %1128
      %1130 = vrot.lane.b32.xlu0 %v836, 16
      %v1131 = vpop.permute.xlu0 %1130
      %1132 = vrot.lane.b32.xlu0 %v837, 16
      %v1133 = vpop.permute.xlu0 %1132
      %1134 = vrot.lane.b32.xlu0 %v838, 16
      %v1135 = vpop.permute.xlu0 %1134
      %1136 = vrot.lane.b32.xlu0 %v839, 16
      %v1137 = vpop.permute.xlu0 %1136
      %1138 = vrot.lane.b32.xlu0 %v840, 16
      %v1139 = vpop.permute.xlu0 %1138
      %1140 = vrot.lane.b32.xlu0 %v841, 16
      %v1141 = vpop.permute.xlu0 %1140
      %1142 = vrot.lane.b32.xlu0 %v842, 16
      %v1143 = vpop.permute.xlu0 %1142
      %1144 = vrot.lane.b32.xlu0 %v843, 16
      %v1145 = vpop.permute.xlu0 %1144
      %1146 = vrot.lane.b32.xlu0 %v844, 16
      %v1147 = vpop.permute.xlu0 %1146
      %1148 = vrot.lane.b32.xlu0 %v845, 16
      %v1149 = vpop.permute.xlu0 %1148
      %1150 = vrot.lane.b32.xlu0 %v846, 16
      %v1151 = vpop.permute.xlu0 %1150
      %1152 = vrot.lane.b32.xlu0 %v847, 16
      %v1153 = vpop.permute.xlu0 %1152
      %1154 = vrot.lane.b32.xlu0 %v848, 16
      %v1155 = vpop.permute.xlu0 %1154
      %1156 = vrot.lane.b32.xlu0 0, 16
      %v1157 = vpop.permute.xlu0 %1156
      %vm1158 = vcmask 15360
      %v1161 = vsel %vm1158, 0, %v870
      %v1164 = vsel %vm1158, %v714, %v872
      %v1167 = vsel %vm1158, %v715, %v874
      %v1170 = vsel %vm1158, %v716, %v876
      %v1173 = vsel %vm1158, %v717, %v878
      %v1176 = vsel %vm1158, %v718, %v880
      %v1179 = vsel %vm1158, %v719, %v882
      %v1182 = vsel %vm1158, %v720, %v884
      %v1185 = vsel %vm1158, %v721, %v886
      %v1188 = vsel %vm1158, %v722, %v888
      %v1191 = vsel %vm1158, %v723, %v890
      %v1194 = vsel %vm1158, %v724, %v892
      %v1197 = vsel %vm1158, %v725, %v894
      %v1200 = vsel %vm1158, %v726, %v896
      %v1203 = vsel %vm1158, %v727, %v898
      %v1206 = vsel %vm1158, %v728, %v900
      %v1208 = vsel %vm346, %v1161, %v917
      %v1210 = vsel %vm346, %v1164, %v919
      %v1212 = vsel %vm346, %v1167, %v921
      %v1214 = vsel %vm346, %v1170, %v923
      %v1216 = vsel %vm346, %v1173, %v925
      %v1218 = vsel %vm346, %v1176, %v927
      %v1220 = vsel %vm346, %v1179, %v929
      %v1222 = vsel %vm346, %v1182, %v931
      %v1224 = vsel %vm346, %v1185, %v933
      %v1226 = vsel %vm346, %v1188, %v935
      %v1228 = vsel %vm346, %v1191, %v937
      %v1230 = vsel %vm346, %v1194, %v939
      %v1232 = vsel %vm346, %v1197, %v941
      %v1234 = vsel %vm346, %v1200, %v943
      %v1236 = vsel %vm346, %v1203, %v945
      %v1238 = vsel %vm346, %v1206, %v947
      %vm1239 = vcmask 48128
      %v1241 = vsel %vm1239, %v1208, %v965
      %v1243 = vsel %vm1239, %v1210, %v967
      %v1245 = vsel %vm1239, %v1212, %v969
      %v1247 = vsel %vm1239, %v1214, %v971
      %v1249 = vsel %vm1239, %v1216, %v973
      %v1251 = vsel %vm1239, %v1218, %v975
      %v1253 = vsel %vm1239, %v1220, %v977
      %v1255 = vsel %vm1239, %v1222, %v979
      %v1257 = vsel %vm1239, %v1224, %v981
      %v1259 = vsel %vm1239, %v1226, %v983
      %v1261 = vsel %vm1239, %v1228, %v985
      %v1263 = vsel %vm1239, %v1230, %v987
      %v1265 = vsel %vm1239, %v1232, %v989
      %v1267 = vsel %vm1239, %v1234, %v991
      %v1269 = vsel %vm1239, %v1236, %v993
      %v1271 = vsel %vm1239, %v1238, %v995
      %vm1272 = vcmask 64512
      %v1274 = vsel %vm1272, %v1241, %v998
      %v1276 = vsel %vm1272, %v1243, %v1000
      %v1278 = vsel %vm1272, %v1245, %v1002
      %v1280 = vsel %vm1272, %v1247, %v1004
      %v1282 = vsel %vm1272, %v1249, %v1006
      %v1284 = vsel %vm1272, %v1251, %v1008
      %v1286 = vsel %vm1272, %v1253, %v1010
      %v1288 = vsel %vm1272, %v1255, %v1012
      %v1290 = vsel %vm1272, %v1257, %v1014
      %v1292 = vsel %vm1272, %v1259, %v1016
      %v1294 = vsel %vm1272, %v1261, %v1018
      %v1296 = vsel %vm1272, %v1263, %v1020
      %v1298 = vsel %vm1272, %v1265, %v1022
      %v1300 = vsel %vm1272, %v1267, %v1024
      %v1302 = vsel %vm1272, %v1269, %v1026
      %v1304 = vsel %vm1272, %v1271, %v1028
      %vm1305 = vcmask 80896
      %v1307 = vsel %vm1305, %v1274, %v1031
      %v1309 = vsel %vm1305, %v1276, %v1033
      %v1311 = vsel %vm1305, %v1278, %v1035
      %v1313 = vsel %vm1305, %v1280, %v1037
      %v1315 = vsel %vm1305, %v1282, %v1039
      %v1317 = vsel %vm1305, %v1284, %v1041
      %v1319 = vsel %vm1305, %v1286, %v1043
      %v1321 = vsel %vm1305, %v1288, %v1045
      %v1323 = vsel %vm1305, %v1290, %v1047
      %v1325 = vsel %vm1305, %v1292, %v1049
      %v1327 = vsel %vm1305, %v1294, %v1051
      %v1329 = vsel %vm1305, %v1296, %v1053
      %v1331 = vsel %vm1305, %v1298, %v1055
      %v1333 = vsel %vm1305, %v1300, %v1057
      %v1335 = vsel %vm1305, %v1302, %v1059
      %v1337 = vsel %vm1305, %v1304, %v1061
      %vm1338 = vcmask 97280
      %v1340 = vsel %vm1338, %v1307, %v1063
      %v1342 = vsel %vm1338, %v1309, %v1065
      %v1344 = vsel %vm1338, %v1311, %v1067
      %v1346 = vsel %vm1338, %v1313, %v1069
      %v1348 = vsel %vm1338, %v1315, %v1071
      %v1350 = vsel %vm1338, %v1317, %v1073
      %v1352 = vsel %vm1338, %v1319, %v1075
      %v1354 = vsel %vm1338, %v1321, %v1077
      %v1356 = vsel %vm1338, %v1323, %v1079
      %v1358 = vsel %vm1338, %v1325, %v1081
      %v1360 = vsel %vm1338, %v1327, %v1083
      %v1362 = vsel %vm1338, %v1329, %v1085
      %v1364 = vsel %vm1338, %v1331, %v1087
      %v1366 = vsel %vm1338, %v1333, %v1089
      %v1368 = vsel %vm1338, %v1335, %v1091
      %v1370 = vsel %vm1338, %v1337, %v1093
      %vm1371 = vcmask 113664
      %v1373 = vsel %vm1371, %v1340, %v1095
      %v1375 = vsel %vm1371, %v1342, %v1097
      %v1377 = vsel %vm1371, %v1344, %v1099
      %v1379 = vsel %vm1371, %v1346, %v1101
      %v1381 = vsel %vm1371, %v1348, %v1103
      %v1383 = vsel %vm1371, %v1350, %v1105
      %v1385 = vsel %vm1371, %v1352, %v1107
      %v1387 = vsel %vm1371, %v1354, %v1109
      %v1389 = vsel %vm1371, %v1356, %v1111
      %v1391 = vsel %vm1371, %v1358, %v1113
      %v1393 = vsel %vm1371, %v1360, %v1115
      %v1395 = vsel %vm1371, %v1362, %v1117
      %v1397 = vsel %vm1371, %v1364, %v1119
      %v1399 = vsel %vm1371, %v1366, %v1121
      %v1401 = vsel %vm1371, %v1368, %v1123
      %v1403 = vsel %vm1371, %v1370, %v1125
      %vm1404 = vcmask 130048
      %v1406 = vsel %vm1404, %v1373, %v1127
      %v1408 = vsel %vm1404, %v1375, %v1129
      %v1410 = vsel %vm1404, %v1377, %v1131
      %v1412 = vsel %vm1404, %v1379, %v1133
      %v1414 = vsel %vm1404, %v1381, %v1135
      %v1416 = vsel %vm1404, %v1383, %v1137
      %v1418 = vsel %vm1404, %v1385, %v1139
      %v1420 = vsel %vm1404, %v1387, %v1141
      %v1422 = vsel %vm1404, %v1389, %v1143
      %v1424 = vsel %vm1404, %v1391, %v1145
      %v1426 = vsel %vm1404, %v1393, %v1147
      %v1428 = vsel %vm1404, %v1395, %v1149
      %v1430 = vsel %vm1404, %v1397, %v1151
      %v1432 = vsel %vm1404, %v1399, %v1153
      %v1434 = vsel %vm1404, %v1401, %v1155
      %v1436 = vsel %vm1404, %v1403, %v1157
      %v1438 = vlaneseq
      %v1439 = vshrl.u32 %v1438, 7
      %v1440 = vsub.s32 0, %v1439
      %v1441 = vrot.slane %v852, %v1440
      %v1446 = vunpack.c.l.b16 %v849
      %v1447 = vunpack.c.l.b16 %v850
      %v1448 = vunpack.c.l.b16 %v851
      %v1449 = vpack.c.b16 %v1447, %v1446
      %v1450 = vpack.c.b16 %v1448, %v1448
      %vm1452 = vcmask 146432
      %v1453 = vsel %vm1452, %v1406, 0
      %v1455 = vsel %vm1452, %v1408, 0
      %v1457 = vsel %vm1452, %v1410, 0
      %v1459 = vsel %vm1452, %v1412, 0
      %v1461 = vsel %vm1452, %v1414, 0
      %v1463 = vsel %vm1452, %v1416, 0
      %v1465 = vsel %vm1452, %v1418, 0
      %v1467 = vsel %vm1452, %v1420, 0
      %v1469 = vsel %vm1452, %v1422, 0
      %v1471 = vsel %vm1452, %v1424, 0
      %v1473 = vsel %vm1452, %v1426, 0
      %v1475 = vsel %vm1452, %v1428, 0
      %v1477 = vsel %vm1452, %v1430, 0
      %v1479 = vsel %vm1452, %v1432, 0
      %v1481 = vsel %vm1452, %v1434, 0
      %v1483 = vsel %vm1452, %v1436, 0
      %vm1485 = vcmask 1040384
      %v1487 = vsel %vm1485, %v1450, 0
      %1489 = vmatprep.subr.bf16.mxu0 0
      %1490 = vmatpush1.bf16.msra.mxu0 %v1449
      %1491 = vmatprep.subr.bf16.mxu0 0
      %1492 = vmatpush1.bf16.msra.mxu0 %v1487
      %1493 = vmatprep.subr.bf16.mxu0 0
      %1494 = vmatpush1.bf16.msra.mxu0 0
      %1495 = vmatprep.subr.bf16.mxu0 0
      %1496 = vmatpush1.bf16.msra.mxu0 0
      %1497 = vmatprep.subr.bf16.mxu0 0
      %1498 = vmatpush1.bf16.msra.mxu0 0
      %1499 = vmatprep.subr.bf16.mxu0 0
      %1500 = vmatpush1.bf16.msra.mxu0 0
      %1501 = vmatprep.subr.bf16.mxu0 0
      %1502 = vmatpush1.bf16.msra.mxu0 0
      %1503 = vmatprep.subr.bf16.mxu0 0
      %1504 = vmatpush1.bf16.msra.mxu0 0
      %1505 = vmatprep.subr.bf16.mxu0 0
      %1506 = vmatpush1.bf16.msra.mxu0 0
      %1507 = vmatprep.subr.bf16.mxu0 0
      %1508 = vmatpush1.bf16.msra.mxu0 0
      %1509 = vmatprep.subr.bf16.mxu0 0
      %1510 = vmatpush1.bf16.msra.mxu0 0
      %1511 = vmatprep.subr.bf16.mxu0 0
      %1512 = vmatpush1.bf16.msra.mxu0 0
      %1513 = vmatprep.subr.bf16.mxu0 0
      %1514 = vmatpush1.bf16.msra.mxu0 0
      %1515 = vmatprep.subr.bf16.mxu0 0
      %1516 = vmatpush1.bf16.msra.mxu0 0
      %1517 = vmatprep.subr.bf16.mxu0 0
      %1518 = vmatpush1.bf16.msra.mxu0 0
      %1519 = vmatprep.subr.bf16.mxu0 0
      %1520 = vmatpush1.bf16.msra.mxu0 0
      %1521 = vmatprep.mubr.bf16.mxu0 0
      %1522 = vmatmul.mubr.bf16.gmra.mrb[0].mxu0 %v1453
      %v1523 = vpop.f32.mrb[0].mxu0
      %v1524 = vadd.f32 %v1441, %v1523
      %v1525 = vpop.f32.mrb[0].mxu0
      %v1526 = vpop.f32.mrb[0].mxu0
      %v1527 = vadd.f32 %v1441, %v1526
      %v1528 = vpop.f32.mrb[0].mxu0
      %1529 = vmatprep.mubr.bf16.mxu0 0
      %1530 = vmatmul.mubr.bf16.gmra.mrb[0].mxu0 %v1455
      %v1531 = vpop.f32.mrb[0].mxu0
      %v1532 = vadd.f32 %v1441, %v1531
      %v1533 = vpop.f32.mrb[0].mxu0
      %v1534 = vpop.f32.mrb[0].mxu0
      %v1535 = vadd.f32 %v1441, %v1534
      %v1536 = vpop.f32.mrb[0].mxu0
      %1537 = vmatprep.mubr.bf16.mxu0 0
      %1538 = vmatmul.mubr.bf16.gmra.mrb[0].mxu0 %v1457
      %v1539 = vpop.f32.mrb[0].mxu0
      %v1540 = vadd.f32 %v1441, %v1539
      %v1541 = vpop.f32.mrb[0].mxu0
      %v1542 = vpop.f32.mrb[0].mxu0
      %v1543 = vadd.f32 %v1441, %v1542
      %v1544 = vpop.f32.mrb[0].mxu0
      %1545 = vmatprep.mubr.bf16.mxu0 0
      %1546 = vmatmul.mubr.bf16.gmra.mrb[0].mxu0 %v1459
      %v1547 = vpop.f32.mrb[0].mxu0
      %v1548 = vadd.f32 %v1441, %v1547
      %v1549 = vpop.f32.mrb[0].mxu0
      %v1550 = vpop.f32.mrb[0].mxu0
      %v1551 = vadd.f32 %v1441, %v1550
      %v1552 = vpop.f32.mrb[0].mxu0
      %1553 = vmatprep.mubr.bf16.mxu0 0
      %1554 = vmatmul.mubr.bf16.gmra.mrb[0].mxu0 %v1461
      %v1555 = vpop.f32.mrb[0].mxu0
      %v1556 = vadd.f32 %v1441, %v1555
      %v1557 = vpop.f32.mrb[0].mxu0
      %v1558 = vpop.f32.mrb[0].mxu0
      %v1559 = vadd.f32 %v1441, %v1558
      %v1560 = vpop.f32.mrb[0].mxu0
      %1561 = vmatprep.mubr.bf16.mxu0 0
      %1562 = vmatmul.mubr.bf16.gmra.mrb[0].mxu0 %v1463
      %v1563 = vpop.f32.mrb[0].mxu0
      %v1564 = vadd.f32 %v1441, %v1563
      %v1565 = vpop.f32.mrb[0].mxu0
      %v1566 = vpop.f32.mrb[0].mxu0
      %v1567 = vadd.f32 %v1441, %v1566
      %v1568 = vpop.f32.mrb[0].mxu0
      %1569 = vmatprep.mubr.bf16.mxu0 0
      %1570 = vmatmul.mubr.bf16.gmra.mrb[0].mxu0 %v1465
      %v1571 = vpop.f32.mrb[0].mxu0
      %v1572 = vadd.f32 %v1441, %v1571
      %v1573 = vpop.f32.mrb[0].mxu0
      %v1574 = vpop.f32.mrb[0].mxu0
      %v1575 = vadd.f32 %v1441, %v1574
      %v1576 = vpop.f32.mrb[0].mxu0
      %1577 = vmatprep.mubr.bf16.mxu0 0
      %1578 = vmatmul.mubr.bf16.gmra.mrb[0].mxu0 %v1467
      %v1579 = vpop.f32.mrb[0].mxu0
      %v1580 = vadd.f32 %v1441, %v1579
      %v1581 = vpop.f32.mrb[0].mxu0
      %v1582 = vpop.f32.mrb[0].mxu0
      %v1583 = vadd.f32 %v1441, %v1582
      %v1584 = vpop.f32.mrb[0].mxu0
      %1585 = vmatprep.mubr.bf16.mxu0 0
      %1586 = vmatmul.mubr.bf16.gmra.mrb[0].mxu0 %v1469
      %v1587 = vpop.f32.mrb[0].mxu0
      %v1588 = vadd.f32 %v1441, %v1587
      %v1589 = vpop.f32.mrb[0].mxu0
      %v1590 = vpop.f32.mrb[0].mxu0
      %v1591 = vadd.f32 %v1441, %v1590
      %v1592 = vpop.f32.mrb[0].mxu0
      %1593 = vmatprep.mubr.bf16.mxu0 0
      %1594 = vmatmul.mubr.bf16.gmra.mrb[0].mxu0 %v1471
      %v1595 = vpop.f32.mrb[0].mxu0
      %v1596 = vadd.f32 %v1441, %v1595
      %v1597 = vpop.f32.mrb[0].mxu0
      %v1598 = vpop.f32.mrb[0].mxu0
      %v1599 = vadd.f32 %v1441, %v1598
      %v1600 = vpop.f32.mrb[0].mxu0
      %1601 = vmatprep.mubr.bf16.mxu0 0
      %1602 = vmatmul.mubr.bf16.gmra.mrb[0].mxu0 %v1473
      %v1603 = vpop.f32.mrb[0].mxu0
      %v1604 = vadd.f32 %v1441, %v1603
      %v1605 = vpop.f32.mrb[0].mxu0
      %v1606 = vpop.f32.mrb[0].mxu0
      %v1607 = vadd.f32 %v1441, %v1606
      %v1608 = vpop.f32.mrb[0].mxu0
      %1609 = vmatprep.mubr.bf16.mxu0 0
      %1610 = vmatmul.mubr.bf16.gmra.mrb[0].mxu0 %v1475
      %v1611 = vpop.f32.mrb[0].mxu0
      %v1612 = vadd.f32 %v1441, %v1611
      %v1613 = vpop.f32.mrb[0].mxu0
      %v1614 = vpop.f32.mrb[0].mxu0
      %v1615 = vadd.f32 %v1441, %v1614
      %v1616 = vpop.f32.mrb[0].mxu0
      %1617 = vmatprep.mubr.bf16.mxu0 0
      %1618 = vmatmul.mubr.bf16.gmra.mrb[0].mxu0 %v1477
      %v1619 = vpop.f32.mrb[0].mxu0
      %v1620 = vadd.f32 %v1441, %v1619
      %v1621 = vpop.f32.mrb[0].mxu0
      %v1622 = vpop.f32.mrb[0].mxu0
      %v1623 = vadd.f32 %v1441, %v1622
      %v1624 = vpop.f32.mrb[0].mxu0
      %1625 = vmatprep.mubr.bf16.mxu0 0
      %1626 = vmatmul.mubr.bf16.gmra.mrb[0].mxu0 %v1479
      %v1627 = vpop.f32.mrb[0].mxu0
      %v1628 = vadd.f32 %v1441, %v1627
      %v1629 = vpop.f32.mrb[0].mxu0
      %v1630 = vpop.f32.mrb[0].mxu0
      %v1631 = vadd.f32 %v1441, %v1630
      %v1632 = vpop.f32.mrb[0].mxu0
      %1633 = vmatprep.mubr.bf16.mxu0 0
      %1634 = vmatmul.mubr.bf16.gmra.mrb[0].mxu0 %v1481
      %v1635 = vpop.f32.mrb[0].mxu0
      %v1636 = vadd.f32 %v1441, %v1635
      %v1637 = vpop.f32.mrb[0].mxu0
      %v1638 = vpop.f32.mrb[0].mxu0
      %v1639 = vadd.f32 %v1441, %v1638
      %v1640 = vpop.f32.mrb[0].mxu0
      %1641 = vmatprep.mubr.bf16.mxu0 0
      %1642 = vmatmul.mubr.bf16.gmra.mrb[0].mxu0 %v1483
      %v1643 = vpop.f32.mrb[0].mxu0
      %v1644 = vadd.f32 %v1441, %v1643
      %v1645 = vpop.f32.mrb[0].mxu0
      %v1646 = vpop.f32.mrb[0].mxu0
      %v1647 = vadd.f32 %v1441, %v1646
      %v1648 = vpop.f32.mrb[0].mxu0
      %1649 = vdwg.mxu0
      %v1650 = vmax.f32 %v1524, 0.0
      %v1651 = vmax.f32 %v1527, 0.0
      %v1652 = vmax.f32 %v1532, 0.0
      %v1653 = vmax.f32 %v1535, 0.0
      %v1654 = vmax.f32 %v1540, 0.0
      %v1655 = vmax.f32 %v1543, 0.0
      %v1656 = vmax.f32 %v1548, 0.0
      %v1657 = vmax.f32 %v1551, 0.0
      %v1658 = vmax.f32 %v1556, 0.0
      %v1659 = vmax.f32 %v1559, 0.0
      %v1660 = vmax.f32 %v1564, 0.0
      %v1661 = vmax.f32 %v1567, 0.0
      %v1662 = vmax.f32 %v1572, 0.0
      %v1663 = vmax.f32 %v1575, 0.0
      %v1664 = vmax.f32 %v1580, 0.0
      %v1665 = vmax.f32 %v1583, 0.0
      %v1666 = vmax.f32 %v1588, 0.0
      %v1667 = vmax.f32 %v1591, 0.0
      %v1668 = vmax.f32 %v1596, 0.0
      %v1669 = vmax.f32 %v1599, 0.0
      %v1670 = vmax.f32 %v1604, 0.0
      %v1671 = vmax.f32 %v1607, 0.0
      %v1672 = vmax.f32 %v1612, 0.0
      %v1673 = vmax.f32 %v1615, 0.0
      %v1674 = vmax.f32 %v1620, 0.0
      %v1675 = vmax.f32 %v1623, 0.0
      %v1676 = vmax.f32 %v1628, 0.0
      %v1677 = vmax.f32 %v1631, 0.0
      %v1678 = vmax.f32 %v1636, 0.0
      %v1679 = vmax.f32 %v1639, 0.0
      %v1680 = vmax.f32 %v1644, 0.0
      %v1681 = vmax.f32 %v1647, 0.0
      %1682 = vst.msk [vmem:[%s224] sm:$0xff] %vm1272, %v1650
      %1683 = vst.msk [vmem:[%s224 + $0x8] sm:$0xff] %vm1272, %v1651
      %1684 = vst.msk [vmem:[%s224 + $0x10] sm:$0xff] %vm1272, %v1652
      %1685 = vst.msk [vmem:[%s224 + $0x18] sm:$0xff] %vm1272, %v1653
      %1686 = vst.msk [vmem:[%s224 + $0x20] sm:$0xff] %vm1272, %v1654
      %1687 = vst.msk [vmem:[%s224 + $0x28] sm:$0xff] %vm1272, %v1655
      %1688 = vst.msk [vmem:[%s224 + $0x30] sm:$0xff] %vm1272, %v1656
      %1689 = vst.msk [vmem:[%s224 + $0x38] sm:$0xff] %vm1272, %v1657
      %1690 = vst.msk [vmem:[%s224 + $0x40] sm:$0xff] %vm1272, %v1658
      %1691 = vst.msk [vmem:[%s224 + $0x48] sm:$0xff] %vm1272, %v1659
      %1692 = vst.msk [vmem:[%s224 + $0x50] sm:$0xff] %vm1272, %v1660
      %1693 = vst.msk [vmem:[%s224 + $0x58] sm:$0xff] %vm1272, %v1661
      %1694 = vst.msk [vmem:[%s224 + $0x60] sm:$0xff] %vm1272, %v1662
      %1695 = vst.msk [vmem:[%s224 + $0x68] sm:$0xff] %vm1272, %v1663
      %1696 = vst.msk [vmem:[%s224 + $0x70] sm:$0xff] %vm1272, %v1664
      %1697 = vst.msk [vmem:[%s224 + $0x78] sm:$0xff] %vm1272, %v1665
      %1698 = vst.msk [vmem:[%s224 + $0x80] sm:$0xff] %vm1272, %v1666
      %1699 = vst.msk [vmem:[%s224 + $0x88] sm:$0xff] %vm1272, %v1667
      %1700 = vst.msk [vmem:[%s224 + $0x90] sm:$0xff] %vm1272, %v1668
      %1701 = vst.msk [vmem:[%s224 + $0x98] sm:$0xff] %vm1272, %v1669
      %1702 = vst.msk [vmem:[%s224 + $0xa0] sm:$0xff] %vm1272, %v1670
      %1703 = vst.msk [vmem:[%s224 + $0xa8] sm:$0xff] %vm1272, %v1671
      %1704 = vst.msk [vmem:[%s224 + $0xb0] sm:$0xff] %vm1272, %v1672
      %1705 = vst.msk [vmem:[%s224 + $0xb8] sm:$0xff] %vm1272, %v1673
      %1706 = vst.msk [vmem:[%s224 + $0xc0] sm:$0xff] %vm1272, %v1674
      %1707 = vst.msk [vmem:[%s224 + $0xc8] sm:$0xff] %vm1272, %v1675
      %1708 = vst.msk [vmem:[%s224 + $0xd0] sm:$0xff] %vm1272, %v1676
      %1709 = vst.msk [vmem:[%s224 + $0xd8] sm:$0xff] %vm1272, %v1677
      %1710 = vst.msk [vmem:[%s224 + $0xe0] sm:$0xff] %vm1272, %v1678
      %1711 = vst.msk [vmem:[%s224 + $0xe8] sm:$0xff] %vm1272, %v1679
      %1712 = vst.msk [vmem:[%s224 + $0xf0] sm:$0xff] %vm1272, %v1680
      %1713 = vst.msk [vmem:[%s224 + $0xf8] sm:$0xff] %vm1272, %v1681
      %p1714 = scmp.lt.s32.totalorder %s16, 1
      %s1715 = scalar_select %p1714, %s16, 1
      %s1716 = smul.addr %s1715, 32
      %s1717 = smul.addr %s1716, 8
      %s1718 = scalar_lea.vmem %s5, %s1717
      // Predicated region
      $region41: #{tpu_custom_call.1} parent=39 // pred_check
        %p1719 = pneg %p144
      $region42: #{tpu_custom_call.1} parent=39 // pred_check_branch
        %1721 = sbr.rel (%p1719) target = $region44
      $region43: #{tpu_custom_call.1} parent=39 // pred_region
        _
      $region44: #{tpu_custom_call.1} parent=39 // pred_fallthru
        _
    $region40: #{tpu_custom_call.1} parent=5 // pred_fallthru
      _
    %p1722 = scmp.le.s32.totalorder 2, %s11
    // Predicated region
    $region45: #{tpu_custom_call.1} parent=5 // pred_check
      %p1723 = pneg %p1722
    $region46: #{tpu_custom_call.1} parent=5 // pred_check_branch
      %1725 = sbr.rel (%p1723) target = $region48
    $region47: #{tpu_custom_call.1} parent=5 // pred_region
      %s1726 = ssub.s32 %s11, 2
      // Predicated region
      $region49: #{tpu_custom_call.1} parent=47 // pred_check
        %p1727 = pneg %p150
      $region50: #{tpu_custom_call.1} parent=47 // pred_check_branch
        %1729 = sbr.rel (%p1727) target = $region52
      $region51: #{tpu_custom_call.1} parent=47 // pred_region
        %p1730 = scmp.lt.s32.totalorder %s17, 1
        %s1731 = scalar_select %p1730, %s17, 1
        %s1732 = smul.addr %s1731, 32
        %s1733 = smul.addr %s1732, 8
        %s1734 = scalar_lea.vmem %s5, %s1733
      $region52: #{tpu_custom_call.1} parent=47 // pred_fallthru
        _
    $region48: #{tpu_custom_call.1} parent=5 // pred_fallthru
      _
  $region6: #{tpu_custom_call.1} parent=0 // loop_footer
    %s15 = sadd.s32 1, %s11
  $region7: #{tpu_custom_call.1} parent=0 // loop_footer_branch
    %10 = sbr.rel target = $region3
  $region8: #{tpu_custom_call.1} parent=0 // loop_exit
    _

</llo_original>
